<compile_context>
chip_gen: v7x
topology: tpu7x:2x2x1
jax: 0.10.0
libtpu: 0.0.40
codegen_flags: <defaults>
</compile_context>

<pallas_src>
import functools
import math

import jax
import jax.numpy as jnp
from jax import lax
from jax.experimental import pallas as pl
from jax.experimental.pallas import tpu as pltpu


LANE = 128


# ---------------------------------------------------------------------------
# small helpers
# ---------------------------------------------------------------------------
def _round_up(x, m):
    return (x + m - 1) // m * m


def _pad_to(a, shape):
    pads = [(0, t - s) for s, t in zip(a.shape, shape)]
    if all(p == (0, 0) for p in pads):
        return a
    return jnp.pad(a, pads)


# ---------------------------------------------------------------------------
# in-kernel helpers (traced inside the Pallas body)
# ---------------------------------------------------------------------------
def _softmax(x):
    m = jnp.max(x, axis=-1, keepdims=True)
    e = jnp.exp(x - m)
    return e * pl.reciprocal(jnp.sum(e, axis=-1, keepdims=True), approx=True)


def _add_norm(x, y, gamma, beta, inv_d, eps=1e-5):
    # fused one-pass moments; padded lanes of x/y are zero so sums over the
    # padded width divided by the *real* D are exact.
    z = x + y
    mu = jnp.sum(z, axis=-1, keepdims=True) * inv_d
    ex2 = jnp.sum(z * z, axis=-1, keepdims=True) * inv_d
    var = ex2 - mu * mu
    # gamma/beta are zero on padded lanes -> padded output stays exactly zero.
    return (z - mu) * lax.rsqrt(var + eps) * gamma + beta


# ---------------------------------------------------------------------------
# fused decoder-block kernel (one batch block per grid step)
# ---------------------------------------------------------------------------
def decoder_blk_kernel(
    xt_ref, om_ref, xen_ref, im_ref, tril_ref,
    # masked self attention
    wq, wk, wv, wo, bq, bk, bv, bo,
    # add & norm 1
    g1, be1,
    # cross attention
    cwq, cwk, cwv, cwo, cbq, cbk, cbv, cbo,
    # add & norm 2
    g2, be2,
    # position-wise FFN
    w1, b1, w2, b2,
    # add & norm 3
    g3, be3,
    out_ref,
    *, inv_d, scale,
):
    x3 = xt_ref[...]                        # (Bb, T, Dp)  f32
    xe3 = xen_ref[...]                      # (Bb, S, Dp)  f32
    om = om_ref[...]                        # (Bb, 1, T)   f32 decoder pad mask
    im = im_ref[...]                        # (Bb, 1, S)   f32 encoder pad mask
    tril = tril_ref[...]                    # (T, T)       f32 hoisted causal mask

    Bb, T, Dp = x3.shape
    S = xe3.shape[1]

    def proj(x2d, w_ref, b_ref):
        # bf16 MXU matmul, f32 accumulation; bias add in f32
        return lax.dot_general(
            x2d.astype(jnp.bfloat16), w_ref[...],
            (((1,), (0,)), ((), ())),
            preferred_element_type=jnp.float32) + b_ref[...]

    def bdot(a, b, ca, cb):
        # batched matmul over the leading batch dim (no explicit transpose)
        return lax.dot_general(
            a.astype(jnp.bfloat16), b.astype(jnp.bfloat16),
            (((ca,), (cb,)), ((0,), (0,))),
            preferred_element_type=jnp.float32)

    # fold batch into the MXU M dimension for all row-wise matmuls
    x2 = x3.reshape(Bb * T, Dp)
    xe2 = xe3.reshape(Bb * S, Dp)

    # ---- masked self attention: mask = O_m.unsqueeze(-2) * tril ----------
    q = proj(x2, wq, bq) * scale            # scale folded into q (cheaper)
    k = proj(x2, wk, bk)
    v = proj(x2, wv, bv)
    s = bdot(q.reshape(Bb, T, Dp), k.reshape(Bb, T, Dp), 2, 2)     # (Bb,T,T)
    mask = (om > 0.0) & (tril[None, :, :] > 0.0)                   # (Bb,T,T)
    a = _softmax(jnp.where(mask, s, -1e9))
    av = bdot(a, v.reshape(Bb, T, Dp), 2, 1)                       # (Bb,T,Dp)
    att = proj(av.reshape(Bb * T, Dp), wo, bo)
    x2 = _add_norm(x2, att, g1[...], be1[...], inv_d)              # AddNorm 1

    # ---- cross attention vs. encoder output, padding mask I_m ------------
    q = proj(x2, cwq, cbq) * scale
    k = proj(xe2, cwk, cbk)
    v = proj(xe2, cwv, cbv)
    s = bdot(q.reshape(Bb, T, Dp), k.reshape(Bb, S, Dp), 2, 2)     # (Bb,T,S)
    a = _softmax(jnp.where(im > 0.0, s, -1e9))
    av = bdot(a, v.reshape(Bb, S, Dp), 2, 1)                       # (Bb,T,Dp)
    att = proj(av.reshape(Bb * T, Dp), cwo, cbo)
    x2 = _add_norm(x2, att, g2[...], be2[...], inv_d)              # AddNorm 2

    # ---- position-wise FFN ------------------------------------------------
    h = jnp.maximum(proj(x2, w1, b1), 0.0)                         # (Bb*T,Dffp)
    f = proj(h, w2, b2)                                            # (Bb*T,Dp)
    x2 = _add_norm(x2, f, g3[...], be3[...], inv_d)                # AddNorm 3

    out_ref[...] = x2.reshape(Bb, T, Dp).astype(out_ref.dtype)


# ---------------------------------------------------------------------------
# wrapper
# ---------------------------------------------------------------------------
PARAM_ORDER = (
    "wq", "wk", "wv", "wo", "bq", "bk", "bv", "bo",
    "g1", "be1",
    "cwq", "cwk", "cwv", "cwo", "cbq", "cbk", "cbv", "cbo",
    "g2", "be2",
    "w1", "b1", "w2", "b2",
    "g3", "be3",
)

_MAT_NAMES = frozenset(
    {"wq", "wk", "wv", "wo", "cwq", "cwk", "cwv", "cwo", "w1", "w2"})


def _prepare_weights(params, Dp, Dffp):
    shapes = {
        "wq": (Dp, Dp), "wk": (Dp, Dp), "wv": (Dp, Dp), "wo": (Dp, Dp),
        "cwq": (Dp, Dp), "cwk": (Dp, Dp), "cwv": (Dp, Dp), "cwo": (Dp, Dp),
        "w1": (Dp, Dffp), "w2": (Dffp, Dp),
        "bq": (1, Dp), "bk": (1, Dp), "bv": (1, Dp), "bo": (1, Dp),
        "cbq": (1, Dp), "cbk": (1, Dp), "cbv": (1, Dp), "cbo": (1, Dp),
        "b1": (1, Dffp), "b2": (1, Dp),
        "g1": (1, Dp), "be1": (1, Dp), "g2": (1, Dp), "be2": (1, Dp),
        "g3": (1, Dp), "be3": (1, Dp),
    }
    out = []
    for name in PARAM_ORDER:
        w = _pad_to(params[name].astype(jnp.float32), shapes[name])
        # matmul operands in bf16 (halves DMA/VMEM); biases / LN params in f32
        out.append(w.astype(jnp.bfloat16) if name in _MAT_NAMES else w)
    return out


def decoder_blk(X_t, O_m, X_en, I_m, params, *, block_b=None):
    B, T, D = X_t.shape
    S = X_en.shape[1]
    Dff = params["w1"].shape[1]
    Dp = _round_up(D, LANE)
    Dffp = _round_up(Dff, LANE)

    if block_b is None:
        block_b = B
    assert B % block_b == 0
    n_blk = B // block_b

    # lane-dense (128-multiple) padding of the feature dims
    xt = _pad_to(X_t.astype(jnp.float32), (B, T, Dp))
    xen = _pad_to(X_en.astype(jnp.float32), (B, S, Dp))
    om = O_m.reshape(B, 1, T).astype(jnp.float32)     # O_m.unsqueeze(-2)
    im = I_m.reshape(B, 1, S).astype(jnp.float32)     # I_m.unsqueeze(-2)
    tril = jnp.tril(jnp.ones((T, T), jnp.float32))    # hoisted causal mask

    weights = _prepare_weights(params, Dp, Dffp)

    kernel = functools.partial(
        decoder_blk_kernel,
        inv_d=1.0 / float(D),                  # LayerNorm over the *real* D
        scale=1.0 / math.sqrt(float(D)))

    # advisory cost estimate for XLA scheduling
    flops = 2 * B * (
        6 * T * Dp * Dp + 2 * S * Dp * Dp      # all q/k/v/o projections
        + 2 * T * T * Dp + 2 * T * S * Dp      # scores + AV, both attentions
        + 2 * T * Dp * Dffp)                   # FFN
    transcendentals = B * (T * T + T * S + 5 * T)
    bytes_accessed = (
        (xt.size + xen.size + om.size + im.size + tril.size) * 4
        + sum(int(w.size) * w.dtype.itemsize for w in weights)
        + B * T * Dp * 4)
    cost = pl.CostEstimate(flops=int(flops),
                           transcendentals=int(transcendentals),
                           bytes_accessed=int(bytes_accessed))

    act_specs = [
        pl.BlockSpec((block_b, T, Dp), lambda b: (b, 0, 0)),   # X_t
        pl.BlockSpec((block_b, 1, T), lambda b: (b, 0, 0)),    # O_m
        pl.BlockSpec((block_b, S, Dp), lambda b: (b, 0, 0)),   # X_en
        pl.BlockSpec((block_b, 1, S), lambda b: (b, 0, 0)),    # I_m
    ]

    def build(single_buffer_consts):
        kw = {}
        if single_buffer_consts and hasattr(pl, "Buffered"):
            kw = {"pipeline_mode": pl.Buffered(1)}
        const_specs = [pl.BlockSpec(tril.shape, lambda b: (0, 0), **kw)] + [
            pl.BlockSpec(w.shape, lambda b, n=w.ndim: (0,) * n, **kw)
            for w in weights
        ]
        return pl.pallas_call(
            kernel,
            out_shape=jax.ShapeDtypeStruct((B, T, Dp), jnp.float32),
            grid=(n_blk,),
            in_specs=act_specs + const_specs,
            out_specs=pl.BlockSpec((block_b, T, Dp), lambda b: (b, 0, 0)),
            compiler_params=pltpu.CompilerParams(
                dimension_semantics=("parallel",),
                vmem_limit_bytes=64 * 1024 * 1024),
            cost_estimate=cost,
        )

    args = (xt, om, xen, im, tril, *weights)
    try:
        # grid-invariant inputs single-buffered (nothing to prefetch)
        out = build(True)(*args)
    except Exception:
        # pipeline_mode / Buffered(1) unsupported on this jax version:
        # fall back to default double-buffered specs (correctness identical)
        out = build(False)(*args)

    return out[:, :, :D]


# ---------------------------------------------------------------------------
# pure-JAX f32 reference (for validation only)
# ---------------------------------------------------------------------------
def decoder_blk_reference(X_t, O_m, X_en, I_m, params):
    D = X_t.shape[-1]
    T = X_t.shape[1]
    scale = 1.0 / math.sqrt(float(D))
    tril = jnp.tril(jnp.ones((T, T), jnp.float32))
    om = O_m[:, None, :] * tril[None, :, :]           # (B,T,T)
    im = I_m[:, None, :]                              # (B,1,S)

    def ln(x, g, b, eps=1e-5):
        mu = jnp.mean(x, axis=-1, keepdims=True)
        var = jnp.mean((x - mu) ** 2, axis=-1, keepdims=True)
        return (x - mu) / jnp.sqrt(var + eps) * g + b

    def attn(xq, xkv, mask, wq, bq, wk, bk, wv, bv, wo, bo):
        q = xq @ wq + bq
        k = xkv @ wk + bk
        v = xkv @ wv + bv
        s = jnp.einsum("btd,bsd->bts", q, k) * scale
        s = jnp.where(mask > 0.0, s, -1e9)
        a = jax.nn.softmax(s, axis=-1)
        return jnp.einsum("bts,bsd->btd", a, v) @ wo + bo

    p = params
    x = X_t
    a1 = attn(x, x, om, p["wq"], p["bq"], p["wk"], p["bk"],
              p["wv"], p["bv"], p["wo"], p["bo"])
    x = ln(x + a1, p["g1"], p["be1"])
    a2 = attn(x, X_en, im, p["cwq"], p["cbq"], p["cwk"], p["cbk"],
              p["cwv"], p["cbv"], p["cwo"], p["cbo"])
    x = ln(x + a2, p["g2"], p["be2"])
    f = jnp.maximum(x @ p["w1"] + p["b1"], 0.0) @ p["w2"] + p["b2"]
    x = ln(x + f, p["g3"], p["be3"])
    return x


# ---------------------------------------------------------------------------
# deterministic parameter init (synthetic weights, no checkpoint)
# ---------------------------------------------------------------------------
def init_params(key, D, Dff):
    keys = jax.random.split(key, 10)

    def lin(k, din, dout):
        w = jax.random.normal(k, (din, dout), jnp.float32) / math.sqrt(din)
        b = jnp.zeros((1, dout), jnp.float32)
        return w, b

    p = {}
    p["wq"], p["bq"] = lin(keys[0], D, D)
    p["wk"], p["bk"] = lin(keys[1], D, D)
    p["wv"], p["bv"] = lin(keys[2], D, D)
    p["wo"], p["bo"] = lin(keys[3], D, D)
    p["g1"], p["be1"] = jnp.ones((1, D), jnp.float32), jnp.zeros((1, D), jnp.float32)

    p["cwq"], p["cbq"] = lin(keys[4], D, D)
    p["cwk"], p["cbk"] = lin(keys[5], D, D)
    p["cwv"], p["cbv"] = lin(keys[6], D, D)
    p["cwo"], p["cbo"] = lin(keys[7], D, D)
    p["g2"], p["be2"] = jnp.ones((1, D), jnp.float32), jnp.zeros((1, D), jnp.float32)

    p["w1"], p["b1"] = lin(keys[8], D, Dff)
    p["w2"], p["b2"] = lin(keys[9], Dff, D)
    p["g3"], p["be3"] = jnp.ones((1, D), jnp.float32), jnp.zeros((1, D), jnp.float32)
    return p


if __name__ == "__main__":
    B, T, S, D, Dff = 2, 8, 8, 32, 64

    key = jax.random.PRNGKey(0)
    k_xt, k_xen, k_par = jax.random.split(key, 3)

    X_t = jax.random.normal(k_xt, (B, T, D), jnp.float32)
    X_en = jax.random.normal(k_xen, (B, S, D), jnp.float32)
    O_m = jnp.ones((B, T), jnp.float32)                              # decoder mask
    I_m = jnp.concatenate(                                           # encoder mask,
        [jnp.ones((B, S - 2), jnp.float32),                          # last 2 padded
         jnp.zeros((B, 2), jnp.float32)], axis=-1)

    params = init_params(k_par, D, Dff)

    out = decoder_blk(X_t, O_m, X_en, I_m, params)
    out = jax.block_until_ready(out)

    assert out.shape == (B, T, D), out.shape
    assert bool(jnp.all(jnp.isfinite(out)))

    # correctness vs. pure-JAX f32 reference (loose tol for bf16 MXU path)
    ref = decoder_blk_reference(X_t, O_m, X_en, I_m, params)
    err = float(jnp.max(jnp.abs(out - ref)))
    assert err < 1e-1, f"max abs error vs reference: {err}"

    print("KERNEL_OK")
</pallas_src>

<mosaic_0001>
module attributes {stable_mosaic.version = 11 : i64} {
  func.func @decoder_blk_kernel(%arg0: i32, %arg1: memref<2x8x128xf32, #tpu.memory_space<vmem>>, %arg2: memref<2x1x8xf32, #tpu.memory_space<vmem>>, %arg3: memref<2x8x128xf32, #tpu.memory_space<vmem>>, %arg4: memref<2x1x8xf32, #tpu.memory_space<vmem>>, %arg5: memref<8x8xf32, #tpu.memory_space<vmem>>, %arg6: memref<128x128xbf16, #tpu.memory_space<vmem>>, %arg7: memref<128x128xbf16, #tpu.memory_space<vmem>>, %arg8: memref<128x128xbf16, #tpu.memory_space<vmem>>, %arg9: memref<128x128xbf16, #tpu.memory_space<vmem>>, %arg10: memref<1x128xf32, #tpu.memory_space<vmem>>, %arg11: memref<1x128xf32, #tpu.memory_space<vmem>>, %arg12: memref<1x128xf32, #tpu.memory_space<vmem>>, %arg13: memref<1x128xf32, #tpu.memory_space<vmem>>, %arg14: memref<1x128xf32, #tpu.memory_space<vmem>>, %arg15: memref<1x128xf32, #tpu.memory_space<vmem>>, %arg16: memref<128x128xbf16, #tpu.memory_space<vmem>>, %arg17: memref<128x128xbf16, #tpu.memory_space<vmem>>, %arg18: memref<128x128xbf16, #tpu.memory_space<vmem>>, %arg19: memref<128x128xbf16, #tpu.memory_space<vmem>>, %arg20: memref<1x128xf32, #tpu.memory_space<vmem>>, %arg21: memref<1x128xf32, #tpu.memory_space<vmem>>, %arg22: memref<1x128xf32, #tpu.memory_space<vmem>>, %arg23: memref<1x128xf32, #tpu.memory_space<vmem>>, %arg24: memref<1x128xf32, #tpu.memory_space<vmem>>, %arg25: memref<1x128xf32, #tpu.memory_space<vmem>>, %arg26: memref<128x128xbf16, #tpu.memory_space<vmem>>, %arg27: memref<1x128xf32, #tpu.memory_space<vmem>>, %arg28: memref<128x128xbf16, #tpu.memory_space<vmem>>, %arg29: memref<1x128xf32, #tpu.memory_space<vmem>>, %arg30: memref<1x128xf32, #tpu.memory_space<vmem>>, %arg31: memref<1x128xf32, #tpu.memory_space<vmem>>, %arg32: memref<2x8x128xf32, #tpu.memory_space<vmem>>) attributes {dimension_semantics = [#tpu.dimension_semantics<parallel>], iteration_bounds = array<i64: 1>, scalar_prefetch = 0 : i64, scratch_operands = 0 : i64, tpu.core_type = #tpu.core_type<tc>, window_params = [{transform_indices = @transform_0, window_bounds = array<i64: 2, 8, 128>}, {transform_indices = @transform_1, window_bounds = array<i64: 2, 1, 8>}, {transform_indices = @transform_2, window_bounds = array<i64: 2, 8, 128>}, {transform_indices = @transform_3, window_bounds = array<i64: 2, 1, 8>}, {pipeline_mode = #tpu.pipeline_mode<synchronous>, transform_indices = @transform_4, window_bounds = array<i64: 8, 8>}, {pipeline_mode = #tpu.pipeline_mode<synchronous>, transform_indices = @transform_5, window_bounds = array<i64: 128, 128>}, {pipeline_mode = #tpu.pipeline_mode<synchronous>, transform_indices = @transform_6, window_bounds = array<i64: 128, 128>}, {pipeline_mode = #tpu.pipeline_mode<synchronous>, transform_indices = @transform_7, window_bounds = array<i64: 128, 128>}, {pipeline_mode = #tpu.pipeline_mode<synchronous>, transform_indices = @transform_8, window_bounds = array<i64: 128, 128>}, {pipeline_mode = #tpu.pipeline_mode<synchronous>, transform_indices = @transform_9, window_bounds = array<i64: 1, 128>}, {pipeline_mode = #tpu.pipeline_mode<synchronous>, transform_indices = @transform_10, window_bounds = array<i64: 1, 128>}, {pipeline_mode = #tpu.pipeline_mode<synchronous>, transform_indices = @transform_11, window_bounds = array<i64: 1, 128>}, {pipeline_mode = #tpu.pipeline_mode<synchronous>, transform_indices = @transform_12, window_bounds = array<i64: 1, 128>}, {pipeline_mode = #tpu.pipeline_mode<synchronous>, transform_indices = @transform_13, window_bounds = array<i64: 1, 128>}, {pipeline_mode = #tpu.pipeline_mode<synchronous>, transform_indices = @transform_14, window_bounds = array<i64: 1, 128>}, {pipeline_mode = #tpu.pipeline_mode<synchronous>, transform_indices = @transform_15, window_bounds = array<i64: 128, 128>}, {pipeline_mode = #tpu.pipeline_mode<synchronous>, transform_indices = @transform_16, window_bounds = array<i64: 128, 128>}, {pipeline_mode = #tpu.pipeline_mode<synchronous>, transform_indices = @transform_17, window_bounds = array<i64: 128, 128>}, {pipeline_mode = #tpu.pipeline_mode<synchronous>, transform_indices = @transform_18, window_bounds = array<i64: 128, 128>}, {pipeline_mode = #tpu.pipeline_mode<synchronous>, transform_indices = @transform_19, window_bounds = array<i64: 1, 128>}, {pipeline_mode = #tpu.pipeline_mode<synchronous>, transform_indices = @transform_20, window_bounds = array<i64: 1, 128>}, {pipeline_mode = #tpu.pipeline_mode<synchronous>, transform_indices = @transform_21, window_bounds = array<i64: 1, 128>}, {pipeline_mode = #tpu.pipeline_mode<synchronous>, transform_indices = @transform_22, window_bounds = array<i64: 1, 128>}, {pipeline_mode = #tpu.pipeline_mode<synchronous>, transform_indices = @transform_23, window_bounds = array<i64: 1, 128>}, {pipeline_mode = #tpu.pipeline_mode<synchronous>, transform_indices = @transform_24, window_bounds = array<i64: 1, 128>}, {pipeline_mode = #tpu.pipeline_mode<synchronous>, transform_indices = @transform_25, window_bounds = array<i64: 128, 128>}, {pipeline_mode = #tpu.pipeline_mode<synchronous>, transform_indices = @transform_26, window_bounds = array<i64: 1, 128>}, {pipeline_mode = #tpu.pipeline_mode<synchronous>, transform_indices = @transform_27, window_bounds = array<i64: 128, 128>}, {pipeline_mode = #tpu.pipeline_mode<synchronous>, transform_indices = @transform_28, window_bounds = array<i64: 1, 128>}, {pipeline_mode = #tpu.pipeline_mode<synchronous>, transform_indices = @transform_29, window_bounds = array<i64: 1, 128>}, {pipeline_mode = #tpu.pipeline_mode<synchronous>, transform_indices = @transform_30, window_bounds = array<i64: 1, 128>}, {transform_indices = @transform_31, window_bounds = array<i64: 2, 8, 128>}]} {
    %c0 = arith.constant 0 : index
    %c0_0 = arith.constant 0 : index
    %c0_1 = arith.constant 0 : index
    %0 = vector.load %arg1[%c0, %c0_0, %c0_1] : memref<2x8x128xf32, #tpu.memory_space<vmem>>, vector<2x8x128xf32>
    %c0_2 = arith.constant 0 : index
    %c0_3 = arith.constant 0 : index
    %c0_4 = arith.constant 0 : index
    %1 = vector.load %arg3[%c0_2, %c0_3, %c0_4] : memref<2x8x128xf32, #tpu.memory_space<vmem>>, vector<2x8x128xf32>
    %c0_5 = arith.constant 0 : index
    %c0_6 = arith.constant 0 : index
    %c0_7 = arith.constant 0 : index
    %2 = vector.load %arg2[%c0_5, %c0_6, %c0_7] : memref<2x1x8xf32, #tpu.memory_space<vmem>>, vector<2x1x8xf32>
    %c0_8 = arith.constant 0 : index
    %c0_9 = arith.constant 0 : index
    %c0_10 = arith.constant 0 : index
    %3 = vector.load %arg4[%c0_8, %c0_9, %c0_10] : memref<2x1x8xf32, #tpu.memory_space<vmem>>, vector<2x1x8xf32>
    %c0_11 = arith.constant 0 : index
    %c0_12 = arith.constant 0 : index
    %4 = vector.load %arg5[%c0_11, %c0_12] : memref<8x8xf32, #tpu.memory_space<vmem>>, vector<8x8xf32>
    %5 = vector.shape_cast %0 : vector<2x8x128xf32> to vector<16x128xf32>
    %6 = vector.shape_cast %1 : vector<2x8x128xf32> to vector<16x128xf32>
    %7 = arith.truncf %5 : vector<16x128xf32> to vector<16x128xbf16>
    %c0_13 = arith.constant 0 : index
    %c0_14 = arith.constant 0 : index
    %8 = vector.load %arg6[%c0_13, %c0_14] : memref<128x128xbf16, #tpu.memory_space<vmem>>, vector<128x128xbf16>
    %cst = arith.constant dense<0.000000e+00> : vector<16x128xf32>
    %9 = tpu.matmul %7, %8, %cst {dimension_numbers = #tpu.dot_dimension_numbers<[1], [0], [0], [1], [0, 0, 1, 1], [], []>} : vector<16x128xbf16>, vector<128x128xbf16>, vector<16x128xf32> -> vector<16x128xf32>
    %c0_15 = arith.constant 0 : index
    %c0_16 = arith.constant 0 : index
    %10 = vector.load %arg10[%c0_15, %c0_16] : memref<1x128xf32, #tpu.memory_space<vmem>>, vector<1x128xf32>
    %11 = vector.broadcast %10 : vector<1x128xf32> to vector<16x128xf32>
    %12 = arith.addf %9, %11 : vector<16x128xf32>
    %cst_17 = arith.constant 0.176776692 : f32
    %13 = vector.broadcast %cst_17 : f32 to vector<16x128xf32>
    %14 = arith.mulf %12, %13 : vector<16x128xf32>
    %15 = arith.truncf %5 : vector<16x128xf32> to vector<16x128xbf16>
    %c0_18 = arith.constant 0 : index
    %c0_19 = arith.constant 0 : index
    %16 = vector.load %arg7[%c0_18, %c0_19] : memref<128x128xbf16, #tpu.memory_space<vmem>>, vector<128x128xbf16>
    %cst_20 = arith.constant dense<0.000000e+00> : vector<16x128xf32>
    %17 = tpu.matmul %15, %16, %cst_20 {dimension_numbers = #tpu.dot_dimension_numbers<[1], [0], [0], [1], [0, 0, 1, 1], [], []>} : vector<16x128xbf16>, vector<128x128xbf16>, vector<16x128xf32> -> vector<16x128xf32>
    %c0_21 = arith.constant 0 : index
    %c0_22 = arith.constant 0 : index
    %18 = vector.load %arg11[%c0_21, %c0_22] : memref<1x128xf32, #tpu.memory_space<vmem>>, vector<1x128xf32>
    %19 = vector.broadcast %18 : vector<1x128xf32> to vector<16x128xf32>
    %20 = arith.addf %17, %19 : vector<16x128xf32>
    %21 = arith.truncf %5 : vector<16x128xf32> to vector<16x128xbf16>
    %c0_23 = arith.constant 0 : index
    %c0_24 = arith.constant 0 : index
    %22 = vector.load %arg8[%c0_23, %c0_24] : memref<128x128xbf16, #tpu.memory_space<vmem>>, vector<128x128xbf16>
    %cst_25 = arith.constant dense<0.000000e+00> : vector<16x128xf32>
    %23 = tpu.matmul %21, %22, %cst_25 {dimension_numbers = #tpu.dot_dimension_numbers<[1], [0], [0], [1], [0, 0, 1, 1], [], []>} : vector<16x128xbf16>, vector<128x128xbf16>, vector<16x128xf32> -> vector<16x128xf32>
    %c0_26 = arith.constant 0 : index
    %c0_27 = arith.constant 0 : index
    %24 = vector.load %arg12[%c0_26, %c0_27] : memref<1x128xf32, #tpu.memory_space<vmem>>, vector<1x128xf32>
    %25 = vector.broadcast %24 : vector<1x128xf32> to vector<16x128xf32>
    %26 = arith.addf %23, %25 : vector<16x128xf32>
    %27 = vector.shape_cast %14 : vector<16x128xf32> to vector<2x8x128xf32>
    %28 = vector.shape_cast %20 : vector<16x128xf32> to vector<2x8x128xf32>
    %29 = arith.truncf %27 : vector<2x8x128xf32> to vector<2x8x128xbf16>
    %30 = arith.truncf %28 : vector<2x8x128xf32> to vector<2x8x128xbf16>
    %cst_28 = arith.constant dense<0.000000e+00> : vector<2x8x8xf32>
    %31 = tpu.matmul %29, %30, %cst_28 {dimension_numbers = #tpu.dot_dimension_numbers<[2], [2], [1], [1], [0, 0, 0, 1, 1, 1], [0], [0]>} : vector<2x8x128xbf16>, vector<2x8x128xbf16>, vector<2x8x8xf32> -> vector<2x8x8xf32>
    %cst_29 = arith.constant 0.000000e+00 : f32
    %32 = vector.broadcast %cst_29 : f32 to vector<2x1x8xf32>
    %33 = arith.cmpf ogt, %2, %32 : vector<2x1x8xf32>
    %34 = vector.shape_cast %4 : vector<8x8xf32> to vector<1x8x8xf32>
    %cst_30 = arith.constant 0.000000e+00 : f32
    %35 = vector.broadcast %cst_30 : f32 to vector<1x8x8xf32>
    %36 = arith.cmpf ogt, %34, %35 : vector<1x8x8xf32>
    %37 = vector.broadcast %33 : vector<2x1x8xi1> to vector<2x8x8xi1>
    %38 = vector.broadcast %36 : vector<1x8x8xi1> to vector<2x8x8xi1>
    %39 = arith.andi %37, %38 : vector<2x8x8xi1>
    %cst_31 = arith.constant -1.000000e+09 : f32
    %40 = vector.broadcast %cst_31 : f32 to vector<2x8x8xf32>
    %41 = arith.select %39, %31, %40 : vector<2x8x8xi1>, vector<2x8x8xf32>
    %cst_32 = arith.constant dense<0xFF800000> : vector<2x8xf32>
    %42 = vector.multi_reduction <maximumf>, %41, %cst_32 [2] : vector<2x8x8xf32> to vector<2x8xf32>
    %43 = vector.shape_cast %42 : vector<2x8xf32> to vector<2x8x1xf32>
    %44 = vector.broadcast %43 : vector<2x8x1xf32> to vector<2x8x8xf32>
    %45 = arith.subf %41, %44 : vector<2x8x8xf32>
    %46 = math.exp %45 : vector<2x8x8xf32>
    %cst_33 = arith.constant dense<0.000000e+00> : vector<2x8xf32>
    %47 = vector.multi_reduction <add>, %46, %cst_33 [2] : vector<2x8x8xf32> to vector<2x8xf32>
    %48 = vector.shape_cast %47 : vector<2x8xf32> to vector<2x8x1xf32>
    %49 = tpu.reciprocal %48 {approx = true} : vector<2x8x1xf32> -> vector<2x8x1xf32>
    %50 = vector.broadcast %49 : vector<2x8x1xf32> to vector<2x8x8xf32>
    %51 = arith.mulf %46, %50 : vector<2x8x8xf32>
    %52 = vector.shape_cast %26 : vector<16x128xf32> to vector<2x8x128xf32>
    %53 = arith.truncf %51 : vector<2x8x8xf32> to vector<2x8x8xbf16>
    %54 = arith.truncf %52 : vector<2x8x128xf32> to vector<2x8x128xbf16>
    %cst_34 = arith.constant dense<0.000000e+00> : vector<2x8x128xf32>
    %55 = tpu.matmul %53, %54, %cst_34 {dimension_numbers = #tpu.dot_dimension_numbers<[2], [1], [1], [2], [0, 0, 0, 1, 1, 2], [0], [0]>} : vector<2x8x8xbf16>, vector<2x8x128xbf16>, vector<2x8x128xf32> -> vector<2x8x128xf32>
    %56 = vector.shape_cast %55 : vector<2x8x128xf32> to vector<16x128xf32>
    %57 = arith.truncf %56 : vector<16x128xf32> to vector<16x128xbf16>
    %c0_35 = arith.constant 0 : index
    %c0_36 = arith.constant 0 : index
    %58 = vector.load %arg9[%c0_35, %c0_36] : memref<128x128xbf16, #tpu.memory_space<vmem>>, vector<128x128xbf16>
    %cst_37 = arith.constant dense<0.000000e+00> : vector<16x128xf32>
    %59 = tpu.matmul %57, %58, %cst_37 {dimension_numbers = #tpu.dot_dimension_numbers<[1], [0], [0], [1], [0, 0, 1, 1], [], []>} : vector<16x128xbf16>, vector<128x128xbf16>, vector<16x128xf32> -> vector<16x128xf32>
    %c0_38 = arith.constant 0 : index
    %c0_39 = arith.constant 0 : index
    %60 = vector.load %arg13[%c0_38, %c0_39] : memref<1x128xf32, #tpu.memory_space<vmem>>, vector<1x128xf32>
    %61 = vector.broadcast %60 : vector<1x128xf32> to vector<16x128xf32>
    %62 = arith.addf %59, %61 : vector<16x128xf32>
    %c0_40 = arith.constant 0 : index
    %c0_41 = arith.constant 0 : index
    %63 = vector.load %arg14[%c0_40, %c0_41] : memref<1x128xf32, #tpu.memory_space<vmem>>, vector<1x128xf32>
    %c0_42 = arith.constant 0 : index
    %c0_43 = arith.constant 0 : index
    %64 = vector.load %arg15[%c0_42, %c0_43] : memref<1x128xf32, #tpu.memory_space<vmem>>, vector<1x128xf32>
    %65 = arith.addf %5, %62 : vector<16x128xf32>
    %cst_44 = arith.constant dense<0.000000e+00> : vector<16xf32>
    %66 = vector.multi_reduction <add>, %65, %cst_44 [1] : vector<16x128xf32> to vector<16xf32>
    %67 = vector.shape_cast %66 : vector<16xf32> to vector<16x1xf32>
    %cst_45 = arith.constant 3.125000e-02 : f32
    %68 = vector.broadcast %cst_45 : f32 to vector<16x1xf32>
    %69 = arith.mulf %67, %68 : vector<16x1xf32>
    %70 = arith.mulf %65, %65 : vector<16x128xf32>
    %cst_46 = arith.constant dense<0.000000e+00> : vector<16xf32>
    %71 = vector.multi_reduction <add>, %70, %cst_46 [1] : vector<16x128xf32> to vector<16xf32>
    %72 = vector.shape_cast %71 : vector<16xf32> to vector<16x1xf32>
    %cst_47 = arith.constant 3.125000e-02 : f32
    %73 = vector.broadcast %cst_47 : f32 to vector<16x1xf32>
    %74 = arith.mulf %72, %73 : vector<16x1xf32>
    %75 = arith.mulf %69, %69 : vector<16x1xf32>
    %76 = arith.subf %74, %75 : vector<16x1xf32>
    %77 = vector.broadcast %69 : vector<16x1xf32> to vector<16x128xf32>
    %78 = arith.subf %65, %77 : vector<16x128xf32>
    %cst_48 = arith.constant 9.99999974E-6 : f32
    %79 = vector.broadcast %cst_48 : f32 to vector<16x1xf32>
    %80 = arith.addf %76, %79 : vector<16x1xf32>
    %81 = math.rsqrt %80 : vector<16x1xf32>
    %82 = vector.broadcast %81 : vector<16x1xf32> to vector<16x128xf32>
    %83 = arith.mulf %78, %82 : vector<16x128xf32>
    %84 = vector.broadcast %63 : vector<1x128xf32> to vector<16x128xf32>
    %85 = arith.mulf %83, %84 : vector<16x128xf32>
    %86 = vector.broadcast %64 : vector<1x128xf32> to vector<16x128xf32>
    %87 = arith.addf %85, %86 : vector<16x128xf32>
    %88 = arith.truncf %87 : vector<16x128xf32> to vector<16x128xbf16>
    %c0_49 = arith.constant 0 : index
    %c0_50 = arith.constant 0 : index
    %89 = vector.load %arg16[%c0_49, %c0_50] : memref<128x128xbf16, #tpu.memory_space<vmem>>, vector<128x128xbf16>
    %cst_51 = arith.constant dense<0.000000e+00> : vector<16x128xf32>
    %90 = tpu.matmul %88, %89, %cst_51 {dimension_numbers = #tpu.dot_dimension_numbers<[1], [0], [0], [1], [0, 0, 1, 1], [], []>} : vector<16x128xbf16>, vector<128x128xbf16>, vector<16x128xf32> -> vector<16x128xf32>
    %c0_52 = arith.constant 0 : index
    %c0_53 = arith.constant 0 : index
    %91 = vector.load %arg20[%c0_52, %c0_53] : memref<1x128xf32, #tpu.memory_space<vmem>>, vector<1x128xf32>
    %92 = vector.broadcast %91 : vector<1x128xf32> to vector<16x128xf32>
    %93 = arith.addf %90, %92 : vector<16x128xf32>
    %cst_54 = arith.constant 0.176776692 : f32
    %94 = vector.broadcast %cst_54 : f32 to vector<16x128xf32>
    %95 = arith.mulf %93, %94 : vector<16x128xf32>
    %96 = arith.truncf %6 : vector<16x128xf32> to vector<16x128xbf16>
    %c0_55 = arith.constant 0 : index
    %c0_56 = arith.constant 0 : index
    %97 = vector.load %arg17[%c0_55, %c0_56] : memref<128x128xbf16, #tpu.memory_space<vmem>>, vector<128x128xbf16>
    %cst_57 = arith.constant dense<0.000000e+00> : vector<16x128xf32>
    %98 = tpu.matmul %96, %97, %cst_57 {dimension_numbers = #tpu.dot_dimension_numbers<[1], [0], [0], [1], [0, 0, 1, 1], [], []>} : vector<16x128xbf16>, vector<128x128xbf16>, vector<16x128xf32> -> vector<16x128xf32>
    %c0_58 = arith.constant 0 : index
    %c0_59 = arith.constant 0 : index
    %99 = vector.load %arg21[%c0_58, %c0_59] : memref<1x128xf32, #tpu.memory_space<vmem>>, vector<1x128xf32>
    %100 = vector.broadcast %99 : vector<1x128xf32> to vector<16x128xf32>
    %101 = arith.addf %98, %100 : vector<16x128xf32>
    %102 = arith.truncf %6 : vector<16x128xf32> to vector<16x128xbf16>
    %c0_60 = arith.constant 0 : index
    %c0_61 = arith.constant 0 : index
    %103 = vector.load %arg18[%c0_60, %c0_61] : memref<128x128xbf16, #tpu.memory_space<vmem>>, vector<128x128xbf16>
    %cst_62 = arith.constant dense<0.000000e+00> : vector<16x128xf32>
    %104 = tpu.matmul %102, %103, %cst_62 {dimension_numbers = #tpu.dot_dimension_numbers<[1], [0], [0], [1], [0, 0, 1, 1], [], []>} : vector<16x128xbf16>, vector<128x128xbf16>, vector<16x128xf32> -> vector<16x128xf32>
    %c0_63 = arith.constant 0 : index
    %c0_64 = arith.constant 0 : index
    %105 = vector.load %arg22[%c0_63, %c0_64] : memref<1x128xf32, #tpu.memory_space<vmem>>, vector<1x128xf32>
    %106 = vector.broadcast %105 : vector<1x128xf32> to vector<16x128xf32>
    %107 = arith.addf %104, %106 : vector<16x128xf32>
    %108 = vector.shape_cast %95 : vector<16x128xf32> to vector<2x8x128xf32>
    %109 = vector.shape_cast %101 : vector<16x128xf32> to vector<2x8x128xf32>
    %110 = arith.truncf %108 : vector<2x8x128xf32> to vector<2x8x128xbf16>
    %111 = arith.truncf %109 : vector<2x8x128xf32> to vector<2x8x128xbf16>
    %cst_65 = arith.constant dense<0.000000e+00> : vector<2x8x8xf32>
    %112 = tpu.matmul %110, %111, %cst_65 {dimension_numbers = #tpu.dot_dimension_numbers<[2], [2], [1], [1], [0, 0, 0, 1, 1, 1], [0], [0]>} : vector<2x8x128xbf16>, vector<2x8x128xbf16>, vector<2x8x8xf32> -> vector<2x8x8xf32>
    %cst_66 = arith.constant 0.000000e+00 : f32
    %113 = vector.broadcast %cst_66 : f32 to vector<2x1x8xf32>
    %114 = arith.cmpf ogt, %3, %113 : vector<2x1x8xf32>
    %cst_67 = arith.constant -1.000000e+09 : f32
    %115 = vector.shape_cast %114 : vector<2x1x8xi1> to vector<2x1x8xi1>
    %116 = vector.broadcast %115 : vector<2x1x8xi1> to vector<2x8x8xi1>
    %117 = vector.broadcast %cst_67 : f32 to vector<2x8x8xf32>
    %118 = arith.select %116, %112, %117 : vector<2x8x8xi1>, vector<2x8x8xf32>
    %cst_68 = arith.constant dense<0xFF800000> : vector<2x8xf32>
    %119 = vector.multi_reduction <maximumf>, %118, %cst_68 [2] : vector<2x8x8xf32> to vector<2x8xf32>
    %120 = vector.shape_cast %119 : vector<2x8xf32> to vector<2x8x1xf32>
    %121 = vector.broadcast %120 : vector<2x8x1xf32> to vector<2x8x8xf32>
    %122 = arith.subf %118, %121 : vector<2x8x8xf32>
    %123 = math.exp %122 : vector<2x8x8xf32>
    %cst_69 = arith.constant dense<0.000000e+00> : vector<2x8xf32>
    %124 = vector.multi_reduction <add>, %123, %cst_69 [2] : vector<2x8x8xf32> to vector<2x8xf32>
    %125 = vector.shape_cast %124 : vector<2x8xf32> to vector<2x8x1xf32>
    %126 = tpu.reciprocal %125 {approx = true} : vector<2x8x1xf32> -> vector<2x8x1xf32>
    %127 = vector.broadcast %126 : vector<2x8x1xf32> to vector<2x8x8xf32>
    %128 = arith.mulf %123, %127 : vector<2x8x8xf32>
    %129 = vector.shape_cast %107 : vector<16x128xf32> to vector<2x8x128xf32>
    %130 = arith.truncf %128 : vector<2x8x8xf32> to vector<2x8x8xbf16>
    %131 = arith.truncf %129 : vector<2x8x128xf32> to vector<2x8x128xbf16>
    %cst_70 = arith.constant dense<0.000000e+00> : vector<2x8x128xf32>
    %132 = tpu.matmul %130, %131, %cst_70 {dimension_numbers = #tpu.dot_dimension_numbers<[2], [1], [1], [2], [0, 0, 0, 1, 1, 2], [0], [0]>} : vector<2x8x8xbf16>, vector<2x8x128xbf16>, vector<2x8x128xf32> -> vector<2x8x128xf32>
    %133 = vector.shape_cast %132 : vector<2x8x128xf32> to vector<16x128xf32>
    %134 = arith.truncf %133 : vector<16x128xf32> to vector<16x128xbf16>
    %c0_71 = arith.constant 0 : index
    %c0_72 = arith.constant 0 : index
    %135 = vector.load %arg19[%c0_71, %c0_72] : memref<128x128xbf16, #tpu.memory_space<vmem>>, vector<128x128xbf16>
    %cst_73 = arith.constant dense<0.000000e+00> : vector<16x128xf32>
    %136 = tpu.matmul %134, %135, %cst_73 {dimension_numbers = #tpu.dot_dimension_numbers<[1], [0], [0], [1], [0, 0, 1, 1], [], []>} : vector<16x128xbf16>, vector<128x128xbf16>, vector<16x128xf32> -> vector<16x128xf32>
    %c0_74 = arith.constant 0 : index
    %c0_75 = arith.constant 0 : index
    %137 = vector.load %arg23[%c0_74, %c0_75] : memref<1x128xf32, #tpu.memory_space<vmem>>, vector<1x128xf32>
    %138 = vector.broadcast %137 : vector<1x128xf32> to vector<16x128xf32>
    %139 = arith.addf %136, %138 : vector<16x128xf32>
    %c0_76 = arith.constant 0 : index
    %c0_77 = arith.constant 0 : index
    %140 = vector.load %arg24[%c0_76, %c0_77] : memref<1x128xf32, #tpu.memory_space<vmem>>, vector<1x128xf32>
    %c0_78 = arith.constant 0 : index
    %c0_79 = arith.constant 0 : index
    %141 = vector.load %arg25[%c0_78, %c0_79] : memref<1x128xf32, #tpu.memory_space<vmem>>, vector<1x128xf32>
    %142 = arith.addf %87, %139 : vector<16x128xf32>
    %cst_80 = arith.constant dense<0.000000e+00> : vector<16xf32>
    %143 = vector.multi_reduction <add>, %142, %cst_80 [1] : vector<16x128xf32> to vector<16xf32>
    %144 = vector.shape_cast %143 : vector<16xf32> to vector<16x1xf32>
    %cst_81 = arith.constant 3.125000e-02 : f32
    %145 = vector.broadcast %cst_81 : f32 to vector<16x1xf32>
    %146 = arith.mulf %144, %145 : vector<16x1xf32>
    %147 = arith.mulf %142, %142 : vector<16x128xf32>
    %cst_82 = arith.constant dense<0.000000e+00> : vector<16xf32>
    %148 = vector.multi_reduction <add>, %147, %cst_82 [1] : vector<16x128xf32> to vector<16xf32>
    %149 = vector.shape_cast %148 : vector<16xf32> to vector<16x1xf32>
    %cst_83 = arith.constant 3.125000e-02 : f32
    %150 = vector.broadcast %cst_83 : f32 to vector<16x1xf32>
    %151 = arith.mulf %149, %150 : vector<16x1xf32>
    %152 = arith.mulf %146, %146 : vector<16x1xf32>
    %153 = arith.subf %151, %152 : vector<16x1xf32>
    %154 = vector.broadcast %146 : vector<16x1xf32> to vector<16x128xf32>
    %155 = arith.subf %142, %154 : vector<16x128xf32>
    %cst_84 = arith.constant 9.99999974E-6 : f32
    %156 = vector.broadcast %cst_84 : f32 to vector<16x1xf32>
    %157 = arith.addf %153, %156 : vector<16x1xf32>
    %158 = math.rsqrt %157 : vector<16x1xf32>
    %159 = vector.broadcast %158 : vector<16x1xf32> to vector<16x128xf32>
    %160 = arith.mulf %155, %159 : vector<16x128xf32>
    %161 = vector.broadcast %140 : vector<1x128xf32> to vector<16x128xf32>
    %162 = arith.mulf %160, %161 : vector<16x128xf32>
    %163 = vector.broadcast %141 : vector<1x128xf32> to vector<16x128xf32>
    %164 = arith.addf %162, %163 : vector<16x128xf32>
    %165 = arith.truncf %164 : vector<16x128xf32> to vector<16x128xbf16>
    %c0_85 = arith.constant 0 : index
    %c0_86 = arith.constant 0 : index
    %166 = vector.load %arg26[%c0_85, %c0_86] : memref<128x128xbf16, #tpu.memory_space<vmem>>, vector<128x128xbf16>
    %cst_87 = arith.constant dense<0.000000e+00> : vector<16x128xf32>
    %167 = tpu.matmul %165, %166, %cst_87 {dimension_numbers = #tpu.dot_dimension_numbers<[1], [0], [0], [1], [0, 0, 1, 1], [], []>} : vector<16x128xbf16>, vector<128x128xbf16>, vector<16x128xf32> -> vector<16x128xf32>
    %c0_88 = arith.constant 0 : index
    %c0_89 = arith.constant 0 : index
    %168 = vector.load %arg27[%c0_88, %c0_89] : memref<1x128xf32, #tpu.memory_space<vmem>>, vector<1x128xf32>
    %169 = vector.broadcast %168 : vector<1x128xf32> to vector<16x128xf32>
    %170 = arith.addf %167, %169 : vector<16x128xf32>
    %cst_90 = arith.constant 0.000000e+00 : f32
    %171 = vector.broadcast %cst_90 : f32 to vector<16x128xf32>
    %172 = arith.maximumf %170, %171 : vector<16x128xf32>
    %173 = arith.truncf %172 : vector<16x128xf32> to vector<16x128xbf16>
    %c0_91 = arith.constant 0 : index
    %c0_92 = arith.constant 0 : index
    %174 = vector.load %arg28[%c0_91, %c0_92] : memref<128x128xbf16, #tpu.memory_space<vmem>>, vector<128x128xbf16>
    %cst_93 = arith.constant dense<0.000000e+00> : vector<16x128xf32>
    %175 = tpu.matmul %173, %174, %cst_93 {dimension_numbers = #tpu.dot_dimension_numbers<[1], [0], [0], [1], [0, 0, 1, 1], [], []>} : vector<16x128xbf16>, vector<128x128xbf16>, vector<16x128xf32> -> vector<16x128xf32>
    %c0_94 = arith.constant 0 : index
    %c0_95 = arith.constant 0 : index
    %176 = vector.load %arg29[%c0_94, %c0_95] : memref<1x128xf32, #tpu.memory_space<vmem>>, vector<1x128xf32>
    %177 = vector.broadcast %176 : vector<1x128xf32> to vector<16x128xf32>
    %178 = arith.addf %175, %177 : vector<16x128xf32>
    %c0_96 = arith.constant 0 : index
    %c0_97 = arith.constant 0 : index
    %179 = vector.load %arg30[%c0_96, %c0_97] : memref<1x128xf32, #tpu.memory_space<vmem>>, vector<1x128xf32>
    %c0_98 = arith.constant 0 : index
    %c0_99 = arith.constant 0 : index
    %180 = vector.load %arg31[%c0_98, %c0_99] : memref<1x128xf32, #tpu.memory_space<vmem>>, vector<1x128xf32>
    %181 = arith.addf %164, %178 : vector<16x128xf32>
    %cst_100 = arith.constant dense<0.000000e+00> : vector<16xf32>
    %182 = vector.multi_reduction <add>, %181, %cst_100 [1] : vector<16x128xf32> to vector<16xf32>
    %183 = vector.shape_cast %182 : vector<16xf32> to vector<16x1xf32>
    %cst_101 = arith.constant 3.125000e-02 : f32
    %184 = vector.broadcast %cst_101 : f32 to vector<16x1xf32>
    %185 = arith.mulf %183, %184 : vector<16x1xf32>
    %186 = arith.mulf %181, %181 : vector<16x128xf32>
    %cst_102 = arith.constant dense<0.000000e+00> : vector<16xf32>
    %187 = vector.multi_reduction <add>, %186, %cst_102 [1] : vector<16x128xf32> to vector<16xf32>
    %188 = vector.shape_cast %187 : vector<16xf32> to vector<16x1xf32>
    %cst_103 = arith.constant 3.125000e-02 : f32
    %189 = vector.broadcast %cst_103 : f32 to vector<16x1xf32>
    %190 = arith.mulf %188, %189 : vector<16x1xf32>
    %191 = arith.mulf %185, %185 : vector<16x1xf32>
    %192 = arith.subf %190, %191 : vector<16x1xf32>
    %193 = vector.broadcast %185 : vector<16x1xf32> to vector<16x128xf32>
    %194 = arith.subf %181, %193 : vector<16x128xf32>
    %cst_104 = arith.constant 9.99999974E-6 : f32
    %195 = vector.broadcast %cst_104 : f32 to vector<16x1xf32>
    %196 = arith.addf %192, %195 : vector<16x1xf32>
    %197 = math.rsqrt %196 : vector<16x1xf32>
    %198 = vector.broadcast %197 : vector<16x1xf32> to vector<16x128xf32>
    %199 = arith.mulf %194, %198 : vector<16x128xf32>
    %200 = vector.broadcast %179 : vector<1x128xf32> to vector<16x128xf32>
    %201 = arith.mulf %199, %200 : vector<16x128xf32>
    %202 = vector.broadcast %180 : vector<1x128xf32> to vector<16x128xf32>
    %203 = arith.addf %201, %202 : vector<16x128xf32>
    %204 = vector.shape_cast %203 : vector<16x128xf32> to vector<2x8x128xf32>
    %c0_105 = arith.constant 0 : index
    %c0_106 = arith.constant 0 : index
    %c0_107 = arith.constant 0 : index
    %205 = vector.load %arg32[%c0_105, %c0_106, %c0_107] : memref<2x8x128xf32, #tpu.memory_space<vmem>>, vector<2x8x128xf32>
    tpu.vector_store %arg32[%c0_105, %c0_106, %c0_107], %204 {strides = array<i32>} : memref<2x8x128xf32, #tpu.memory_space<vmem>>, vector<2x8x128xf32>,
    return
  }
  func.func @transform_0(%arg0: i32) -> (i32, i32, i32) {
    %c0_i32 = arith.constant 0 : i32
    %c0_i32_0 = arith.constant 0 : i32
    %c0_i32_1 = arith.constant 0 : i32
    return %arg0, %c0_i32, %c0_i32_0 : i32, i32, i32
  }
  func.func @transform_1(%arg0: i32) -> (i32, i32, i32) {
    %c0_i32 = arith.constant 0 : i32
    %c0_i32_0 = arith.constant 0 : i32
    %c0_i32_1 = arith.constant 0 : i32
    return %arg0, %c0_i32, %c0_i32_0 : i32, i32, i32
  }
  func.func @transform_2(%arg0: i32) -> (i32, i32, i32) {
    %c0_i32 = arith.constant 0 : i32
    %c0_i32_0 = arith.constant 0 : i32
    %c0_i32_1 = arith.constant 0 : i32
    return %arg0, %c0_i32, %c0_i32_0 : i32, i32, i32
  }
  func.func @transform_3(%arg0: i32) -> (i32, i32, i32) {
    %c0_i32 = arith.constant 0 : i32
    %c0_i32_0 = arith.constant 0 : i32
    %c0_i32_1 = arith.constant 0 : i32
    return %arg0, %c0_i32, %c0_i32_0 : i32, i32, i32
  }
  func.func @transform_4(%arg0: i32) -> (i32, i32) {
    %c0_i32 = arith.constant 0 : i32
    %c0_i32_0 = arith.constant 0 : i32
    %c0_i32_1 = arith.constant 0 : i32
    return %c0_i32, %c0_i32_0 : i32, i32
  }
  func.func @transform_5(%arg0: i32) -> (i32, i32) {
    %c0_i32 = arith.constant 0 : i32
    %c0_i32_0 = arith.constant 0 : i32
    %c0_i32_1 = arith.constant 0 : i32
    return %c0_i32, %c0_i32_0 : i32, i32
  }
  func.func @transform_6(%arg0: i32) -> (i32, i32) {
    %c0_i32 = arith.constant 0 : i32
    %c0_i32_0 = arith.constant 0 : i32
    %c0_i32_1 = arith.constant 0 : i32
    return %c0_i32, %c0_i32_0 : i32, i32
  }
  func.func @transform_7(%arg0: i32) -> (i32, i32) {
    %c0_i32 = arith.constant 0 : i32
    %c0_i32_0 = arith.constant 0 : i32
    %c0_i32_1 = arith.constant 0 : i32
    return %c0_i32, %c0_i32_0 : i32, i32
  }
  func.func @transform_8(%arg0: i32) -> (i32, i32) {
    %c0_i32 = arith.constant 0 : i32
    %c0_i32_0 = arith.constant 0 : i32
    %c0_i32_1 = arith.constant 0 : i32
    return %c0_i32, %c0_i32_0 : i32, i32
  }
  func.func @transform_9(%arg0: i32) -> (i32, i32) {
    %c0_i32 = arith.constant 0 : i32
    %c0_i32_0 = arith.constant 0 : i32
    %c0_i32_1 = arith.constant 0 : i32
    return %c0_i32, %c0_i32_0 : i32, i32
  }
  func.func @transform_10(%arg0: i32) -> (i32, i32) {
    %c0_i32 = arith.constant 0 : i32
    %c0_i32_0 = arith.constant 0 : i32
    %c0_i32_1 = arith.constant 0 : i32
    return %c0_i32, %c0_i32_0 : i32, i32
  }
  func.func @transform_11(%arg0: i32) -> (i32, i32) {
    %c0_i32 = arith.constant 0 : i32
    %c0_i32_0 = arith.constant 0 : i32
    %c0_i32_1 = arith.constant 0 : i32
    return %c0_i32, %c0_i32_0 : i32, i32
  }
  func.func @transform_12(%arg0: i32) -> (i32, i32) {
    %c0_i32 = arith.constant 0 : i32
    %c0_i32_0 = arith.constant 0 : i32
    %c0_i32_1 = arith.constant 0 : i32
    return %c0_i32, %c0_i32_0 : i32, i32
  }
  func.func @transform_13(%arg0: i32) -> (i32, i32) {
    %c0_i32 = arith.constant 0 : i32
    %c0_i32_0 = arith.constant 0 : i32
    %c0_i32_1 = arith.constant 0 : i32
    return %c0_i32, %c0_i32_0 : i32, i32
  }
  func.func @transform_14(%arg0: i32) -> (i32, i32) {
    %c0_i32 = arith.constant 0 : i32
    %c0_i32_0 = arith.constant 0 : i32
    %c0_i32_1 = arith.constant 0 : i32
    return %c0_i32, %c0_i32_0 : i32, i32
  }
  func.func @transform_15(%arg0: i32) -> (i32, i32) {
    %c0_i32 = arith.constant 0 : i32
    %c0_i32_0 = arith.constant 0 : i32
    %c0_i32_1 = arith.constant 0 : i32
    return %c0_i32, %c0_i32_0 : i32, i32
  }
  func.func @transform_16(%arg0: i32) -> (i32, i32) {
    %c0_i32 = arith.constant 0 : i32
    %c0_i32_0 = arith.constant 0 : i32
    %c0_i32_1 = arith.constant 0 : i32
    return %c0_i32, %c0_i32_0 : i32, i32
  }
  func.func @transform_17(%arg0: i32) -> (i32, i32) {
    %c0_i32 = arith.constant 0 : i32
    %c0_i32_0 = arith.constant 0 : i32
    %c0_i32_1 = arith.constant 0 : i32
    return %c0_i32, %c0_i32_0 : i32, i32
  }
  func.func @transform_18(%arg0: i32) -> (i32, i32) {
    %c0_i32 = arith.constant 0 : i32
    %c0_i32_0 = arith.constant 0 : i32
    %c0_i32_1 = arith.constant 0 : i32
    return %c0_i32, %c0_i32_0 : i32, i32
  }
  func.func @transform_19(%arg0: i32) -> (i32, i32) {
    %c0_i32 = arith.constant 0 : i32
    %c0_i32_0 = arith.constant 0 : i32
    %c0_i32_1 = arith.constant 0 : i32
    return %c0_i32, %c0_i32_0 : i32, i32
  }
  func.func @transform_20(%arg0: i32) -> (i32, i32) {
    %c0_i32 = arith.constant 0 : i32
    %c0_i32_0 = arith.constant 0 : i32
    %c0_i32_1 = arith.constant 0 : i32
    return %c0_i32, %c0_i32_0 : i32, i32
  }
  func.func @transform_21(%arg0: i32) -> (i32, i32) {
    %c0_i32 = arith.constant 0 : i32
    %c0_i32_0 = arith.constant 0 : i32
    %c0_i32_1 = arith.constant 0 : i32
    return %c0_i32, %c0_i32_0 : i32, i32
  }
  func.func @transform_22(%arg0: i32) -> (i32, i32) {
    %c0_i32 = arith.constant 0 : i32
    %c0_i32_0 = arith.constant 0 : i32
    %c0_i32_1 = arith.constant 0 : i32
    return %c0_i32, %c0_i32_0 : i32, i32
  }
  func.func @transform_23(%arg0: i32) -> (i32, i32) {
    %c0_i32 = arith.constant 0 : i32
    %c0_i32_0 = arith.constant 0 : i32
    %c0_i32_1 = arith.constant 0 : i32
    return %c0_i32, %c0_i32_0 : i32, i32
  }
  func.func @transform_24(%arg0: i32) -> (i32, i32) {
    %c0_i32 = arith.constant 0 : i32
    %c0_i32_0 = arith.constant 0 : i32
    %c0_i32_1 = arith.constant 0 : i32
    return %c0_i32, %c0_i32_0 : i32, i32
  }
  func.func @transform_25(%arg0: i32) -> (i32, i32) {
    %c0_i32 = arith.constant 0 : i32
    %c0_i32_0 = arith.constant 0 : i32
    %c0_i32_1 = arith.constant 0 : i32
    return %c0_i32, %c0_i32_0 : i32, i32
  }
  func.func @transform_26(%arg0: i32) -> (i32, i32) {
    %c0_i32 = arith.constant 0 : i32
    %c0_i32_0 = arith.constant 0 : i32
    %c0_i32_1 = arith.constant 0 : i32
    return %c0_i32, %c0_i32_0 : i32, i32
  }
  func.func @transform_27(%arg0: i32) -> (i32, i32) {
    %c0_i32 = arith.constant 0 : i32
    %c0_i32_0 = arith.constant 0 : i32
    %c0_i32_1 = arith.constant 0 : i32
    return %c0_i32, %c0_i32_0 : i32, i32
  }
  func.func @transform_28(%arg0: i32) -> (i32, i32) {
    %c0_i32 = arith.constant 0 : i32
    %c0_i32_0 = arith.constant 0 : i32
    %c0_i32_1 = arith.constant 0 : i32
    return %c0_i32, %c0_i32_0 : i32, i32
  }
  func.func @transform_29(%arg0: i32) -> (i32, i32) {
    %c0_i32 = arith.constant 0 : i32
    %c0_i32_0 = arith.constant 0 : i32
    %c0_i32_1 = arith.constant 0 : i32
    return %c0_i32, %c0_i32_0 : i32, i32
  }
  func.func @transform_30(%arg0: i32) -> (i32, i32) {
    %c0_i32 = arith.constant 0 : i32
    %c0_i32_0 = arith.constant 0 : i32
    %c0_i32_1 = arith.constant 0 : i32
    return %c0_i32, %c0_i32_0 : i32, i32
  }
  func.func @transform_31(%arg0: i32) -> (i32, i32, i32) {
    %c0_i32 = arith.constant 0 : i32
    %c0_i32_0 = arith.constant 0 : i32
    %c0_i32_1 = arith.constant 0 : i32
    return %arg0, %c0_i32, %c0_i32_0 : i32, i32, i32
  }
}

module attributes {stable_mosaic.version = 11 : i64} {
  func.func @decoder_blk_kernel(%arg0: i32, %arg1: memref<2x8x128xf32, #tpu.memory_space<vmem>>, %arg2: memref<2x1x8xf32, #tpu.memory_space<vmem>>, %arg3: memref<2x8x128xf32, #tpu.memory_space<vmem>>, %arg4: memref<2x1x8xf32, #tpu.memory_space<vmem>>, %arg5: memref<8x8xf32, #tpu.memory_space<vmem>>, %arg6: memref<128x128xbf16, #tpu.memory_space<vmem>>, %arg7: memref<128x128xbf16, #tpu.memory_space<vmem>>, %arg8: memref<128x128xbf16, #tpu.memory_space<vmem>>, %arg9: memref<128x128xbf16, #tpu.memory_space<vmem>>, %arg10: memref<1x128xf32, #tpu.memory_space<vmem>>, %arg11: memref<1x128xf32, #tpu.memory_space<vmem>>, %arg12: memref<1x128xf32, #tpu.memory_space<vmem>>, %arg13: memref<1x128xf32, #tpu.memory_space<vmem>>, %arg14: memref<1x128xf32, #tpu.memory_space<vmem>>, %arg15: memref<1x128xf32, #tpu.memory_space<vmem>>, %arg16: memref<128x128xbf16, #tpu.memory_space<vmem>>, %arg17: memref<128x128xbf16, #tpu.memory_space<vmem>>, %arg18: memref<128x128xbf16, #tpu.memory_space<vmem>>, %arg19: memref<128x128xbf16, #tpu.memory_space<vmem>>, %arg20: memref<1x128xf32, #tpu.memory_space<vmem>>, %arg21: memref<1x128xf32, #tpu.memory_space<vmem>>, %arg22: memref<1x128xf32, #tpu.memory_space<vmem>>, %arg23: memref<1x128xf32, #tpu.memory_space<vmem>>, %arg24: memref<1x128xf32, #tpu.memory_space<vmem>>, %arg25: memref<1x128xf32, #tpu.memory_space<vmem>>, %arg26: memref<128x128xbf16, #tpu.memory_space<vmem>>, %arg27: memref<1x128xf32, #tpu.memory_space<vmem>>, %arg28: memref<128x128xbf16, #tpu.memory_space<vmem>>, %arg29: memref<1x128xf32, #tpu.memory_space<vmem>>, %arg30: memref<1x128xf32, #tpu.memory_space<vmem>>, %arg31: memref<1x128xf32, #tpu.memory_space<vmem>>, %arg32: memref<2x8x128xf32, #tpu.memory_space<vmem>>) attributes {dimension_semantics = [#tpu.dimension_semantics<parallel>], iteration_bounds = array<i64: 1>, scalar_prefetch = 0 : i64, scratch_operands = 0 : i64, tpu.core_type = #tpu.core_type<tc>, window_params = [{transform_indices = @transform_0, window_bounds = array<i64: 2, 8, 128>}, {transform_indices = @transform_1, window_bounds = array<i64: 2, 1, 8>}, {transform_indices = @transform_2, window_bounds = array<i64: 2, 8, 128>}, {transform_indices = @transform_3, window_bounds = array<i64: 2, 1, 8>}, {pipeline_mode = #tpu.pipeline_mode<synchronous>, transform_indices = @transform_4, window_bounds = array<i64: 8, 8>}, {pipeline_mode = #tpu.pipeline_mode<synchronous>, transform_indices = @transform_5, window_bounds = array<i64: 128, 128>}, {pipeline_mode = #tpu.pipeline_mode<synchronous>, transform_indices = @transform_6, window_bounds = array<i64: 128, 128>}, {pipeline_mode = #tpu.pipeline_mode<synchronous>, transform_indices = @transform_7, window_bounds = array<i64: 128, 128>}, {pipeline_mode = #tpu.pipeline_mode<synchronous>, transform_indices = @transform_8, window_bounds = array<i64: 128, 128>}, {pipeline_mode = #tpu.pipeline_mode<synchronous>, transform_indices = @transform_9, window_bounds = array<i64: 1, 128>}, {pipeline_mode = #tpu.pipeline_mode<synchronous>, transform_indices = @transform_10, window_bounds = array<i64: 1, 128>}, {pipeline_mode = #tpu.pipeline_mode<synchronous>, transform_indices = @transform_11, window_bounds = array<i64: 1, 128>}, {pipeline_mode = #tpu.pipeline_mode<synchronous>, transform_indices = @transform_12, window_bounds = array<i64: 1, 128>}, {pipeline_mode = #tpu.pipeline_mode<synchronous>, transform_indices = @transform_13, window_bounds = array<i64: 1, 128>}, {pipeline_mode = #tpu.pipeline_mode<synchronous>, transform_indices = @transform_14, window_bounds = array<i64: 1, 128>}, {pipeline_mode = #tpu.pipeline_mode<synchronous>, transform_indices = @transform_15, window_bounds = array<i64: 128, 128>}, {pipeline_mode = #tpu.pipeline_mode<synchronous>, transform_indices = @transform_16, window_bounds = array<i64: 128, 128>}, {pipeline_mode = #tpu.pipeline_mode<synchronous>, transform_indices = @transform_17, window_bounds = array<i64: 128, 128>}, {pipeline_mode = #tpu.pipeline_mode<synchronous>, transform_indices = @transform_18, window_bounds = array<i64: 128, 128>}, {pipeline_mode = #tpu.pipeline_mode<synchronous>, transform_indices = @transform_19, window_bounds = array<i64: 1, 128>}, {pipeline_mode = #tpu.pipeline_mode<synchronous>, transform_indices = @transform_20, window_bounds = array<i64: 1, 128>}, {pipeline_mode = #tpu.pipeline_mode<synchronous>, transform_indices = @transform_21, window_bounds = array<i64: 1, 128>}, {pipeline_mode = #tpu.pipeline_mode<synchronous>, transform_indices = @transform_22, window_bounds = array<i64: 1, 128>}, {pipeline_mode = #tpu.pipeline_mode<synchronous>, transform_indices = @transform_23, window_bounds = array<i64: 1, 128>}, {pipeline_mode = #tpu.pipeline_mode<synchronous>, transform_indices = @transform_24, window_bounds = array<i64: 1, 128>}, {pipeline_mode = #tpu.pipeline_mode<synchronous>, transform_indices = @transform_25, window_bounds = array<i64: 128, 128>}, {pipeline_mode = #tpu.pipeline_mode<synchronous>, transform_indices = @transform_26, window_bounds = array<i64: 1, 128>}, {pipeline_mode = #tpu.pipeline_mode<synchronous>, transform_indices = @transform_27, window_bounds = array<i64: 128, 128>}, {pipeline_mode = #tpu.pipeline_mode<synchronous>, transform_indices = @transform_28, window_bounds = array<i64: 1, 128>}, {pipeline_mode = #tpu.pipeline_mode<synchronous>, transform_indices = @transform_29, window_bounds = array<i64: 1, 128>}, {pipeline_mode = #tpu.pipeline_mode<synchronous>, transform_indices = @transform_30, window_bounds = array<i64: 1, 128>}, {transform_indices = @transform_31, window_bounds = array<i64: 2, 8, 128>}]} {
    %c0 = arith.constant 0 : index
    %c0_0 = arith.constant 0 : index
    %c0_1 = arith.constant 0 : index
    %0 = vector.load %arg1[%c0, %c0_0, %c0_1] : memref<2x8x128xf32, #tpu.memory_space<vmem>>, vector<2x8x128xf32>
    %c0_2 = arith.constant 0 : index
    %c0_3 = arith.constant 0 : index
    %c0_4 = arith.constant 0 : index
    %1 = vector.load %arg3[%c0_2, %c0_3, %c0_4] : memref<2x8x128xf32, #tpu.memory_space<vmem>>, vector<2x8x128xf32>
    %c0_5 = arith.constant 0 : index
    %c0_6 = arith.constant 0 : index
    %c0_7 = arith.constant 0 : index
    %2 = vector.load %arg2[%c0_5, %c0_6, %c0_7] : memref<2x1x8xf32, #tpu.memory_space<vmem>>, vector<2x1x8xf32>
    %c0_8 = arith.constant 0 : index
    %c0_9 = arith.constant 0 : index
    %c0_10 = arith.constant 0 : index
    %3 = vector.load %arg4[%c0_8, %c0_9, %c0_10] : memref<2x1x8xf32, #tpu.memory_space<vmem>>, vector<2x1x8xf32>
    %c0_11 = arith.constant 0 : index
    %c0_12 = arith.constant 0 : index
    %4 = vector.load %arg5[%c0_11, %c0_12] : memref<8x8xf32, #tpu.memory_space<vmem>>, vector<8x8xf32>
    %5 = vector.shape_cast %0 : vector<2x8x128xf32> to vector<16x128xf32>
    %6 = vector.shape_cast %1 : vector<2x8x128xf32> to vector<16x128xf32>
    %7 = arith.truncf %5 : vector<16x128xf32> to vector<16x128xbf16>
    %c0_13 = arith.constant 0 : index
    %c0_14 = arith.constant 0 : index
    %8 = vector.load %arg6[%c0_13, %c0_14] : memref<128x128xbf16, #tpu.memory_space<vmem>>, vector<128x128xbf16>
    %cst = arith.constant dense<0.000000e+00> : vector<16x128xf32>
    %9 = tpu.matmul %7, %8, %cst {dimension_numbers = #tpu.dot_dimension_numbers<[1], [0], [0], [1], [0, 0, 1, 1], [], []>} : vector<16x128xbf16>, vector<128x128xbf16>, vector<16x128xf32> -> vector<16x128xf32>
    %c0_15 = arith.constant 0 : index
    %c0_16 = arith.constant 0 : index
    %10 = vector.load %arg10[%c0_15, %c0_16] : memref<1x128xf32, #tpu.memory_space<vmem>>, vector<1x128xf32>
    %11 = vector.broadcast %10 : vector<1x128xf32> to vector<16x128xf32>
    %12 = arith.addf %9, %11 : vector<16x128xf32>
    %cst_17 = arith.constant 0.176776692 : f32
    %13 = vector.broadcast %cst_17 : f32 to vector<16x128xf32>
    %14 = arith.mulf %12, %13 : vector<16x128xf32>
    %15 = arith.truncf %5 : vector<16x128xf32> to vector<16x128xbf16>
    %c0_18 = arith.constant 0 : index
    %c0_19 = arith.constant 0 : index
    %16 = vector.load %arg7[%c0_18, %c0_19] : memref<128x128xbf16, #tpu.memory_space<vmem>>, vector<128x128xbf16>
    %cst_20 = arith.constant dense<0.000000e+00> : vector<16x128xf32>
    %17 = tpu.matmul %15, %16, %cst_20 {dimension_numbers = #tpu.dot_dimension_numbers<[1], [0], [0], [1], [0, 0, 1, 1], [], []>} : vector<16x128xbf16>, vector<128x128xbf16>, vector<16x128xf32> -> vector<16x128xf32>
    %c0_21 = arith.constant 0 : index
    %c0_22 = arith.constant 0 : index
    %18 = vector.load %arg11[%c0_21, %c0_22] : memref<1x128xf32, #tpu.memory_space<vmem>>, vector<1x128xf32>
    %19 = vector.broadcast %18 : vector<1x128xf32> to vector<16x128xf32>
    %20 = arith.addf %17, %19 : vector<16x128xf32>
    %21 = arith.truncf %5 : vector<16x128xf32> to vector<16x128xbf16>
    %c0_23 = arith.constant 0 : index
    %c0_24 = arith.constant 0 : index
    %22 = vector.load %arg8[%c0_23, %c0_24] : memref<128x128xbf16, #tpu.memory_space<vmem>>, vector<128x128xbf16>
    %cst_25 = arith.constant dense<0.000000e+00> : vector<16x128xf32>
    %23 = tpu.matmul %21, %22, %cst_25 {dimension_numbers = #tpu.dot_dimension_numbers<[1], [0], [0], [1], [0, 0, 1, 1], [], []>} : vector<16x128xbf16>, vector<128x128xbf16>, vector<16x128xf32> -> vector<16x128xf32>
    %c0_26 = arith.constant 0 : index
    %c0_27 = arith.constant 0 : index
    %24 = vector.load %arg12[%c0_26, %c0_27] : memref<1x128xf32, #tpu.memory_space<vmem>>, vector<1x128xf32>
    %25 = vector.broadcast %24 : vector<1x128xf32> to vector<16x128xf32>
    %26 = arith.addf %23, %25 : vector<16x128xf32>
    %27 = vector.shape_cast %14 : vector<16x128xf32> to vector<2x8x128xf32>
    %28 = vector.shape_cast %20 : vector<16x128xf32> to vector<2x8x128xf32>
    %29 = arith.truncf %27 : vector<2x8x128xf32> to vector<2x8x128xbf16>
    %30 = arith.truncf %28 : vector<2x8x128xf32> to vector<2x8x128xbf16>
    %cst_28 = arith.constant dense<0.000000e+00> : vector<2x8x8xf32>
    %31 = tpu.matmul %29, %30, %cst_28 {dimension_numbers = #tpu.dot_dimension_numbers<[2], [2], [1], [1], [0, 0, 0, 1, 1, 1], [0], [0]>} : vector<2x8x128xbf16>, vector<2x8x128xbf16>, vector<2x8x8xf32> -> vector<2x8x8xf32>
    %cst_29 = arith.constant 0.000000e+00 : f32
    %32 = vector.broadcast %cst_29 : f32 to vector<2x1x8xf32>
    %33 = arith.cmpf ogt, %2, %32 : vector<2x1x8xf32>
    %34 = vector.shape_cast %4 : vector<8x8xf32> to vector<1x8x8xf32>
    %cst_30 = arith.constant 0.000000e+00 : f32
    %35 = vector.broadcast %cst_30 : f32 to vector<1x8x8xf32>
    %36 = arith.cmpf ogt, %34, %35 : vector<1x8x8xf32>
    %37 = vector.broadcast %33 : vector<2x1x8xi1> to vector<2x8x8xi1>
    %38 = vector.broadcast %36 : vector<1x8x8xi1> to vector<2x8x8xi1>
    %39 = arith.andi %37, %38 : vector<2x8x8xi1>
    %cst_31 = arith.constant -1.000000e+09 : f32
    %40 = vector.broadcast %cst_31 : f32 to vector<2x8x8xf32>
    %41 = arith.select %39, %31, %40 : vector<2x8x8xi1>, vector<2x8x8xf32>
    %cst_32 = arith.constant dense<0xFF800000> : vector<2x8xf32>
    %42 = vector.multi_reduction <maximumf>, %41, %cst_32 [2] : vector<2x8x8xf32> to vector<2x8xf32>
    %43 = vector.shape_cast %42 : vector<2x8xf32> to vector<2x8x1xf32>
    %44 = vector.broadcast %43 : vector<2x8x1xf32> to vector<2x8x8xf32>
    %45 = arith.subf %41, %44 : vector<2x8x8xf32>
    %46 = math.exp %45 : vector<2x8x8xf32>
    %cst_33 = arith.constant dense<0.000000e+00> : vector<2x8xf32>
    %47 = vector.multi_reduction <add>, %46, %cst_33 [2] : vector<2x8x8xf32> to vector<2x8xf32>
    %48 = vector.shape_cast %47 : vector<2x8xf32> to vector<2x8x1xf32>
    %49 = tpu.reciprocal %48 {approx = true} : vector<2x8x1xf32> -> vector<2x8x1xf32>
    %50 = vector.broadcast %49 : vector<2x8x1xf32> to vector<2x8x8xf32>
    %51 = arith.mulf %46, %50 : vector<2x8x8xf32>
    %52 = vector.shape_cast %26 : vector<16x128xf32> to vector<2x8x128xf32>
    %53 = arith.truncf %51 : vector<2x8x8xf32> to vector<2x8x8xbf16>
    %54 = arith.truncf %52 : vector<2x8x128xf32> to vector<2x8x128xbf16>
    %cst_34 = arith.constant dense<0.000000e+00> : vector<2x8x128xf32>
    %55 = tpu.matmul %53, %54, %cst_34 {dimension_numbers = #tpu.dot_dimension_numbers<[2], [1], [1], [2], [0, 0, 0, 1, 1, 2], [0], [0]>} : vector<2x8x8xbf16>, vector<2x8x128xbf16>, vector<2x8x128xf32> -> vector<2x8x128xf32>
    %56 = vector.shape_cast %55 : vector<2x8x128xf32> to vector<16x128xf32>
    %57 = arith.truncf %56 : vector<16x128xf32> to vector<16x128xbf16>
    %c0_35 = arith.constant 0 : index
    %c0_36 = arith.constant 0 : index
    %58 = vector.load %arg9[%c0_35, %c0_36] : memref<128x128xbf16, #tpu.memory_space<vmem>>, vector<128x128xbf16>
    %cst_37 = arith.constant dense<0.000000e+00> : vector<16x128xf32>
    %59 = tpu.matmul %57, %58, %cst_37 {dimension_numbers = #tpu.dot_dimension_numbers<[1], [0], [0], [1], [0, 0, 1, 1], [], []>} : vector<16x128xbf16>, vector<128x128xbf16>, vector<16x128xf32> -> vector<16x128xf32>
    %c0_38 = arith.constant 0 : index
    %c0_39 = arith.constant 0 : index
    %60 = vector.load %arg13[%c0_38, %c0_39] : memref<1x128xf32, #tpu.memory_space<vmem>>, vector<1x128xf32>
    %61 = vector.broadcast %60 : vector<1x128xf32> to vector<16x128xf32>
    %62 = arith.addf %59, %61 : vector<16x128xf32>
    %c0_40 = arith.constant 0 : index
    %c0_41 = arith.constant 0 : index
    %63 = vector.load %arg14[%c0_40, %c0_41] : memref<1x128xf32, #tpu.memory_space<vmem>>, vector<1x128xf32>
    %c0_42 = arith.constant 0 : index
    %c0_43 = arith.constant 0 : index
    %64 = vector.load %arg15[%c0_42, %c0_43] : memref<1x128xf32, #tpu.memory_space<vmem>>, vector<1x128xf32>
    %65 = arith.addf %5, %62 : vector<16x128xf32>
    %cst_44 = arith.constant dense<0.000000e+00> : vector<16xf32>
    %66 = vector.multi_reduction <add>, %65, %cst_44 [1] : vector<16x128xf32> to vector<16xf32>
    %67 = vector.shape_cast %66 : vector<16xf32> to vector<16x1xf32>
    %cst_45 = arith.constant 3.125000e-02 : f32
    %68 = vector.broadcast %cst_45 : f32 to vector<16x1xf32>
    %69 = arith.mulf %67, %68 : vector<16x1xf32>
    %70 = arith.mulf %65, %65 : vector<16x128xf32>
    %cst_46 = arith.constant dense<0.000000e+00> : vector<16xf32>
    %71 = vector.multi_reduction <add>, %70, %cst_46 [1] : vector<16x128xf32> to vector<16xf32>
    %72 = vector.shape_cast %71 : vector<16xf32> to vector<16x1xf32>
    %cst_47 = arith.constant 3.125000e-02 : f32
    %73 = vector.broadcast %cst_47 : f32 to vector<16x1xf32>
    %74 = arith.mulf %72, %73 : vector<16x1xf32>
    %75 = arith.mulf %69, %69 : vector<16x1xf32>
    %76 = arith.subf %74, %75 : vector<16x1xf32>
    %77 = vector.broadcast %69 : vector<16x1xf32> to vector<16x128xf32>
    %78 = arith.subf %65, %77 : vector<16x128xf32>
    %cst_48 = arith.constant 9.99999974E-6 : f32
    %79 = vector.broadcast %cst_48 : f32 to vector<16x1xf32>
    %80 = arith.addf %76, %79 : vector<16x1xf32>
    %81 = math.rsqrt %80 : vector<16x1xf32>
    %82 = vector.broadcast %81 : vector<16x1xf32> to vector<16x128xf32>
    %83 = arith.mulf %78, %82 : vector<16x128xf32>
    %84 = vector.broadcast %63 : vector<1x128xf32> to vector<16x128xf32>
    %85 = arith.mulf %83, %84 : vector<16x128xf32>
    %86 = vector.broadcast %64 : vector<1x128xf32> to vector<16x128xf32>
    %87 = arith.addf %85, %86 : vector<16x128xf32>
    %88 = arith.truncf %87 : vector<16x128xf32> to vector<16x128xbf16>
    %c0_49 = arith.constant 0 : index
    %c0_50 = arith.constant 0 : index
    %89 = vector.load %arg16[%c0_49, %c0_50] : memref<128x128xbf16, #tpu.memory_space<vmem>>, vector<128x128xbf16>
    %cst_51 = arith.constant dense<0.000000e+00> : vector<16x128xf32>
    %90 = tpu.matmul %88, %89, %cst_51 {dimension_numbers = #tpu.dot_dimension_numbers<[1], [0], [0], [1], [0, 0, 1, 1], [], []>} : vector<16x128xbf16>, vector<128x128xbf16>, vector<16x128xf32> -> vector<16x128xf32>
    %c0_52 = arith.constant 0 : index
    %c0_53 = arith.constant 0 : index
    %91 = vector.load %arg20[%c0_52, %c0_53] : memref<1x128xf32, #tpu.memory_space<vmem>>, vector<1x128xf32>
    %92 = vector.broadcast %91 : vector<1x128xf32> to vector<16x128xf32>
    %93 = arith.addf %90, %92 : vector<16x128xf32>
    %cst_54 = arith.constant 0.176776692 : f32
    %94 = vector.broadcast %cst_54 : f32 to vector<16x128xf32>
    %95 = arith.mulf %93, %94 : vector<16x128xf32>
    %96 = arith.truncf %6 : vector<16x128xf32> to vector<16x128xbf16>
    %c0_55 = arith.constant 0 : index
    %c0_56 = arith.constant 0 : index
    %97 = vector.load %arg17[%c0_55, %c0_56] : memref<128x128xbf16, #tpu.memory_space<vmem>>, vector<128x128xbf16>
    %cst_57 = arith.constant dense<0.000000e+00> : vector<16x128xf32>
    %98 = tpu.matmul %96, %97, %cst_57 {dimension_numbers = #tpu.dot_dimension_numbers<[1], [0], [0], [1], [0, 0, 1, 1], [], []>} : vector<16x128xbf16>, vector<128x128xbf16>, vector<16x128xf32> -> vector<16x128xf32>
    %c0_58 = arith.constant 0 : index
    %c0_59 = arith.constant 0 : index
    %99 = vector.load %arg21[%c0_58, %c0_59] : memref<1x128xf32, #tpu.memory_space<vmem>>, vector<1x128xf32>
    %100 = vector.broadcast %99 : vector<1x128xf32> to vector<16x128xf32>
    %101 = arith.addf %98, %100 : vector<16x128xf32>
    %102 = arith.truncf %6 : vector<16x128xf32> to vector<16x128xbf16>
    %c0_60 = arith.constant 0 : index
    %c0_61 = arith.constant 0 : index
    %103 = vector.load %arg18[%c0_60, %c0_61] : memref<128x128xbf16, #tpu.memory_space<vmem>>, vector<128x128xbf16>
    %cst_62 = arith.constant dense<0.000000e+00> : vector<16x128xf32>
    %104 = tpu.matmul %102, %103, %cst_62 {dimension_numbers = #tpu.dot_dimension_numbers<[1], [0], [0], [1], [0, 0, 1, 1], [], []>} : vector<16x128xbf16>, vector<128x128xbf16>, vector<16x128xf32> -> vector<16x128xf32>
    %c0_63 = arith.constant 0 : index
    %c0_64 = arith.constant 0 : index
    %105 = vector.load %arg22[%c0_63, %c0_64] : memref<1x128xf32, #tpu.memory_space<vmem>>, vector<1x128xf32>
    %106 = vector.broadcast %105 : vector<1x128xf32> to vector<16x128xf32>
    %107 = arith.addf %104, %106 : vector<16x128xf32>
    %108 = vector.shape_cast %95 : vector<16x128xf32> to vector<2x8x128xf32>
    %109 = vector.shape_cast %101 : vector<16x128xf32> to vector<2x8x128xf32>
    %110 = arith.truncf %108 : vector<2x8x128xf32> to vector<2x8x128xbf16>
    %111 = arith.truncf %109 : vector<2x8x128xf32> to vector<2x8x128xbf16>
    %cst_65 = arith.constant dense<0.000000e+00> : vector<2x8x8xf32>
    %112 = tpu.matmul %110, %111, %cst_65 {dimension_numbers = #tpu.dot_dimension_numbers<[2], [2], [1], [1], [0, 0, 0, 1, 1, 1], [0], [0]>} : vector<2x8x128xbf16>, vector<2x8x128xbf16>, vector<2x8x8xf32> -> vector<2x8x8xf32>
    %cst_66 = arith.constant 0.000000e+00 : f32
    %113 = vector.broadcast %cst_66 : f32 to vector<2x1x8xf32>
    %114 = arith.cmpf ogt, %3, %113 : vector<2x1x8xf32>
    %cst_67 = arith.constant -1.000000e+09 : f32
    %115 = vector.shape_cast %114 : vector<2x1x8xi1> to vector<2x1x8xi1>
    %116 = vector.broadcast %115 : vector<2x1x8xi1> to vector<2x8x8xi1>
    %117 = vector.broadcast %cst_67 : f32 to vector<2x8x8xf32>
    %118 = arith.select %116, %112, %117 : vector<2x8x8xi1>, vector<2x8x8xf32>
    %cst_68 = arith.constant dense<0xFF800000> : vector<2x8xf32>
    %119 = vector.multi_reduction <maximumf>, %118, %cst_68 [2] : vector<2x8x8xf32> to vector<2x8xf32>
    %120 = vector.shape_cast %119 : vector<2x8xf32> to vector<2x8x1xf32>
    %121 = vector.broadcast %120 : vector<2x8x1xf32> to vector<2x8x8xf32>
    %122 = arith.subf %118, %121 : vector<2x8x8xf32>
    %123 = math.exp %122 : vector<2x8x8xf32>
    %cst_69 = arith.constant dense<0.000000e+00> : vector<2x8xf32>
    %124 = vector.multi_reduction <add>, %123, %cst_69 [2] : vector<2x8x8xf32> to vector<2x8xf32>
    %125 = vector.shape_cast %124 : vector<2x8xf32> to vector<2x8x1xf32>
    %126 = tpu.reciprocal %125 {approx = true} : vector<2x8x1xf32> -> vector<2x8x1xf32>
    %127 = vector.broadcast %126 : vector<2x8x1xf32> to vector<2x8x8xf32>
    %128 = arith.mulf %123, %127 : vector<2x8x8xf32>
    %129 = vector.shape_cast %107 : vector<16x128xf32> to vector<2x8x128xf32>
    %130 = arith.truncf %128 : vector<2x8x8xf32> to vector<2x8x8xbf16>
    %131 = arith.truncf %129 : vector<2x8x128xf32> to vector<2x8x128xbf16>
    %cst_70 = arith.constant dense<0.000000e+00> : vector<2x8x128xf32>
    %132 = tpu.matmul %130, %131, %cst_70 {dimension_numbers = #tpu.dot_dimension_numbers<[2], [1], [1], [2], [0, 0, 0, 1, 1, 2], [0], [0]>} : vector<2x8x8xbf16>, vector<2x8x128xbf16>, vector<2x8x128xf32> -> vector<2x8x128xf32>
    %133 = vector.shape_cast %132 : vector<2x8x128xf32> to vector<16x128xf32>
    %134 = arith.truncf %133 : vector<16x128xf32> to vector<16x128xbf16>
    %c0_71 = arith.constant 0 : index
    %c0_72 = arith.constant 0 : index
    %135 = vector.load %arg19[%c0_71, %c0_72] : memref<128x128xbf16, #tpu.memory_space<vmem>>, vector<128x128xbf16>
    %cst_73 = arith.constant dense<0.000000e+00> : vector<16x128xf32>
    %136 = tpu.matmul %134, %135, %cst_73 {dimension_numbers = #tpu.dot_dimension_numbers<[1], [0], [0], [1], [0, 0, 1, 1], [], []>} : vector<16x128xbf16>, vector<128x128xbf16>, vector<16x128xf32> -> vector<16x128xf32>
    %c0_74 = arith.constant 0 : index
    %c0_75 = arith.constant 0 : index
    %137 = vector.load %arg23[%c0_74, %c0_75] : memref<1x128xf32, #tpu.memory_space<vmem>>, vector<1x128xf32>
    %138 = vector.broadcast %137 : vector<1x128xf32> to vector<16x128xf32>
    %139 = arith.addf %136, %138 : vector<16x128xf32>
    %c0_76 = arith.constant 0 : index
    %c0_77 = arith.constant 0 : index
    %140 = vector.load %arg24[%c0_76, %c0_77] : memref<1x128xf32, #tpu.memory_space<vmem>>, vector<1x128xf32>
    %c0_78 = arith.constant 0 : index
    %c0_79 = arith.constant 0 : index
    %141 = vector.load %arg25[%c0_78, %c0_79] : memref<1x128xf32, #tpu.memory_space<vmem>>, vector<1x128xf32>
    %142 = arith.addf %87, %139 : vector<16x128xf32>
    %cst_80 = arith.constant dense<0.000000e+00> : vector<16xf32>
    %143 = vector.multi_reduction <add>, %142, %cst_80 [1] : vector<16x128xf32> to vector<16xf32>
    %144 = vector.shape_cast %143 : vector<16xf32> to vector<16x1xf32>
    %cst_81 = arith.constant 3.125000e-02 : f32
    %145 = vector.broadcast %cst_81 : f32 to vector<16x1xf32>
    %146 = arith.mulf %144, %145 : vector<16x1xf32>
    %147 = arith.mulf %142, %142 : vector<16x128xf32>
    %cst_82 = arith.constant dense<0.000000e+00> : vector<16xf32>
    %148 = vector.multi_reduction <add>, %147, %cst_82 [1] : vector<16x128xf32> to vector<16xf32>
    %149 = vector.shape_cast %148 : vector<16xf32> to vector<16x1xf32>
    %cst_83 = arith.constant 3.125000e-02 : f32
    %150 = vector.broadcast %cst_83 : f32 to vector<16x1xf32>
    %151 = arith.mulf %149, %150 : vector<16x1xf32>
    %152 = arith.mulf %146, %146 : vector<16x1xf32>
    %153 = arith.subf %151, %152 : vector<16x1xf32>
    %154 = vector.broadcast %146 : vector<16x1xf32> to vector<16x128xf32>
    %155 = arith.subf %142, %154 : vector<16x128xf32>
    %cst_84 = arith.constant 9.99999974E-6 : f32
    %156 = vector.broadcast %cst_84 : f32 to vector<16x1xf32>
    %157 = arith.addf %153, %156 : vector<16x1xf32>
    %158 = math.rsqrt %157 : vector<16x1xf32>
    %159 = vector.broadcast %158 : vector<16x1xf32> to vector<16x128xf32>
    %160 = arith.mulf %155, %159 : vector<16x128xf32>
    %161 = vector.broadcast %140 : vector<1x128xf32> to vector<16x128xf32>
    %162 = arith.mulf %160, %161 : vector<16x128xf32>
    %163 = vector.broadcast %141 : vector<1x128xf32> to vector<16x128xf32>
    %164 = arith.addf %162, %163 : vector<16x128xf32>
    %165 = arith.truncf %164 : vector<16x128xf32> to vector<16x128xbf16>
    %c0_85 = arith.constant 0 : index
    %c0_86 = arith.constant 0 : index
    %166 = vector.load %arg26[%c0_85, %c0_86] : memref<128x128xbf16, #tpu.memory_space<vmem>>, vector<128x128xbf16>
    %cst_87 = arith.constant dense<0.000000e+00> : vector<16x128xf32>
    %167 = tpu.matmul %165, %166, %cst_87 {dimension_numbers = #tpu.dot_dimension_numbers<[1], [0], [0], [1], [0, 0, 1, 1], [], []>} : vector<16x128xbf16>, vector<128x128xbf16>, vector<16x128xf32> -> vector<16x128xf32>
    %c0_88 = arith.constant 0 : index
    %c0_89 = arith.constant 0 : index
    %168 = vector.load %arg27[%c0_88, %c0_89] : memref<1x128xf32, #tpu.memory_space<vmem>>, vector<1x128xf32>
    %169 = vector.broadcast %168 : vector<1x128xf32> to vector<16x128xf32>
    %170 = arith.addf %167, %169 : vector<16x128xf32>
    %cst_90 = arith.constant 0.000000e+00 : f32
    %171 = vector.broadcast %cst_90 : f32 to vector<16x128xf32>
    %172 = arith.maximumf %170, %171 : vector<16x128xf32>
    %173 = arith.truncf %172 : vector<16x128xf32> to vector<16x128xbf16>
    %c0_91 = arith.constant 0 : index
    %c0_92 = arith.constant 0 : index
    %174 = vector.load %arg28[%c0_91, %c0_92] : memref<128x128xbf16, #tpu.memory_space<vmem>>, vector<128x128xbf16>
    %cst_93 = arith.constant dense<0.000000e+00> : vector<16x128xf32>
    %175 = tpu.matmul %173, %174, %cst_93 {dimension_numbers = #tpu.dot_dimension_numbers<[1], [0], [0], [1], [0, 0, 1, 1], [], []>} : vector<16x128xbf16>, vector<128x128xbf16>, vector<16x128xf32> -> vector<16x128xf32>
    %c0_94 = arith.constant 0 : index
    %c0_95 = arith.constant 0 : index
    %176 = vector.load %arg29[%c0_94, %c0_95] : memref<1x128xf32, #tpu.memory_space<vmem>>, vector<1x128xf32>
    %177 = vector.broadcast %176 : vector<1x128xf32> to vector<16x128xf32>
    %178 = arith.addf %175, %177 : vector<16x128xf32>
    %c0_96 = arith.constant 0 : index
    %c0_97 = arith.constant 0 : index
    %179 = vector.load %arg30[%c0_96, %c0_97] : memref<1x128xf32, #tpu.memory_space<vmem>>, vector<1x128xf32>
    %c0_98 = arith.constant 0 : index
    %c0_99 = arith.constant 0 : index
    %180 = vector.load %arg31[%c0_98, %c0_99] : memref<1x128xf32, #tpu.memory_space<vmem>>, vector<1x128xf32>
    %181 = arith.addf %164, %178 : vector<16x128xf32>
    %cst_100 = arith.constant dense<0.000000e+00> : vector<16xf32>
    %182 = vector.multi_reduction <add>, %181, %cst_100 [1] : vector<16x128xf32> to vector<16xf32>
    %183 = vector.shape_cast %182 : vector<16xf32> to vector<16x1xf32>
    %cst_101 = arith.constant 3.125000e-02 : f32
    %184 = vector.broadcast %cst_101 : f32 to vector<16x1xf32>
    %185 = arith.mulf %183, %184 : vector<16x1xf32>
    %186 = arith.mulf %181, %181 : vector<16x128xf32>
    %cst_102 = arith.constant dense<0.000000e+00> : vector<16xf32>
    %187 = vector.multi_reduction <add>, %186, %cst_102 [1] : vector<16x128xf32> to vector<16xf32>
    %188 = vector.shape_cast %187 : vector<16xf32> to vector<16x1xf32>
    %cst_103 = arith.constant 3.125000e-02 : f32
    %189 = vector.broadcast %cst_103 : f32 to vector<16x1xf32>
    %190 = arith.mulf %188, %189 : vector<16x1xf32>
    %191 = arith.mulf %185, %185 : vector<16x1xf32>
    %192 = arith.subf %190, %191 : vector<16x1xf32>
    %193 = vector.broadcast %185 : vector<16x1xf32> to vector<16x128xf32>
    %194 = arith.subf %181, %193 : vector<16x128xf32>
    %cst_104 = arith.constant 9.99999974E-6 : f32
    %195 = vector.broadcast %cst_104 : f32 to vector<16x1xf32>
    %196 = arith.addf %192, %195 : vector<16x1xf32>
    %197 = math.rsqrt %196 : vector<16x1xf32>
    %198 = vector.broadcast %197 : vector<16x1xf32> to vector<16x128xf32>
    %199 = arith.mulf %194, %198 : vector<16x128xf32>
    %200 = vector.broadcast %179 : vector<1x128xf32> to vector<16x128xf32>
    %201 = arith.mulf %199, %200 : vector<16x128xf32>
    %202 = vector.broadcast %180 : vector<1x128xf32> to vector<16x128xf32>
    %203 = arith.addf %201, %202 : vector<16x128xf32>
    %204 = vector.shape_cast %203 : vector<16x128xf32> to vector<2x8x128xf32>
    %c0_105 = arith.constant 0 : index
    %c0_106 = arith.constant 0 : index
    %c0_107 = arith.constant 0 : index
    %205 = vector.load %arg32[%c0_105, %c0_106, %c0_107] : memref<2x8x128xf32, #tpu.memory_space<vmem>>, vector<2x8x128xf32>
    tpu.vector_store %arg32[%c0_105, %c0_106, %c0_107], %204 {strides = array<i32>} : memref<2x8x128xf32, #tpu.memory_space<vmem>>, vector<2x8x128xf32>,
    return
  }
  func.func @transform_0(%arg0: i32) -> (i32, i32, i32) {
    %c0_i32 = arith.constant 0 : i32
    %c0_i32_0 = arith.constant 0 : i32
    %c0_i32_1 = arith.constant 0 : i32
    return %arg0, %c0_i32, %c0_i32_0 : i32, i32, i32
  }
  func.func @transform_1(%arg0: i32) -> (i32, i32, i32) {
    %c0_i32 = arith.constant 0 : i32
    %c0_i32_0 = arith.constant 0 : i32
    %c0_i32_1 = arith.constant 0 : i32
    return %arg0, %c0_i32, %c0_i32_0 : i32, i32, i32
  }
  func.func @transform_2(%arg0: i32) -> (i32, i32, i32) {
    %c0_i32 = arith.constant 0 : i32
    %c0_i32_0 = arith.constant 0 : i32
    %c0_i32_1 = arith.constant 0 : i32
    return %arg0, %c0_i32, %c0_i32_0 : i32, i32, i32
  }
  func.func @transform_3(%arg0: i32) -> (i32, i32, i32) {
    %c0_i32 = arith.constant 0 : i32
    %c0_i32_0 = arith.constant 0 : i32
    %c0_i32_1 = arith.constant 0 : i32
    return %arg0, %c0_i32, %c0_i32_0 : i32, i32, i32
  }
  func.func @transform_4(%arg0: i32) -> (i32, i32) {
    %c0_i32 = arith.constant 0 : i32
    %c0_i32_0 = arith.constant 0 : i32
    %c0_i32_1 = arith.constant 0 : i32
    return %c0_i32, %c0_i32_0 : i32, i32
  }
  func.func @transform_5(%arg0: i32) -> (i32, i32) {
    %c0_i32 = arith.constant 0 : i32
    %c0_i32_0 = arith.constant 0 : i32
    %c0_i32_1 = arith.constant 0 : i32
    return %c0_i32, %c0_i32_0 : i32, i32
  }
  func.func @transform_6(%arg0: i32) -> (i32, i32) {
    %c0_i32 = arith.constant 0 : i32
    %c0_i32_0 = arith.constant 0 : i32
    %c0_i32_1 = arith.constant 0 : i32
    return %c0_i32, %c0_i32_0 : i32, i32
  }
  func.func @transform_7(%arg0: i32) -> (i32, i32) {
    %c0_i32 = arith.constant 0 : i32
    %c0_i32_0 = arith.constant 0 : i32
    %c0_i32_1 = arith.constant 0 : i32
    return %c0_i32, %c0_i32_0 : i32, i32
  }
  func.func @transform_8(%arg0: i32) -> (i32, i32) {
    %c0_i32 = arith.constant 0 : i32
    %c0_i32_0 = arith.constant 0 : i32
    %c0_i32_1 = arith.constant 0 : i32
    return %c0_i32, %c0_i32_0 : i32, i32
  }
  func.func @transform_9(%arg0: i32) -> (i32, i32) {
    %c0_i32 = arith.constant 0 : i32
    %c0_i32_0 = arith.constant 0 : i32
    %c0_i32_1 = arith.constant 0 : i32
    return %c0_i32, %c0_i32_0 : i32, i32
  }
  func.func @transform_10(%arg0: i32) -> (i32, i32) {
    %c0_i32 = arith.constant 0 : i32
    %c0_i32_0 = arith.constant 0 : i32
    %c0_i32_1 = arith.constant 0 : i32
    return %c0_i32, %c0_i32_0 : i32, i32
  }
  func.func @transform_11(%arg0: i32) -> (i32, i32) {
    %c0_i32 = arith.constant 0 : i32
    %c0_i32_0 = arith.constant 0 : i32
    %c0_i32_1 = arith.constant 0 : i32
    return %c0_i32, %c0_i32_0 : i32, i32
  }
  func.func @transform_12(%arg0: i32) -> (i32, i32) {
    %c0_i32 = arith.constant 0 : i32
    %c0_i32_0 = arith.constant 0 : i32
    %c0_i32_1 = arith.constant 0 : i32
    return %c0_i32, %c0_i32_0 : i32, i32
  }
  func.func @transform_13(%arg0: i32) -> (i32, i32) {
    %c0_i32 = arith.constant 0 : i32
    %c0_i32_0 = arith.constant 0 : i32
    %c0_i32_1 = arith.constant 0 : i32
    return %c0_i32, %c0_i32_0 : i32, i32
  }
  func.func @transform_14(%arg0: i32) -> (i32, i32) {
    %c0_i32 = arith.constant 0 : i32
    %c0_i32_0 = arith.constant 0 : i32
    %c0_i32_1 = arith.constant 0 : i32
    return %c0_i32, %c0_i32_0 : i32, i32
  }
  func.func @transform_15(%arg0: i32) -> (i32, i32) {
    %c0_i32 = arith.constant 0 : i32
    %c0_i32_0 = arith.constant 0 : i32
    %c0_i32_1 = arith.constant 0 : i32
    return %c0_i32, %c0_i32_0 : i32, i32
  }
  func.func @transform_16(%arg0: i32) -> (i32, i32) {
    %c0_i32 = arith.constant 0 : i32
    %c0_i32_0 = arith.constant 0 : i32
    %c0_i32_1 = arith.constant 0 : i32
    return %c0_i32, %c0_i32_0 : i32, i32
  }
  func.func @transform_17(%arg0: i32) -> (i32, i32) {
    %c0_i32 = arith.constant 0 : i32
    %c0_i32_0 = arith.constant 0 : i32
    %c0_i32_1 = arith.constant 0 : i32
    return %c0_i32, %c0_i32_0 : i32, i32
  }
  func.func @transform_18(%arg0: i32) -> (i32, i32) {
    %c0_i32 = arith.constant 0 : i32
    %c0_i32_0 = arith.constant 0 : i32
    %c0_i32_1 = arith.constant 0 : i32
    return %c0_i32, %c0_i32_0 : i32, i32
  }
  func.func @transform_19(%arg0: i32) -> (i32, i32) {
    %c0_i32 = arith.constant 0 : i32
    %c0_i32_0 = arith.constant 0 : i32
    %c0_i32_1 = arith.constant 0 : i32
    return %c0_i32, %c0_i32_0 : i32, i32
  }
  func.func @transform_20(%arg0: i32) -> (i32, i32) {
    %c0_i32 = arith.constant 0 : i32
    %c0_i32_0 = arith.constant 0 : i32
    %c0_i32_1 = arith.constant 0 : i32
    return %c0_i32, %c0_i32_0 : i32, i32
  }
  func.func @transform_21(%arg0: i32) -> (i32, i32) {
    %c0_i32 = arith.constant 0 : i32
    %c0_i32_0 = arith.constant 0 : i32
    %c0_i32_1 = arith.constant 0 : i32
    return %c0_i32, %c0_i32_0 : i32, i32
  }
  func.func @transform_22(%arg0: i32) -> (i32, i32) {
    %c0_i32 = arith.constant 0 : i32
    %c0_i32_0 = arith.constant 0 : i32
    %c0_i32_1 = arith.constant 0 : i32
    return %c0_i32, %c0_i32_0 : i32, i32
  }
  func.func @transform_23(%arg0: i32) -> (i32, i32) {
    %c0_i32 = arith.constant 0 : i32
    %c0_i32_0 = arith.constant 0 : i32
    %c0_i32_1 = arith.constant 0 : i32
    return %c0_i32, %c0_i32_0 : i32, i32
  }
  func.func @transform_24(%arg0: i32) -> (i32, i32) {
    %c0_i32 = arith.constant 0 : i32
    %c0_i32_0 = arith.constant 0 : i32
    %c0_i32_1 = arith.constant 0 : i32
    return %c0_i32, %c0_i32_0 : i32, i32
  }
  func.func @transform_25(%arg0: i32) -> (i32, i32) {
    %c0_i32 = arith.constant 0 : i32
    %c0_i32_0 = arith.constant 0 : i32
    %c0_i32_1 = arith.constant 0 : i32
    return %c0_i32, %c0_i32_0 : i32, i32
  }
  func.func @transform_26(%arg0: i32) -> (i32, i32) {
    %c0_i32 = arith.constant 0 : i32
    %c0_i32_0 = arith.constant 0 : i32
    %c0_i32_1 = arith.constant 0 : i32
    return %c0_i32, %c0_i32_0 : i32, i32
  }
  func.func @transform_27(%arg0: i32) -> (i32, i32) {
    %c0_i32 = arith.constant 0 : i32
    %c0_i32_0 = arith.constant 0 : i32
    %c0_i32_1 = arith.constant 0 : i32
    return %c0_i32, %c0_i32_0 : i32, i32
  }
  func.func @transform_28(%arg0: i32) -> (i32, i32) {
    %c0_i32 = arith.constant 0 : i32
    %c0_i32_0 = arith.constant 0 : i32
    %c0_i32_1 = arith.constant 0 : i32
    return %c0_i32, %c0_i32_0 : i32, i32
  }
  func.func @transform_29(%arg0: i32) -> (i32, i32) {
    %c0_i32 = arith.constant 0 : i32
    %c0_i32_0 = arith.constant 0 : i32
    %c0_i32_1 = arith.constant 0 : i32
    return %c0_i32, %c0_i32_0 : i32, i32
  }
  func.func @transform_30(%arg0: i32) -> (i32, i32) {
    %c0_i32 = arith.constant 0 : i32
    %c0_i32_0 = arith.constant 0 : i32
    %c0_i32_1 = arith.constant 0 : i32
    return %c0_i32, %c0_i32_0 : i32, i32
  }
  func.func @transform_31(%arg0: i32) -> (i32, i32, i32) {
    %c0_i32 = arith.constant 0 : i32
    %c0_i32_0 = arith.constant 0 : i32
    %c0_i32_1 = arith.constant 0 : i32
    return %arg0, %c0_i32, %c0_i32_0 : i32, i32, i32
  }
}

</mosaic_0001>

<llo_original>
// kernel: tpu_custom_call.1
$region0: #{tpu_custom_call.1}
  #allocation0 [shape = 'u32[]', space=smem, size = 0x4, offset = 0x4, fixed_abs, tag = 'smem constant byte address 0x4 - core index']
  #allocation1 [shape = 'u32[144,128]{1,0:T(1,128)}', space=vmem, size = 0x12000, scoped, tag = 'internal scratch']
  %s0 = inlined_call_operand.smem [shape: u32[32], index: -1, kind: input, shape index: {}]
  %s1 = sld [smem:[%s0]]
  %s2 = scalar_lea.smem %s0, 1
  %s3 = sld [smem:[%s2]]
  %s4 = scalar_lea.smem %s0, 2
  %s5 = sld [smem:[%s4]]
  %s6 = scalar_lea.smem %s0, 3
  %s7 = sld [smem:[%s6]]
  %s8 = scalar_lea.smem %s0, 4
  %s9 = sld [smem:[%s8]]
  %s10 = scalar_lea.smem %s0, 5
  %s11 = sld [smem:[%s10]]
  %s12 = scalar_lea.smem %s0, 6
  %s13 = sld [smem:[%s12]]
  %s14 = scalar_lea.smem %s0, 7
  %s15 = sld [smem:[%s14]]
  %s16 = scalar_lea.smem %s0, 8
  %s17 = sld [smem:[%s16]]
  %s18 = scalar_lea.smem %s0, 9
  %s19 = sld [smem:[%s18]]
  %s20 = scalar_lea.smem %s0, 10
  %s21 = sld [smem:[%s20]]
  %s22 = scalar_lea.smem %s0, 11
  %s23 = sld [smem:[%s22]]
  %s24 = scalar_lea.smem %s0, 12
  %s25 = sld [smem:[%s24]]
  %s26 = scalar_lea.smem %s0, 13
  %s27 = sld [smem:[%s26]]
  %s28 = scalar_lea.smem %s0, 14
  %s29 = sld [smem:[%s28]]
  %s30 = scalar_lea.smem %s0, 15
  %s31 = sld [smem:[%s30]]
  %s32 = scalar_lea.smem %s0, 16
  %s33 = sld [smem:[%s32]]
  %s34 = scalar_lea.smem %s0, 17
  %s35 = sld [smem:[%s34]]
  %s36 = scalar_lea.smem %s0, 18
  %s37 = sld [smem:[%s36]]
  %s38 = scalar_lea.smem %s0, 19
  %s39 = sld [smem:[%s38]]
  %s40 = scalar_lea.smem %s0, 20
  %s41 = sld [smem:[%s40]]
  %s42 = scalar_lea.smem %s0, 21
  %s43 = sld [smem:[%s42]]
  %s44 = scalar_lea.smem %s0, 22
  %s45 = sld [smem:[%s44]]
  %s46 = scalar_lea.smem %s0, 23
  %s47 = sld [smem:[%s46]]
  %s48 = scalar_lea.smem %s0, 24
  %s49 = sld [smem:[%s48]]
  %s50 = scalar_lea.smem %s0, 25
  %s51 = sld [smem:[%s50]]
  %s52 = scalar_lea.smem %s0, 26
  %s53 = sld [smem:[%s52]]
  %s54 = scalar_lea.smem %s0, 27
  %s55 = sld [smem:[%s54]]
  %s56 = scalar_lea.smem %s0, 28
  %s57 = sld [smem:[%s56]]
  %s58 = scalar_lea.smem %s0, 29
  %s59 = sld [smem:[%s58]]
  %s60 = scalar_lea.smem %s0, 30
  %s61 = sld [smem:[%s60]]
  %s62 = scalar_lea.smem %s0, 31
  %s63 = sld [smem:[%s62]]
  %s64 = sld [smem:[#allocation0]]
  $region258: #{tpu_custom_call.1} parent=0
    _
  %s66 = ssub.s32 1, %s64
  %s67 = scalar_select 0, %s66, %s64
  $region1: #{tpu_custom_call.1} parent=0
    #allocation2 [shape = 'u8[8192]{0}', space=vmem, size = 0x2000, scoped, tag = 'input window, operand 0, single buffered']
    #allocation3 [shape = 's32[1]{0}', space=sflag, size = 0x4, scoped, tag = 'scoped memory for tpu_custom_call.1']
    #allocation4 [shape = 's32[1]{0}', space=sflag, size = 0x4, scoped, tag = 'scoped memory for tpu_custom_call.1']
    #allocation5 [shape = 'u8[1024]{0}', space=vmem, size = 0x400, scoped, tag = 'input window, operand 1, single buffered']
    #allocation6 [shape = 's32[1]{0}', space=sflag, size = 0x4, scoped, tag = 'scoped memory for tpu_custom_call.1']
    #allocation7 [shape = 'u8[8192]{0}', space=vmem, size = 0x2000, scoped, tag = 'input window, operand 2, single buffered']
    #allocation8 [shape = 'u8[1024]{0}', space=vmem, size = 0x400, scoped, tag = 'input window, operand 3, single buffered']
    #allocation9 [shape = 's32[1]{0}', space=sflag, size = 0x4, scoped, tag = 'scoped memory for tpu_custom_call.1']
    #allocation10 [shape = 'u8[4096]{0}', space=vmem, size = 0x1000, scoped, tag = 'input window, operand 4, single buffered']
    #allocation11 [shape = 'u8[32768]{0}', space=vmem, size = 0x8000, scoped, tag = 'input window, operand 5, single buffered']
    #allocation12 [shape = 's32[1]{0}', space=sflag, size = 0x4, scoped, tag = 'scoped memory for tpu_custom_call.1']
    #allocation13 [shape = 'u8[32768]{0}', space=vmem, size = 0x8000, scoped, tag = 'input window, operand 6, single buffered']
    #allocation14 [shape = 'u8[32768]{0}', space=vmem, size = 0x8000, scoped, tag = 'input window, operand 7, single buffered']
    #allocation15 [shape = 's32[1]{0}', space=sflag, size = 0x4, scoped, tag = 'scoped memory for tpu_custom_call.1']
    #allocation16 [shape = 'u8[32768]{0}', space=vmem, size = 0x8000, scoped, tag = 'input window, operand 8, single buffered']
    #allocation17 [shape = 'u8[512]{0}', space=vmem, size = 0x400, scoped, tag = 'input window, operand 9, single buffered']
    #allocation18 [shape = 's32[1]{0}', space=sflag, size = 0x4, scoped, tag = 'scoped memory for tpu_custom_call.1']
    #allocation19 [shape = 'u8[512]{0}', space=vmem, size = 0x400, scoped, tag = 'input window, operand 10, single buffered']
    #allocation20 [shape = 'u8[512]{0}', space=vmem, size = 0x400, scoped, tag = 'input window, operand 11, single buffered']
    #allocation21 [shape = 's32[1]{0}', space=sflag, size = 0x4, scoped, tag = 'scoped memory for tpu_custom_call.1']
    #allocation22 [shape = 'u8[512]{0}', space=vmem, size = 0x400, scoped, tag = 'input window, operand 12, single buffered']
    #allocation23 [shape = 'u8[512]{0}', space=vmem, size = 0x400, scoped, tag = 'input window, operand 13, single buffered']
    #allocation24 [shape = 's32[1]{0}', space=sflag, size = 0x4, scoped, tag = 'scoped memory for tpu_custom_call.1']
    #allocation25 [shape = 'u8[512]{0}', space=vmem, size = 0x400, scoped, tag = 'input window, operand 14, single buffered']
    #allocation26 [shape = 'u8[32768]{0}', space=vmem, size = 0x8000, scoped, tag = 'input window, operand 15, single buffered']
    #allocation27 [shape = 's32[1]{0}', space=sflag, size = 0x4, scoped, tag = 'scoped memory for tpu_custom_call.1']
    #allocation28 [shape = 'u8[32768]{0}', space=vmem, size = 0x8000, scoped, tag = 'input window, operand 16, single buffered']
    #allocation29 [shape = 'u8[32768]{0}', space=vmem, size = 0x8000, scoped, tag = 'input window, operand 17, single buffered']
    #allocation30 [shape = 's32[1]{0}', space=sflag, size = 0x4, scoped, tag = 'scoped memory for tpu_custom_call.1']
    #allocation31 [shape = 'u8[32768]{0}', space=vmem, size = 0x8000, scoped, tag = 'input window, operand 18, single buffered']
    #allocation32 [shape = 'u8[512]{0}', space=vmem, size = 0x400, scoped, tag = 'input window, operand 19, single buffered']
    #allocation33 [shape = 's32[1]{0}', space=sflag, size = 0x4, scoped, tag = 'scoped memory for tpu_custom_call.1']
    #allocation34 [shape = 'u8[512]{0}', space=vmem, size = 0x400, scoped, tag = 'input window, operand 20, single buffered']
    #allocation35 [shape = 'u8[512]{0}', space=vmem, size = 0x400, scoped, tag = 'input window, operand 21, single buffered']
    #allocation36 [shape = 's32[1]{0}', space=sflag, size = 0x4, scoped, tag = 'scoped memory for tpu_custom_call.1']
    #allocation37 [shape = 'u8[512]{0}', space=vmem, size = 0x400, scoped, tag = 'input window, operand 22, single buffered']
    #allocation38 [shape = 'u8[512]{0}', space=vmem, size = 0x400, scoped, tag = 'input window, operand 23, single buffered']
    #allocation39 [shape = 's32[1]{0}', space=sflag, size = 0x4, scoped, tag = 'scoped memory for tpu_custom_call.1']
    #allocation40 [shape = 'u8[512]{0}', space=vmem, size = 0x400, scoped, tag = 'input window, operand 24, single buffered']
    #allocation41 [shape = 'u8[32768]{0}', space=vmem, size = 0x8000, scoped, tag = 'input window, operand 25, single buffered']
    #allocation42 [shape = 's32[1]{0}', space=sflag, size = 0x4, scoped, tag = 'scoped memory for tpu_custom_call.1']
    #allocation43 [shape = 'u8[512]{0}', space=vmem, size = 0x400, scoped, tag = 'input window, operand 26, single buffered']
    #allocation44 [shape = 'u8[32768]{0}', space=vmem, size = 0x8000, scoped, tag = 'input window, operand 27, single buffered']
    #allocation45 [shape = 's32[1]{0}', space=sflag, size = 0x4, scoped, tag = 'scoped memory for tpu_custom_call.1']
    #allocation46 [shape = 'u8[512]{0}', space=vmem, size = 0x400, scoped, tag = 'input window, operand 28, single buffered']
    #allocation47 [shape = 'u8[512]{0}', space=vmem, size = 0x400, scoped, tag = 'input window, operand 29, single buffered']
    #allocation48 [shape = 's32[1]{0}', space=sflag, size = 0x4, scoped, tag = 'scoped memory for tpu_custom_call.1']
    #allocation49 [shape = 'u8[512]{0}', space=vmem, size = 0x400, scoped, tag = 'input window, operand 30, single buffered']
    #allocation50 [shape = 'u8[8192]{0}', space=vmem, size = 0x2000, scoped, tag = 'output window, operand 0, single buffered']
    %68 = vsyncpa [#allocation3], 0
    %69 = vsyncpa [#allocation6], 0
    %70 = vsyncpa [#allocation9], 0
    %71 = vsyncpa [#allocation12], 0
    %72 = vsyncpa [#allocation15], 0
    %73 = vsyncpa [#allocation18], 0
    %74 = vsyncpa [#allocation21], 0
    %75 = vsyncpa [#allocation24], 0
    %76 = vsyncpa [#allocation27], 0
    %77 = vsyncpa [#allocation30], 0
    %78 = vsyncpa [#allocation33], 0
    %79 = vsyncpa [#allocation36], 0
    %80 = vsyncpa [#allocation39], 0
    %81 = vsyncpa [#allocation42], 0
    %82 = vsyncpa [#allocation45], 0
    %83 = vsyncpa [#allocation48], 0
    %84 = vsyncpa [#allocation4], 0
    // Predicated region
    $region2: #{tpu_custom_call.1} parent=1 // pred_check
      _
    $region3: #{tpu_custom_call.1} parent=1 // pred_check_branch
      %86 = sbr.rel (0) target = $region5
    $region4: #{tpu_custom_call.1} parent=1 // pred_region
      %s88 = ssub.s32 256, 256
      %89 = vsyncadd [#allocation3], %s88
      %s90 = sshll.u32 [#allocation2], 4
      %s91 = int_to_ptr.vmem [resolvable:$true] %s90
      %96 = dma.hbm_to_vmem [thread:$0]  %s1, 256, %s91, [#allocation3], 128, 128, 8
    $region5: #{tpu_custom_call.1} parent=1 // pred_fallthru
      _
    // Predicated region
    $region6: #{tpu_custom_call.1} parent=1 // pred_check
      _
    $region7: #{tpu_custom_call.1} parent=1 // pred_check_branch
      %98 = sbr.rel (0) target = $region9
    $region8: #{tpu_custom_call.1} parent=1 // pred_region
      %s100 = ssub.s32 32, 32
      %101 = vsyncadd [#allocation6], %s100
      %s102 = sshll.u32 [#allocation5], 4
      %s103 = int_to_ptr.vmem [resolvable:$true] %s102
      %108 = dma.hbm_to_vmem [thread:$0]  %s3, 32, %s103, [#allocation6], 16, 16, 1
    $region9: #{tpu_custom_call.1} parent=1 // pred_fallthru
      _
    // Predicated region
    $region10: #{tpu_custom_call.1} parent=1 // pred_check
      _
    $region11: #{tpu_custom_call.1} parent=1 // pred_check_branch
      %110 = sbr.rel (0) target = $region13
    $region12: #{tpu_custom_call.1} parent=1 // pred_region
      %s112 = ssub.s32 256, 256
      %113 = vsyncadd [#allocation6], %s112
      %s114 = sshll.u32 [#allocation7], 4
      %s115 = int_to_ptr.vmem [resolvable:$true] %s114
      %120 = dma.hbm_to_vmem [thread:$0]  %s5, 256, %s115, [#allocation6], 128, 128, 8
    $region13: #{tpu_custom_call.1} parent=1 // pred_fallthru
      _
    // Predicated region
    $region14: #{tpu_custom_call.1} parent=1 // pred_check
      _
    $region15: #{tpu_custom_call.1} parent=1 // pred_check_branch
      %122 = sbr.rel (0) target = $region17
    $region16: #{tpu_custom_call.1} parent=1 // pred_region
      %s124 = ssub.s32 32, 32
      %125 = vsyncadd [#allocation9], %s124
      %s126 = sshll.u32 [#allocation8], 4
      %s127 = int_to_ptr.vmem [resolvable:$true] %s126
      %132 = dma.hbm_to_vmem [thread:$0]  %s7, 32, %s127, [#allocation9], 16, 16, 1
    $region17: #{tpu_custom_call.1} parent=1 // pred_fallthru
      _
    // Predicated region
    $region18: #{tpu_custom_call.1} parent=1 // pred_check
      _
    $region19: #{tpu_custom_call.1} parent=1 // pred_check_branch
      %134 = sbr.rel (0) target = $region21
    $region20: #{tpu_custom_call.1} parent=1 // pred_region
      %s136 = ssub.s32 128, 128
      %137 = vsyncadd [#allocation9], %s136
      %s139 = sshll.u32 [#allocation10], 4
      %s140 = int_to_ptr.vmem [resolvable:$true] %s139
      %142 = dma.hbm_to_vmem [thread:$0]  %s9, 128, %s140, [#allocation9]
    $region21: #{tpu_custom_call.1} parent=1 // pred_fallthru
      _
    // Predicated region
    $region22: #{tpu_custom_call.1} parent=1 // pred_check
      _
    $region23: #{tpu_custom_call.1} parent=1 // pred_check_branch
      %144 = sbr.rel (0) target = $region25
    $region24: #{tpu_custom_call.1} parent=1 // pred_region
      %s146 = ssub.s32 1024, 1024
      %147 = vsyncadd [#allocation12], %s146
      %s148 = sshll.u32 [#allocation11], 4
      %s149 = int_to_ptr.vmem [resolvable:$true] %s148
      %154 = dma.hbm_to_vmem [thread:$0]  %s11, 1024, %s149, [#allocation12], 64, 64, 4
    $region25: #{tpu_custom_call.1} parent=1 // pred_fallthru
      _
    // Predicated region
    $region26: #{tpu_custom_call.1} parent=1 // pred_check
      _
    $region27: #{tpu_custom_call.1} parent=1 // pred_check_branch
      %156 = sbr.rel (0) target = $region29
    $region28: #{tpu_custom_call.1} parent=1 // pred_region
      %s158 = ssub.s32 1024, 1024
      %159 = vsyncadd [#allocation12], %s158
      %s160 = sshll.u32 [#allocation13], 4
      %s161 = int_to_ptr.vmem [resolvable:$true] %s160
      %166 = dma.hbm_to_vmem [thread:$0]  %s13, 1024, %s161, [#allocation12], 64, 64, 4
    $region29: #{tpu_custom_call.1} parent=1 // pred_fallthru
      _
    // Predicated region
    $region30: #{tpu_custom_call.1} parent=1 // pred_check
      _
    $region31: #{tpu_custom_call.1} parent=1 // pred_check_branch
      %168 = sbr.rel (0) target = $region33
    $region32: #{tpu_custom_call.1} parent=1 // pred_region
      %s170 = ssub.s32 1024, 1024
      %171 = vsyncadd [#allocation15], %s170
      %s172 = sshll.u32 [#allocation14], 4
      %s173 = int_to_ptr.vmem [resolvable:$true] %s172
      %178 = dma.hbm_to_vmem [thread:$0]  %s15, 1024, %s173, [#allocation15], 64, 64, 4
    $region33: #{tpu_custom_call.1} parent=1 // pred_fallthru
      _
    // Predicated region
    $region34: #{tpu_custom_call.1} parent=1 // pred_check
      _
    $region35: #{tpu_custom_call.1} parent=1 // pred_check_branch
      %180 = sbr.rel (0) target = $region37
    $region36: #{tpu_custom_call.1} parent=1 // pred_region
      %s182 = ssub.s32 1024, 1024
      %183 = vsyncadd [#allocation15], %s182
      %s184 = sshll.u32 [#allocation16], 4
      %s185 = int_to_ptr.vmem [resolvable:$true] %s184
      %190 = dma.hbm_to_vmem [thread:$0]  %s17, 1024, %s185, [#allocation15], 64, 64, 4
    $region37: #{tpu_custom_call.1} parent=1 // pred_fallthru
      _
    // Predicated region
    $region38: #{tpu_custom_call.1} parent=1 // pred_check
      _
    $region39: #{tpu_custom_call.1} parent=1 // pred_check_branch
      %192 = sbr.rel (0) target = $region41
    $region40: #{tpu_custom_call.1} parent=1 // pred_region
      %s194 = ssub.s32 16, 16
      %195 = vsyncadd [#allocation18], %s194
      %s197 = sshll.u32 [#allocation17], 4
      %s198 = int_to_ptr.vmem [resolvable:$true] %s197
      %200 = dma.hbm_to_vmem [thread:$0]  %s19, 16, %s198, [#allocation18]
    $region41: #{tpu_custom_call.1} parent=1 // pred_fallthru
      _
    // Predicated region
    $region42: #{tpu_custom_call.1} parent=1 // pred_check
      _
    $region43: #{tpu_custom_call.1} parent=1 // pred_check_branch
      %202 = sbr.rel (0) target = $region45
    $region44: #{tpu_custom_call.1} parent=1 // pred_region
      %s204 = ssub.s32 16, 16
      %205 = vsyncadd [#allocation18], %s204
      %s207 = sshll.u32 [#allocation19], 4
      %s208 = int_to_ptr.vmem [resolvable:$true] %s207
      %210 = dma.hbm_to_vmem [thread:$0]  %s21, 16, %s208, [#allocation18]
    $region45: #{tpu_custom_call.1} parent=1 // pred_fallthru
      _
    // Predicated region
    $region46: #{tpu_custom_call.1} parent=1 // pred_check
      _
    $region47: #{tpu_custom_call.1} parent=1 // pred_check_branch
      %212 = sbr.rel (0) target = $region49
    $region48: #{tpu_custom_call.1} parent=1 // pred_region
      %s214 = ssub.s32 16, 16
      %215 = vsyncadd [#allocation21], %s214
      %s217 = sshll.u32 [#allocation20], 4
      %s218 = int_to_ptr.vmem [resolvable:$true] %s217
      %220 = dma.hbm_to_vmem [thread:$0]  %s23, 16, %s218, [#allocation21]
    $region49: #{tpu_custom_call.1} parent=1 // pred_fallthru
      _
    // Predicated region
    $region50: #{tpu_custom_call.1} parent=1 // pred_check
      _
    $region51: #{tpu_custom_call.1} parent=1 // pred_check_branch
      %222 = sbr.rel (0) target = $region53
    $region52: #{tpu_custom_call.1} parent=1 // pred_region
      %s224 = ssub.s32 16, 16
      %225 = vsyncadd [#allocation21], %s224
      %s227 = sshll.u32 [#allocation22], 4
      %s228 = int_to_ptr.vmem [resolvable:$true] %s227
      %230 = dma.hbm_to_vmem [thread:$0]  %s25, 16, %s228, [#allocation21]
    $region53: #{tpu_custom_call.1} parent=1 // pred_fallthru
      _
    // Predicated region
    $region54: #{tpu_custom_call.1} parent=1 // pred_check
      _
    $region55: #{tpu_custom_call.1} parent=1 // pred_check_branch
      %232 = sbr.rel (0) target = $region57
    $region56: #{tpu_custom_call.1} parent=1 // pred_region
      %s234 = ssub.s32 16, 16
      %235 = vsyncadd [#allocation24], %s234
      %s237 = sshll.u32 [#allocation23], 4
      %s238 = int_to_ptr.vmem [resolvable:$true] %s237
      %240 = dma.hbm_to_vmem [thread:$0]  %s27, 16, %s238, [#allocation24]
    $region57: #{tpu_custom_call.1} parent=1 // pred_fallthru
      _
    // Predicated region
    $region58: #{tpu_custom_call.1} parent=1 // pred_check
      _
    $region59: #{tpu_custom_call.1} parent=1 // pred_check_branch
      %242 = sbr.rel (0) target = $region61
    $region60: #{tpu_custom_call.1} parent=1 // pred_region
      %s244 = ssub.s32 16, 16
      %245 = vsyncadd [#allocation24], %s244
      %s247 = sshll.u32 [#allocation25], 4
      %s248 = int_to_ptr.vmem [resolvable:$true] %s247
      %250 = dma.hbm_to_vmem [thread:$0]  %s29, 16, %s248, [#allocation24]
    $region61: #{tpu_custom_call.1} parent=1 // pred_fallthru
      _
    // Predicated region
    $region62: #{tpu_custom_call.1} parent=1 // pred_check
      _
    $region63: #{tpu_custom_call.1} parent=1 // pred_check_branch
      %252 = sbr.rel (0) target = $region65
    $region64: #{tpu_custom_call.1} parent=1 // pred_region
      %s254 = ssub.s32 1024, 1024
      %255 = vsyncadd [#allocation27], %s254
      %s256 = sshll.u32 [#allocation26], 4
      %s257 = int_to_ptr.vmem [resolvable:$true] %s256
      %262 = dma.hbm_to_vmem [thread:$0]  %s31, 1024, %s257, [#allocation27], 64, 64, 4
    $region65: #{tpu_custom_call.1} parent=1 // pred_fallthru
      _
    // Predicated region
    $region66: #{tpu_custom_call.1} parent=1 // pred_check
      _
    $region67: #{tpu_custom_call.1} parent=1 // pred_check_branch
      %264 = sbr.rel (0) target = $region69
    $region68: #{tpu_custom_call.1} parent=1 // pred_region
      %s266 = ssub.s32 1024, 1024
      %267 = vsyncadd [#allocation27], %s266
      %s268 = sshll.u32 [#allocation28], 4
      %s269 = int_to_ptr.vmem [resolvable:$true] %s268
      %274 = dma.hbm_to_vmem [thread:$0]  %s33, 1024, %s269, [#allocation27], 64, 64, 4
    $region69: #{tpu_custom_call.1} parent=1 // pred_fallthru
      _
    // Predicated region
    $region70: #{tpu_custom_call.1} parent=1 // pred_check
      _
    $region71: #{tpu_custom_call.1} parent=1 // pred_check_branch
      %276 = sbr.rel (0) target = $region73
    $region72: #{tpu_custom_call.1} parent=1 // pred_region
      %s278 = ssub.s32 1024, 1024
      %279 = vsyncadd [#allocation30], %s278
      %s280 = sshll.u32 [#allocation29], 4
      %s281 = int_to_ptr.vmem [resolvable:$true] %s280
      %286 = dma.hbm_to_vmem [thread:$0]  %s35, 1024, %s281, [#allocation30], 64, 64, 4
    $region73: #{tpu_custom_call.1} parent=1 // pred_fallthru
      _
    // Predicated region
    $region74: #{tpu_custom_call.1} parent=1 // pred_check
      _
    $region75: #{tpu_custom_call.1} parent=1 // pred_check_branch
      %288 = sbr.rel (0) target = $region77
    $region76: #{tpu_custom_call.1} parent=1 // pred_region
      %s290 = ssub.s32 1024, 1024
      %291 = vsyncadd [#allocation30], %s290
      %s292 = sshll.u32 [#allocation31], 4
      %s293 = int_to_ptr.vmem [resolvable:$true] %s292
      %298 = dma.hbm_to_vmem [thread:$0]  %s37, 1024, %s293, [#allocation30], 64, 64, 4
    $region77: #{tpu_custom_call.1} parent=1 // pred_fallthru
      _
    // Predicated region
    $region78: #{tpu_custom_call.1} parent=1 // pred_check
      _
    $region79: #{tpu_custom_call.1} parent=1 // pred_check_branch
      %300 = sbr.rel (0) target = $region81
    $region80: #{tpu_custom_call.1} parent=1 // pred_region
      %s302 = ssub.s32 16, 16
      %303 = vsyncadd [#allocation33], %s302
      %s305 = sshll.u32 [#allocation32], 4
      %s306 = int_to_ptr.vmem [resolvable:$true] %s305
      %308 = dma.hbm_to_vmem [thread:$0]  %s39, 16, %s306, [#allocation33]
    $region81: #{tpu_custom_call.1} parent=1 // pred_fallthru
      _
    // Predicated region
    $region82: #{tpu_custom_call.1} parent=1 // pred_check
      _
    $region83: #{tpu_custom_call.1} parent=1 // pred_check_branch
      %310 = sbr.rel (0) target = $region85
    $region84: #{tpu_custom_call.1} parent=1 // pred_region
      %s312 = ssub.s32 16, 16
      %313 = vsyncadd [#allocation33], %s312
      %s315 = sshll.u32 [#allocation34], 4
      %s316 = int_to_ptr.vmem [resolvable:$true] %s315
      %318 = dma.hbm_to_vmem [thread:$0]  %s41, 16, %s316, [#allocation33]
    $region85: #{tpu_custom_call.1} parent=1 // pred_fallthru
      _
    // Predicated region
    $region86: #{tpu_custom_call.1} parent=1 // pred_check
      _
    $region87: #{tpu_custom_call.1} parent=1 // pred_check_branch
      %320 = sbr.rel (0) target = $region89
    $region88: #{tpu_custom_call.1} parent=1 // pred_region
      %s322 = ssub.s32 16, 16
      %323 = vsyncadd [#allocation36], %s322
      %s325 = sshll.u32 [#allocation35], 4
      %s326 = int_to_ptr.vmem [resolvable:$true] %s325
      %328 = dma.hbm_to_vmem [thread:$0]  %s43, 16, %s326, [#allocation36]
    $region89: #{tpu_custom_call.1} parent=1 // pred_fallthru
      _
    // Predicated region
    $region90: #{tpu_custom_call.1} parent=1 // pred_check
      _
    $region91: #{tpu_custom_call.1} parent=1 // pred_check_branch
      %330 = sbr.rel (0) target = $region93
    $region92: #{tpu_custom_call.1} parent=1 // pred_region
      %s332 = ssub.s32 16, 16
      %333 = vsyncadd [#allocation36], %s332
      %s335 = sshll.u32 [#allocation37], 4
      %s336 = int_to_ptr.vmem [resolvable:$true] %s335
      %338 = dma.hbm_to_vmem [thread:$0]  %s45, 16, %s336, [#allocation36]
    $region93: #{tpu_custom_call.1} parent=1 // pred_fallthru
      _
    // Predicated region
    $region94: #{tpu_custom_call.1} parent=1 // pred_check
      _
    $region95: #{tpu_custom_call.1} parent=1 // pred_check_branch
      %340 = sbr.rel (0) target = $region97
    $region96: #{tpu_custom_call.1} parent=1 // pred_region
      %s342 = ssub.s32 16, 16
      %343 = vsyncadd [#allocation39], %s342
      %s345 = sshll.u32 [#allocation38], 4
      %s346 = int_to_ptr.vmem [resolvable:$true] %s345
      %348 = dma.hbm_to_vmem [thread:$0]  %s47, 16, %s346, [#allocation39]
    $region97: #{tpu_custom_call.1} parent=1 // pred_fallthru
      _
    // Predicated region
    $region98: #{tpu_custom_call.1} parent=1 // pred_check
      _
    $region99: #{tpu_custom_call.1} parent=1 // pred_check_branch
      %350 = sbr.rel (0) target = $region101
    $region100: #{tpu_custom_call.1} parent=1 // pred_region
      %s352 = ssub.s32 16, 16
      %353 = vsyncadd [#allocation39], %s352
      %s355 = sshll.u32 [#allocation40], 4
      %s356 = int_to_ptr.vmem [resolvable:$true] %s355
      %358 = dma.hbm_to_vmem [thread:$0]  %s49, 16, %s356, [#allocation39]
    $region101: #{tpu_custom_call.1} parent=1 // pred_fallthru
      _
    // Predicated region
    $region102: #{tpu_custom_call.1} parent=1 // pred_check
      _
    $region103: #{tpu_custom_call.1} parent=1 // pred_check_branch
      %360 = sbr.rel (0) target = $region105
    $region104: #{tpu_custom_call.1} parent=1 // pred_region
      %s362 = ssub.s32 1024, 1024
      %363 = vsyncadd [#allocation42], %s362
      %s364 = sshll.u32 [#allocation41], 4
      %s365 = int_to_ptr.vmem [resolvable:$true] %s364
      %370 = dma.hbm_to_vmem [thread:$0]  %s51, 1024, %s365, [#allocation42], 64, 64, 4
    $region105: #{tpu_custom_call.1} parent=1 // pred_fallthru
      _
    // Predicated region
    $region106: #{tpu_custom_call.1} parent=1 // pred_check
      _
    $region107: #{tpu_custom_call.1} parent=1 // pred_check_branch
      %372 = sbr.rel (0) target = $region109
    $region108: #{tpu_custom_call.1} parent=1 // pred_region
      %s374 = ssub.s32 16, 16
      %375 = vsyncadd [#allocation42], %s374
      %s377 = sshll.u32 [#allocation43], 4
      %s378 = int_to_ptr.vmem [resolvable:$true] %s377
      %380 = dma.hbm_to_vmem [thread:$0]  %s53, 16, %s378, [#allocation42]
    $region109: #{tpu_custom_call.1} parent=1 // pred_fallthru
      _
    // Predicated region
    $region110: #{tpu_custom_call.1} parent=1 // pred_check
      _
    $region111: #{tpu_custom_call.1} parent=1 // pred_check_branch
      %382 = sbr.rel (0) target = $region113
    $region112: #{tpu_custom_call.1} parent=1 // pred_region
      %s384 = ssub.s32 1024, 1024
      %385 = vsyncadd [#allocation45], %s384
      %s386 = sshll.u32 [#allocation44], 4
      %s387 = int_to_ptr.vmem [resolvable:$true] %s386
      %392 = dma.hbm_to_vmem [thread:$0]  %s55, 1024, %s387, [#allocation45], 64, 64, 4
    $region113: #{tpu_custom_call.1} parent=1 // pred_fallthru
      _
    // Predicated region
    $region114: #{tpu_custom_call.1} parent=1 // pred_check
      _
    $region115: #{tpu_custom_call.1} parent=1 // pred_check_branch
      %394 = sbr.rel (0) target = $region117
    $region116: #{tpu_custom_call.1} parent=1 // pred_region
      %s396 = ssub.s32 16, 16
      %397 = vsyncadd [#allocation45], %s396
      %s399 = sshll.u32 [#allocation46], 4
      %s400 = int_to_ptr.vmem [resolvable:$true] %s399
      %402 = dma.hbm_to_vmem [thread:$0]  %s57, 16, %s400, [#allocation45]
    $region117: #{tpu_custom_call.1} parent=1 // pred_fallthru
      _
    // Predicated region
    $region118: #{tpu_custom_call.1} parent=1 // pred_check
      _
    $region119: #{tpu_custom_call.1} parent=1 // pred_check_branch
      %404 = sbr.rel (0) target = $region121
    $region120: #{tpu_custom_call.1} parent=1 // pred_region
      %s406 = ssub.s32 16, 16
      %407 = vsyncadd [#allocation48], %s406
      %s409 = sshll.u32 [#allocation47], 4
      %s410 = int_to_ptr.vmem [resolvable:$true] %s409
      %412 = dma.hbm_to_vmem [thread:$0]  %s59, 16, %s410, [#allocation48]
    $region121: #{tpu_custom_call.1} parent=1 // pred_fallthru
      _
    // Predicated region
    $region122: #{tpu_custom_call.1} parent=1 // pred_check
      _
    $region123: #{tpu_custom_call.1} parent=1 // pred_check_branch
      %414 = sbr.rel (0) target = $region125
    $region124: #{tpu_custom_call.1} parent=1 // pred_region
      %s416 = ssub.s32 16, 16
      %417 = vsyncadd [#allocation48], %s416
      %s419 = sshll.u32 [#allocation49], 4
      %s420 = int_to_ptr.vmem [resolvable:$true] %s419
      %422 = dma.hbm_to_vmem [thread:$0]  %s61, 16, %s420, [#allocation48]
    $region125: #{tpu_custom_call.1} parent=1 // pred_fallthru
      _
    // Predicated region
    $region126: #{tpu_custom_call.1} parent=1 // pred_check
      _
    $region127: #{tpu_custom_call.1} parent=1 // pred_check_branch
      %424 = sbr.rel (0) target = $region129
    $region128: #{tpu_custom_call.1} parent=1 // pred_region
      %425 = dma.done [#allocation3], 256
    $region129: #{tpu_custom_call.1} parent=1 // pred_fallthru
      _
    // Predicated region
    $region130: #{tpu_custom_call.1} parent=1 // pred_check
      _
    $region131: #{tpu_custom_call.1} parent=1 // pred_check_branch
      %427 = sbr.rel (0) target = $region133
    $region132: #{tpu_custom_call.1} parent=1 // pred_region
      %428 = dma.done [#allocation6], 32
    $region133: #{tpu_custom_call.1} parent=1 // pred_fallthru
      _
    // Predicated region
    $region134: #{tpu_custom_call.1} parent=1 // pred_check
      _
    $region135: #{tpu_custom_call.1} parent=1 // pred_check_branch
      %430 = sbr.rel (0) target = $region137
    $region136: #{tpu_custom_call.1} parent=1 // pred_region
      %431 = dma.done [#allocation6], 256
    $region137: #{tpu_custom_call.1} parent=1 // pred_fallthru
      _
    // Predicated region
    $region138: #{tpu_custom_call.1} parent=1 // pred_check
      _
    $region139: #{tpu_custom_call.1} parent=1 // pred_check_branch
      %433 = sbr.rel (0) target = $region141
    $region140: #{tpu_custom_call.1} parent=1 // pred_region
      %434 = dma.done [#allocation9], 32
    $region141: #{tpu_custom_call.1} parent=1 // pred_fallthru
      _
    // Predicated region
    $region142: #{tpu_custom_call.1} parent=1 // pred_check
      _
    $region143: #{tpu_custom_call.1} parent=1 // pred_check_branch
      %436 = sbr.rel (0) target = $region145
    $region144: #{tpu_custom_call.1} parent=1 // pred_region
      %437 = dma.done [#allocation9], 128
    $region145: #{tpu_custom_call.1} parent=1 // pred_fallthru
      _
    // Predicated region
    $region146: #{tpu_custom_call.1} parent=1 // pred_check
      _
    $region147: #{tpu_custom_call.1} parent=1 // pred_check_branch
      %439 = sbr.rel (0) target = $region149
    $region148: #{tpu_custom_call.1} parent=1 // pred_region
      %440 = dma.done [#allocation12], 1024
    $region149: #{tpu_custom_call.1} parent=1 // pred_fallthru
      _
    // Predicated region
    $region150: #{tpu_custom_call.1} parent=1 // pred_check
      _
    $region151: #{tpu_custom_call.1} parent=1 // pred_check_branch
      %442 = sbr.rel (0) target = $region153
    $region152: #{tpu_custom_call.1} parent=1 // pred_region
      %443 = dma.done [#allocation12], 1024
    $region153: #{tpu_custom_call.1} parent=1 // pred_fallthru
      _
    // Predicated region
    $region154: #{tpu_custom_call.1} parent=1 // pred_check
      _
    $region155: #{tpu_custom_call.1} parent=1 // pred_check_branch
      %445 = sbr.rel (0) target = $region157
    $region156: #{tpu_custom_call.1} parent=1 // pred_region
      %446 = dma.done [#allocation15], 1024
    $region157: #{tpu_custom_call.1} parent=1 // pred_fallthru
      _
    // Predicated region
    $region158: #{tpu_custom_call.1} parent=1 // pred_check
      _
    $region159: #{tpu_custom_call.1} parent=1 // pred_check_branch
      %448 = sbr.rel (0) target = $region161
    $region160: #{tpu_custom_call.1} parent=1 // pred_region
      %449 = dma.done [#allocation15], 1024
    $region161: #{tpu_custom_call.1} parent=1 // pred_fallthru
      _
    // Predicated region
    $region162: #{tpu_custom_call.1} parent=1 // pred_check
      _
    $region163: #{tpu_custom_call.1} parent=1 // pred_check_branch
      %451 = sbr.rel (0) target = $region165
    $region164: #{tpu_custom_call.1} parent=1 // pred_region
      %452 = dma.done [#allocation18], 16
    $region165: #{tpu_custom_call.1} parent=1 // pred_fallthru
      _
    // Predicated region
    $region166: #{tpu_custom_call.1} parent=1 // pred_check
      _
    $region167: #{tpu_custom_call.1} parent=1 // pred_check_branch
      %454 = sbr.rel (0) target = $region169
    $region168: #{tpu_custom_call.1} parent=1 // pred_region
      %455 = dma.done [#allocation18], 16
    $region169: #{tpu_custom_call.1} parent=1 // pred_fallthru
      _
    // Predicated region
    $region170: #{tpu_custom_call.1} parent=1 // pred_check
      _
    $region171: #{tpu_custom_call.1} parent=1 // pred_check_branch
      %457 = sbr.rel (0) target = $region173
    $region172: #{tpu_custom_call.1} parent=1 // pred_region
      %458 = dma.done [#allocation21], 16
    $region173: #{tpu_custom_call.1} parent=1 // pred_fallthru
      _
    // Predicated region
    $region174: #{tpu_custom_call.1} parent=1 // pred_check
      _
    $region175: #{tpu_custom_call.1} parent=1 // pred_check_branch
      %460 = sbr.rel (0) target = $region177
    $region176: #{tpu_custom_call.1} parent=1 // pred_region
      %461 = dma.done [#allocation21], 16
    $region177: #{tpu_custom_call.1} parent=1 // pred_fallthru
      _
    // Predicated region
    $region178: #{tpu_custom_call.1} parent=1 // pred_check
      _
    $region179: #{tpu_custom_call.1} parent=1 // pred_check_branch
      %463 = sbr.rel (0) target = $region181
    $region180: #{tpu_custom_call.1} parent=1 // pred_region
      %464 = dma.done [#allocation24], 16
    $region181: #{tpu_custom_call.1} parent=1 // pred_fallthru
      _
    // Predicated region
    $region182: #{tpu_custom_call.1} parent=1 // pred_check
      _
    $region183: #{tpu_custom_call.1} parent=1 // pred_check_branch
      %466 = sbr.rel (0) target = $region185
    $region184: #{tpu_custom_call.1} parent=1 // pred_region
      %467 = dma.done [#allocation24], 16
    $region185: #{tpu_custom_call.1} parent=1 // pred_fallthru
      _
    // Predicated region
    $region186: #{tpu_custom_call.1} parent=1 // pred_check
      _
    $region187: #{tpu_custom_call.1} parent=1 // pred_check_branch
      %469 = sbr.rel (0) target = $region189
    $region188: #{tpu_custom_call.1} parent=1 // pred_region
      %470 = dma.done [#allocation27], 1024
    $region189: #{tpu_custom_call.1} parent=1 // pred_fallthru
      _
    // Predicated region
    $region190: #{tpu_custom_call.1} parent=1 // pred_check
      _
    $region191: #{tpu_custom_call.1} parent=1 // pred_check_branch
      %472 = sbr.rel (0) target = $region193
    $region192: #{tpu_custom_call.1} parent=1 // pred_region
      %473 = dma.done [#allocation27], 1024
    $region193: #{tpu_custom_call.1} parent=1 // pred_fallthru
      _
    // Predicated region
    $region194: #{tpu_custom_call.1} parent=1 // pred_check
      _
    $region195: #{tpu_custom_call.1} parent=1 // pred_check_branch
      %475 = sbr.rel (0) target = $region197
    $region196: #{tpu_custom_call.1} parent=1 // pred_region
      %476 = dma.done [#allocation30], 1024
    $region197: #{tpu_custom_call.1} parent=1 // pred_fallthru
      _
    // Predicated region
    $region198: #{tpu_custom_call.1} parent=1 // pred_check
      _
    $region199: #{tpu_custom_call.1} parent=1 // pred_check_branch
      %478 = sbr.rel (0) target = $region201
    $region200: #{tpu_custom_call.1} parent=1 // pred_region
      %479 = dma.done [#allocation30], 1024
    $region201: #{tpu_custom_call.1} parent=1 // pred_fallthru
      _
    // Predicated region
    $region202: #{tpu_custom_call.1} parent=1 // pred_check
      _
    $region203: #{tpu_custom_call.1} parent=1 // pred_check_branch
      %481 = sbr.rel (0) target = $region205
    $region204: #{tpu_custom_call.1} parent=1 // pred_region
      %482 = dma.done [#allocation33], 16
    $region205: #{tpu_custom_call.1} parent=1 // pred_fallthru
      _
    // Predicated region
    $region206: #{tpu_custom_call.1} parent=1 // pred_check
      _
    $region207: #{tpu_custom_call.1} parent=1 // pred_check_branch
      %484 = sbr.rel (0) target = $region209
    $region208: #{tpu_custom_call.1} parent=1 // pred_region
      %485 = dma.done [#allocation33], 16
    $region209: #{tpu_custom_call.1} parent=1 // pred_fallthru
      _
    // Predicated region
    $region210: #{tpu_custom_call.1} parent=1 // pred_check
      _
    $region211: #{tpu_custom_call.1} parent=1 // pred_check_branch
      %487 = sbr.rel (0) target = $region213
    $region212: #{tpu_custom_call.1} parent=1 // pred_region
      %488 = dma.done [#allocation36], 16
    $region213: #{tpu_custom_call.1} parent=1 // pred_fallthru
      _
    // Predicated region
    $region214: #{tpu_custom_call.1} parent=1 // pred_check
      _
    $region215: #{tpu_custom_call.1} parent=1 // pred_check_branch
      %490 = sbr.rel (0) target = $region217
    $region216: #{tpu_custom_call.1} parent=1 // pred_region
      %491 = dma.done [#allocation36], 16
    $region217: #{tpu_custom_call.1} parent=1 // pred_fallthru
      _
    // Predicated region
    $region218: #{tpu_custom_call.1} parent=1 // pred_check
      _
    $region219: #{tpu_custom_call.1} parent=1 // pred_check_branch
      %493 = sbr.rel (0) target = $region221
    $region220: #{tpu_custom_call.1} parent=1 // pred_region
      %494 = dma.done [#allocation39], 16
    $region221: #{tpu_custom_call.1} parent=1 // pred_fallthru
      _
    // Predicated region
    $region222: #{tpu_custom_call.1} parent=1 // pred_check
      _
    $region223: #{tpu_custom_call.1} parent=1 // pred_check_branch
      %496 = sbr.rel (0) target = $region225
    $region224: #{tpu_custom_call.1} parent=1 // pred_region
      %497 = dma.done [#allocation39], 16
    $region225: #{tpu_custom_call.1} parent=1 // pred_fallthru
      _
    // Predicated region
    $region226: #{tpu_custom_call.1} parent=1 // pred_check
      _
    $region227: #{tpu_custom_call.1} parent=1 // pred_check_branch
      %499 = sbr.rel (0) target = $region229
    $region228: #{tpu_custom_call.1} parent=1 // pred_region
      %500 = dma.done [#allocation42], 1024
    $region229: #{tpu_custom_call.1} parent=1 // pred_fallthru
      _
    // Predicated region
    $region230: #{tpu_custom_call.1} parent=1 // pred_check
      _
    $region231: #{tpu_custom_call.1} parent=1 // pred_check_branch
      %502 = sbr.rel (0) target = $region233
    $region232: #{tpu_custom_call.1} parent=1 // pred_region
      %503 = dma.done [#allocation42], 16
    $region233: #{tpu_custom_call.1} parent=1 // pred_fallthru
      _
    // Predicated region
    $region234: #{tpu_custom_call.1} parent=1 // pred_check
      _
    $region235: #{tpu_custom_call.1} parent=1 // pred_check_branch
      %505 = sbr.rel (0) target = $region237
    $region236: #{tpu_custom_call.1} parent=1 // pred_region
      %506 = dma.done [#allocation45], 1024
    $region237: #{tpu_custom_call.1} parent=1 // pred_fallthru
      _
    // Predicated region
    $region238: #{tpu_custom_call.1} parent=1 // pred_check
      _
    $region239: #{tpu_custom_call.1} parent=1 // pred_check_branch
      %508 = sbr.rel (0) target = $region241
    $region240: #{tpu_custom_call.1} parent=1 // pred_region
      %509 = dma.done [#allocation45], 16
    $region241: #{tpu_custom_call.1} parent=1 // pred_fallthru
      _
    // Predicated region
    $region242: #{tpu_custom_call.1} parent=1 // pred_check
      _
    $region243: #{tpu_custom_call.1} parent=1 // pred_check_branch
      %511 = sbr.rel (0) target = $region245
    $region244: #{tpu_custom_call.1} parent=1 // pred_region
      %512 = dma.done [#allocation48], 16
    $region245: #{tpu_custom_call.1} parent=1 // pred_fallthru
      _
    // Predicated region
    $region246: #{tpu_custom_call.1} parent=1 // pred_check
      _
    $region247: #{tpu_custom_call.1} parent=1 // pred_check_branch
      %514 = sbr.rel (0) target = $region249
    $region248: #{tpu_custom_call.1} parent=1 // pred_region
      %515 = dma.done [#allocation48], 16
    $region249: #{tpu_custom_call.1} parent=1 // pred_fallthru
      _
    %v517 = vld [vmem:[#allocation2] sm:$0xff]
    %v518 = vld [vmem:[#allocation2 + $0x8] sm:$0xff]
    %v519 = vld [vmem:[#allocation7] sm:$0xff]
    %v520 = vld [vmem:[#allocation7 + $0x8] sm:$0xff]
    %v521 = vld [vmem:[#allocation5] sm:$0x1]
    %v522 = vld [vmem:[#allocation5 + $0x1] sm:$0x1]
    %v523 = vld [vmem:[#allocation8] sm:$0x1]
    %v524 = vld [vmem:[#allocation8 + $0x1] sm:$0x1]
    %v525 = vld [vmem:[#allocation10] sm:$0xff]
    %v526 = vpack.c.bf16 %v518, %v517
    %v527 = vld [vmem:[#allocation11] sm:$0xf]
    %v528 = vld [vmem:[#allocation11 + $0x4] sm:$0xf]
    %v529 = vld [vmem:[#allocation11 + $0x8] sm:$0xf]
    %v530 = vld [vmem:[#allocation11 + $0xc] sm:$0xf]
    %v531 = vld [vmem:[#allocation11 + $0x10] sm:$0xf]
    %v532 = vld [vmem:[#allocation11 + $0x14] sm:$0xf]
    %v533 = vld [vmem:[#allocation11 + $0x18] sm:$0xf]
    %v534 = vld [vmem:[#allocation11 + $0x1c] sm:$0xf]
    %v535 = vld [vmem:[#allocation11 + $0x20] sm:$0xf]
    %v536 = vld [vmem:[#allocation11 + $0x24] sm:$0xf]
    %v537 = vld [vmem:[#allocation11 + $0x28] sm:$0xf]
    %v538 = vld [vmem:[#allocation11 + $0x2c] sm:$0xf]
    %v539 = vld [vmem:[#allocation11 + $0x30] sm:$0xf]
    %v540 = vld [vmem:[#allocation11 + $0x34] sm:$0xf]
    %v541 = vld [vmem:[#allocation11 + $0x38] sm:$0xf]
    %v542 = vld [vmem:[#allocation11 + $0x3c] sm:$0xf]
    %v543 = vld [vmem:[#allocation17] sm:$0x1]
    %v545 = vlaneseq
    %v546 = vshrl.u32 %v545, 7
    %v547 = vsub.s32 0, %v546
    %v548 = vrot.slane %v543, %v547
    %v566 = vunpack.c.l.b16 %v527
    %v567 = vunpack.c.l.b16 %v528
    %v568 = vunpack.c.l.b16 %v529
    %v569 = vunpack.c.l.b16 %v530
    %v570 = vunpack.c.l.b16 %v531
    %v571 = vunpack.c.l.b16 %v532
    %v572 = vunpack.c.l.b16 %v533
    %v573 = vunpack.c.l.b16 %v534
    %v574 = vunpack.c.l.b16 %v535
    %v575 = vunpack.c.l.b16 %v536
    %v576 = vunpack.c.l.b16 %v537
    %v577 = vunpack.c.l.b16 %v538
    %v578 = vunpack.c.l.b16 %v539
    %v579 = vunpack.c.l.b16 %v540
    %v580 = vunpack.c.l.b16 %v541
    %v581 = vunpack.c.l.b16 %v542
    %v582 = vpack.c.b16 %v567, %v566
    %v583 = vpack.c.b16 %v569, %v568
    %v584 = vpack.c.b16 %v571, %v570
    %v585 = vpack.c.b16 %v573, %v572
    %v586 = vpack.c.b16 %v575, %v574
    %v587 = vpack.c.b16 %v577, %v576
    %v588 = vpack.c.b16 %v579, %v578
    %v589 = vpack.c.b16 %v581, %v580
    %598 = vmatprep.subr.bf16.mxu0 0
    %599 = vmatpush1.bf16.msra.mxu0 %v582
    %600 = vmatprep.subr.bf16.mxu0 0
    %601 = vmatpush1.bf16.msra.mxu0 %v583
    %602 = vmatprep.subr.bf16.mxu0 0
    %603 = vmatpush1.bf16.msra.mxu0 %v584
    %604 = vmatprep.subr.bf16.mxu0 0
    %605 = vmatpush1.bf16.msra.mxu0 %v585
    %606 = vmatprep.subr.bf16.mxu0 0
    %607 = vmatpush1.bf16.msra.mxu0 %v586
    %608 = vmatprep.subr.bf16.mxu0 0
    %609 = vmatpush1.bf16.msra.mxu0 %v587
    %610 = vmatprep.subr.bf16.mxu0 0
    %611 = vmatpush1.bf16.msra.mxu0 %v588
    %612 = vmatprep.subr.bf16.mxu0 0
    %613 = vmatpush1.bf16.msra.mxu0 %v589
    %614 = vmatprep.subr.bf16.mxu0 0
    %615 = vmatpush1.bf16.msra.mxu0 0
    %616 = vmatprep.subr.bf16.mxu0 0
    %617 = vmatpush1.bf16.msra.mxu0 0
    %618 = vmatprep.subr.bf16.mxu0 0
    %619 = vmatpush1.bf16.msra.mxu0 0
    %620 = vmatprep.subr.bf16.mxu0 0
    %621 = vmatpush1.bf16.msra.mxu0 0
    %622 = vmatprep.subr.bf16.mxu0 0
    %623 = vmatpush1.bf16.msra.mxu0 0
    %624 = vmatprep.subr.bf16.mxu0 0
    %625 = vmatpush1.bf16.msra.mxu0 0
    %626 = vmatprep.subr.bf16.mxu0 0
    %627 = vmatpush1.bf16.msra.mxu0 0
    %628 = vmatprep.subr.bf16.mxu0 0
    %629 = vmatpush1.bf16.msra.mxu0 0
    %630 = vmatprep.mubr.bf16.mxu0 0
    %631 = vmatmul.mubr.bf16.gmra.mrb[0].mxu0 %v526
    %v632 = vpop.f32.mrb[0].mxu0
    %v633 = vadd.f32 %v548, %v632
    %v634 = vpop.f32.mrb[0].mxu0
    %v635 = vpop.f32.mrb[0].mxu0
    %v636 = vadd.f32 %v548, %v635
    %v637 = vpop.f32.mrb[0].mxu0
    %638 = vdwg.mxu0
    %v639 = vmul.f32 %v633, 0.17677669
    %v640 = vmul.f32 %v636, 0.17677669
    %v641 = vld [vmem:[#allocation13] sm:$0xf]
    %v642 = vld [vmem:[#allocation13 + $0x4] sm:$0xf]
    %v643 = vld [vmem:[#allocation13 + $0x8] sm:$0xf]
    %v644 = vld [vmem:[#allocation13 + $0xc] sm:$0xf]
    %v645 = vld [vmem:[#allocation13 + $0x10] sm:$0xf]
    %v646 = vld [vmem:[#allocation13 + $0x14] sm:$0xf]
    %v647 = vld [vmem:[#allocation13 + $0x18] sm:$0xf]
    %v648 = vld [vmem:[#allocation13 + $0x1c] sm:$0xf]
    %v649 = vld [vmem:[#allocation13 + $0x20] sm:$0xf]
    %v650 = vld [vmem:[#allocation13 + $0x24] sm:$0xf]
    %v651 = vld [vmem:[#allocation13 + $0x28] sm:$0xf]
    %v652 = vld [vmem:[#allocation13 + $0x2c] sm:$0xf]
    %v653 = vld [vmem:[#allocation13 + $0x30] sm:$0xf]
    %v654 = vld [vmem:[#allocation13 + $0x34] sm:$0xf]
    %v655 = vld [vmem:[#allocation13 + $0x38] sm:$0xf]
    %v656 = vld [vmem:[#allocation13 + $0x3c] sm:$0xf]
    %v657 = vld [vmem:[#allocation19] sm:$0x1]
    %v659 = vlaneseq
    %v660 = vshrl.u32 %v659, 7
    %v661 = vsub.s32 0, %v660
    %v662 = vrot.slane %v657, %v661
    %v680 = vunpack.c.l.b16 %v641
    %v681 = vunpack.c.l.b16 %v642
    %v682 = vunpack.c.l.b16 %v643
    %v683 = vunpack.c.l.b16 %v644
    %v684 = vunpack.c.l.b16 %v645
    %v685 = vunpack.c.l.b16 %v646
    %v686 = vunpack.c.l.b16 %v647
    %v687 = vunpack.c.l.b16 %v648
    %v688 = vunpack.c.l.b16 %v649
    %v689 = vunpack.c.l.b16 %v650
    %v690 = vunpack.c.l.b16 %v651
    %v691 = vunpack.c.l.b16 %v652
    %v692 = vunpack.c.l.b16 %v653
    %v693 = vunpack.c.l.b16 %v654
    %v694 = vunpack.c.l.b16 %v655
    %v695 = vunpack.c.l.b16 %v656
    %v696 = vpack.c.b16 %v681, %v680
    %v697 = vpack.c.b16 %v683, %v682
    %v698 = vpack.c.b16 %v685, %v684
    %v699 = vpack.c.b16 %v687, %v686
    %v700 = vpack.c.b16 %v689, %v688
    %v701 = vpack.c.b16 %v691, %v690
    %v702 = vpack.c.b16 %v693, %v692
    %v703 = vpack.c.b16 %v695, %v694
    %712 = vmatprep.subr.bf16.mxu0 0
    %713 = vmatpush1.bf16.msra.mxu0 %v696
    %714 = vmatprep.subr.bf16.mxu0 0
    %715 = vmatpush1.bf16.msra.mxu0 %v697
    %716 = vmatprep.subr.bf16.mxu0 0
    %717 = vmatpush1.bf16.msra.mxu0 %v698
    %718 = vmatprep.subr.bf16.mxu0 0
    %719 = vmatpush1.bf16.msra.mxu0 %v699
    %720 = vmatprep.subr.bf16.mxu0 0
    %721 = vmatpush1.bf16.msra.mxu0 %v700
    %722 = vmatprep.subr.bf16.mxu0 0
    %723 = vmatpush1.bf16.msra.mxu0 %v701
    %724 = vmatprep.subr.bf16.mxu0 0
    %725 = vmatpush1.bf16.msra.mxu0 %v702
    %726 = vmatprep.subr.bf16.mxu0 0
    %727 = vmatpush1.bf16.msra.mxu0 %v703
    %728 = vmatprep.subr.bf16.mxu0 0
    %729 = vmatpush1.bf16.msra.mxu0 0
    %730 = vmatprep.subr.bf16.mxu0 0
    %731 = vmatpush1.bf16.msra.mxu0 0
    %732 = vmatprep.subr.bf16.mxu0 0
    %733 = vmatpush1.bf16.msra.mxu0 0
    %734 = vmatprep.subr.bf16.mxu0 0
    %735 = vmatpush1.bf16.msra.mxu0 0
    %736 = vmatprep.subr.bf16.mxu0 0
    %737 = vmatpush1.bf16.msra.mxu0 0
    %738 = vmatprep.subr.bf16.mxu0 0
    %739 = vmatpush1.bf16.msra.mxu0 0
    %740 = vmatprep.subr.bf16.mxu0 0
    %741 = vmatpush1.bf16.msra.mxu0 0
    %742 = vmatprep.subr.bf16.mxu0 0
    %743 = vmatpush1.bf16.msra.mxu0 0
    %744 = vmatprep.mubr.bf16.mxu0 0
    %745 = vmatmul.mubr.bf16.gmra.mrb[0].mxu0 %v526
    %v746 = vpop.f32.mrb[0].mxu0
    %v747 = vadd.f32 %v662, %v746
    %v748 = vpop.f32.mrb[0].mxu0
    %v749 = vpop.f32.mrb[0].mxu0
    %v750 = vadd.f32 %v662, %v749
    %v751 = vpop.f32.mrb[0].mxu0
    %752 = vdwg.mxu0
    %v753 = vld [vmem:[#allocation14] sm:$0xf]
    %v754 = vld [vmem:[#allocation14 + $0x4] sm:$0xf]
    %v755 = vld [vmem:[#allocation14 + $0x8] sm:$0xf]
    %v756 = vld [vmem:[#allocation14 + $0xc] sm:$0xf]
    %v757 = vld [vmem:[#allocation14 + $0x10] sm:$0xf]
    %v758 = vld [vmem:[#allocation14 + $0x14] sm:$0xf]
    %v759 = vld [vmem:[#allocation14 + $0x18] sm:$0xf]
    %v760 = vld [vmem:[#allocation14 + $0x1c] sm:$0xf]
    %v761 = vld [vmem:[#allocation14 + $0x20] sm:$0xf]
    %v762 = vld [vmem:[#allocation14 + $0x24] sm:$0xf]
    %v763 = vld [vmem:[#allocation14 + $0x28] sm:$0xf]
    %v764 = vld [vmem:[#allocation14 + $0x2c] sm:$0xf]
    %v765 = vld [vmem:[#allocation14 + $0x30] sm:$0xf]
    %v766 = vld [vmem:[#allocation14 + $0x34] sm:$0xf]
    %v767 = vld [vmem:[#allocation14 + $0x38] sm:$0xf]
    %v768 = vld [vmem:[#allocation14 + $0x3c] sm:$0xf]
    %v769 = vld [vmem:[#allocation20] sm:$0x1]
    %v771 = vlaneseq
    %v772 = vshrl.u32 %v771, 7
    %v773 = vsub.s32 0, %v772
    %v774 = vrot.slane %v769, %v773
    %v792 = vunpack.c.l.b16 %v753
    %v793 = vunpack.c.l.b16 %v754
    %v794 = vunpack.c.l.b16 %v755
    %v795 = vunpack.c.l.b16 %v756
    %v796 = vunpack.c.l.b16 %v757
    %v797 = vunpack.c.l.b16 %v758
    %v798 = vunpack.c.l.b16 %v759
    %v799 = vunpack.c.l.b16 %v760
    %v800 = vunpack.c.l.b16 %v761
    %v801 = vunpack.c.l.b16 %v762
    %v802 = vunpack.c.l.b16 %v763
    %v803 = vunpack.c.l.b16 %v764
    %v804 = vunpack.c.l.b16 %v765
    %v805 = vunpack.c.l.b16 %v766
    %v806 = vunpack.c.l.b16 %v767
    %v807 = vunpack.c.l.b16 %v768
    %v808 = vpack.c.b16 %v793, %v792
    %v809 = vpack.c.b16 %v795, %v794
    %v810 = vpack.c.b16 %v797, %v796
    %v811 = vpack.c.b16 %v799, %v798
    %v812 = vpack.c.b16 %v801, %v800
    %v813 = vpack.c.b16 %v803, %v802
    %v814 = vpack.c.b16 %v805, %v804
    %v815 = vpack.c.b16 %v807, %v806
    %824 = vmatprep.subr.bf16.mxu0 0
    %825 = vmatpush1.bf16.msra.mxu0 %v808
    %826 = vmatprep.subr.bf16.mxu0 0
    %827 = vmatpush1.bf16.msra.mxu0 %v809
    %828 = vmatprep.subr.bf16.mxu0 0
    %829 = vmatpush1.bf16.msra.mxu0 %v810
    %830 = vmatprep.subr.bf16.mxu0 0
    %831 = vmatpush1.bf16.msra.mxu0 %v811
    %832 = vmatprep.subr.bf16.mxu0 0
    %833 = vmatpush1.bf16.msra.mxu0 %v812
    %834 = vmatprep.subr.bf16.mxu0 0
    %835 = vmatpush1.bf16.msra.mxu0 %v813
    %836 = vmatprep.subr.bf16.mxu0 0
    %837 = vmatpush1.bf16.msra.mxu0 %v814
    %838 = vmatprep.subr.bf16.mxu0 0
    %839 = vmatpush1.bf16.msra.mxu0 %v815
    %840 = vmatprep.subr.bf16.mxu0 0
    %841 = vmatpush1.bf16.msra.mxu0 0
    %842 = vmatprep.subr.bf16.mxu0 0
    %843 = vmatpush1.bf16.msra.mxu0 0
    %844 = vmatprep.subr.bf16.mxu0 0
    %845 = vmatpush1.bf16.msra.mxu0 0
    %846 = vmatprep.subr.bf16.mxu0 0
    %847 = vmatpush1.bf16.msra.mxu0 0
    %848 = vmatprep.subr.bf16.mxu0 0
    %849 = vmatpush1.bf16.msra.mxu0 0
    %850 = vmatprep.subr.bf16.mxu0 0
    %851 = vmatpush1.bf16.msra.mxu0 0
    %852 = vmatprep.subr.bf16.mxu0 0
    %853 = vmatpush1.bf16.msra.mxu0 0
    %854 = vmatprep.subr.bf16.mxu0 0
    %855 = vmatpush1.bf16.msra.mxu0 0
    %856 = vmatprep.mubr.bf16.mxu0 0
    %857 = vmatmul.mubr.bf16.gmra.mrb[0].mxu0 %v526
    %v858 = vpop.f32.mrb[0].mxu0
    %v859 = vadd.f32 %v774, %v858
    %v860 = vpop.f32.mrb[0].mxu0
    %v861 = vpop.f32.mrb[0].mxu0
    %v862 = vadd.f32 %v774, %v861
    %v863 = vpop.f32.mrb[0].mxu0
    %864 = vdwg.mxu0
    %v865 = vpack.c.bf16 %v639, %v639
    %v866 = vpack.c.bf16 %v640, %v640
    %v867 = vpack.c.bf16 %v747, %v747
    %v868 = vpack.c.bf16 %v750, %v750
    %869 = vmatprep.subr.bf16.mxu0 0
    %870 = vmatpush1.bf16.xpose.msra.mxu0 %v867
    %871 = vmatprep.subr.bf16.mxu0 0
    %872 = vmatpush1.bf16.xpose.msra.mxu0 0
    %873 = vmatprep.subr.bf16.mxu0 0
    %874 = vmatpush1.bf16.xpose.msra.mxu0 0
    %875 = vmatprep.subr.bf16.mxu0 0
    %876 = vmatpush1.bf16.xpose.msra.mxu0 0
    %877 = vmatprep.subr.bf16.mxu0 0
    %878 = vmatpush1.bf16.xpose.msra.mxu0 0
    %879 = vmatprep.subr.bf16.mxu0 0
    %880 = vmatpush1.bf16.xpose.msra.mxu0 0
    %881 = vmatprep.subr.bf16.mxu0 0
    %882 = vmatpush1.bf16.xpose.msra.mxu0 0
    %883 = vmatprep.subr.bf16.mxu0 0
    %884 = vmatpush1.bf16.xpose.msra.mxu0 0
    %885 = vmatprep.subr.bf16.mxu0 0
    %886 = vmatpush1.bf16.xpose.msra.mxu0 0
    %887 = vmatprep.subr.bf16.mxu0 0
    %888 = vmatpush1.bf16.xpose.msra.mxu0 0
    %889 = vmatprep.subr.bf16.mxu0 0
    %890 = vmatpush1.bf16.xpose.msra.mxu0 0
    %891 = vmatprep.subr.bf16.mxu0 0
    %892 = vmatpush1.bf16.xpose.msra.mxu0 0
    %893 = vmatprep.subr.bf16.mxu0 0
    %894 = vmatpush1.bf16.xpose.msra.mxu0 0
    %895 = vmatprep.subr.bf16.mxu0 0
    %896 = vmatpush1.bf16.xpose.msra.mxu0 0
    %897 = vmatprep.subr.bf16.mxu0 0
    %898 = vmatpush1.bf16.xpose.msra.mxu0 0
    %899 = vmatprep.subr.bf16.mxu0 0
    %900 = vmatpush1.bf16.xpose.msra.mxu0 0
    %901 = vmatprep.mubr.bf16.mxu0 0
    %902 = vmatmul.mubr.bf16.gmra.mrb[0].mxu0 %v865
    %v903 = vpop.f32.mrb[0].mxu0
    %v904 = vadd.f32 0.0, %v903
    %v905 = vpop.f32.mrb[0].mxu0
    %v906 = vpop.f32.mrb[0].mxu0
    %v907 = vpop.f32.mrb[0].mxu0
    %908 = vdwg.mxu0
    %909 = vmatprep.subr.bf16.mxu0 0
    %910 = vmatpush1.bf16.xpose.msra.mxu0 %v868
    %911 = vmatprep.subr.bf16.mxu0 0
    %912 = vmatpush1.bf16.xpose.msra.mxu0 0
    %913 = vmatprep.subr.bf16.mxu0 0
    %914 = vmatpush1.bf16.xpose.msra.mxu0 0
    %915 = vmatprep.subr.bf16.mxu0 0
    %916 = vmatpush1.bf16.xpose.msra.mxu0 0
    %917 = vmatprep.subr.bf16.mxu0 0
    %918 = vmatpush1.bf16.xpose.msra.mxu0 0
    %919 = vmatprep.subr.bf16.mxu0 0
    %920 = vmatpush1.bf16.xpose.msra.mxu0 0
    %921 = vmatprep.subr.bf16.mxu0 0
    %922 = vmatpush1.bf16.xpose.msra.mxu0 0
    %923 = vmatprep.subr.bf16.mxu0 0
    %924 = vmatpush1.bf16.xpose.msra.mxu0 0
    %925 = vmatprep.subr.bf16.mxu0 0
    %926 = vmatpush1.bf16.xpose.msra.mxu0 0
    %927 = vmatprep.subr.bf16.mxu0 0
    %928 = vmatpush1.bf16.xpose.msra.mxu0 0
    %929 = vmatprep.subr.bf16.mxu0 0
    %930 = vmatpush1.bf16.xpose.msra.mxu0 0
    %931 = vmatprep.subr.bf16.mxu0 0
    %932 = vmatpush1.bf16.xpose.msra.mxu0 0
    %933 = vmatprep.subr.bf16.mxu0 0
    %934 = vmatpush1.bf16.xpose.msra.mxu0 0
    %935 = vmatprep.subr.bf16.mxu0 0
    %936 = vmatpush1.bf16.xpose.msra.mxu0 0
    %937 = vmatprep.subr.bf16.mxu0 0
    %938 = vmatpush1.bf16.xpose.msra.mxu0 0
    %939 = vmatprep.subr.bf16.mxu0 0
    %940 = vmatpush1.bf16.xpose.msra.mxu0 0
    %941 = vmatprep.mubr.bf16.mxu0 0
    %942 = vmatmul.mubr.bf16.gmra.mrb[0].mxu0 %v866
    %v943 = vpop.f32.mrb[0].mxu0
    %v944 = vadd.f32 0.0, %v943
    %v945 = vpop.f32.mrb[0].mxu0
    %v946 = vpop.f32.mrb[0].mxu0
    %v947 = vpop.f32.mrb[0].mxu0
    %948 = vdwg.mxu0
    %vm949 = vcmp.gt.f32.partialorder %v521, 0.0
    %vm950 = vcmp.gt.f32.partialorder %v522, 0.0
    %vm951 = vcmp.gt.f32.partialorder %v525, 0.0
    %v952 = vsel %vm949, 1, 0
    %v953 = vsel %vm950, 1, 0
    %v954 = vlaneseq
    %v955 = vshrl.u32 %v954, 7
    %v956 = vsub.s32 0, %v955
    %v957 = vrot.slane %v952, %v956
    %v958 = vlaneseq
    %v959 = vshrl.u32 %v958, 7
    %v960 = vsub.s32 0, %v959
    %v961 = vrot.slane %v953, %v960
    %vm962 = vcmp.eq.s32.totalorder %v957, 1
    %vm963 = vcmp.eq.s32.totalorder %v961, 1
    %v964 = vsel %vm951, 1, 0
    %vm965 = vcmp.eq.s32.totalorder %v964, 1
    %vm966 = vmand %vm962, %vm965
    %vm967 = vmand %vm963, %vm965
    %v968 = vsel %vm966, %v904, -1e+09
    %v969 = vsel %vm967, %v944, -1e+09
    %vm970 = vcmask 64512
    %v971 = vsel %vm970, %v968, -inf
    %972 = vmax.xlane.f32.xlu0 %v971
    %v973 = vpop.xlane.xlu0 %972
    %v974 = vsel %vm970, %v969, -inf
    %975 = vmax.xlane.f32.xlu0 %v974
    %v976 = vpop.xlane.xlu0 %975
    %v977 = vsub.f32 %v968, %v973
    %v978 = vsub.f32 %v969, %v976
    %v979 = vmul.f32 %v977, 1.442695
    %v980 = vpow.pop %v979
    %v981 = vmul.f32 %v978, 1.442695
    %v982 = vpow.pop %v981
    %v983 = vsel %vm970, %v980, 0.0
    %984 = vadd.xlane.f32.xlu0 %v983
    %v985 = vpop.xlane.xlu0 %984
    %v986 = vsel %vm970, %v982, 0.0
    %987 = vadd.xlane.f32.xlu0 %v986
    %v988 = vpop.xlane.xlu0 %987
    %v989 = vrcp.pop %v985
    %v990 = vrcp.pop %v988
    %v991 = vmul.f32 %v980, %v989
    %v992 = vmul.f32 %v982, %v990
    %v993 = vpack.c.bf16 %v991, %v991
    %v994 = vpack.c.bf16 %v992, %v992
    %v995 = vpack.c.bf16 %v859, %v859
    %v996 = vpack.c.bf16 %v862, %v862
    %v998 = vsel %vm970, %v993, 0
    %vm1000 = vcmask 1043456
    %v1002 = vsel %vm1000, %v995, 0
    %1004 = vmatprep.subr.bf16.mxu0 0
    %1005 = vmatpush1.bf16.msra.mxu0 %v1002
    %1006 = vmatprep.subr.bf16.mxu0 0
    %1007 = vmatpush1.bf16.msra.mxu0 0
    %1008 = vmatprep.subr.bf16.mxu0 0
    %1009 = vmatpush1.bf16.msra.mxu0 0
    %1010 = vmatprep.subr.bf16.mxu0 0
    %1011 = vmatpush1.bf16.msra.mxu0 0
    %1012 = vmatprep.subr.bf16.mxu0 0
    %1013 = vmatpush1.bf16.msra.mxu0 0
    %1014 = vmatprep.subr.bf16.mxu0 0
    %1015 = vmatpush1.bf16.msra.mxu0 0
    %1016 = vmatprep.subr.bf16.mxu0 0
    %1017 = vmatpush1.bf16.msra.mxu0 0
    %1018 = vmatprep.subr.bf16.mxu0 0
    %1019 = vmatpush1.bf16.msra.mxu0 0
    %1020 = vmatprep.subr.bf16.mxu0 0
    %1021 = vmatpush1.bf16.msra.mxu0 0
    %1022 = vmatprep.subr.bf16.mxu0 0
    %1023 = vmatpush1.bf16.msra.mxu0 0
    %1024 = vmatprep.subr.bf16.mxu0 0
    %1025 = vmatpush1.bf16.msra.mxu0 0
    %1026 = vmatprep.subr.bf16.mxu0 0
    %1027 = vmatpush1.bf16.msra.mxu0 0
    %1028 = vmatprep.subr.bf16.mxu0 0
    %1029 = vmatpush1.bf16.msra.mxu0 0
    %1030 = vmatprep.subr.bf16.mxu0 0
    %1031 = vmatpush1.bf16.msra.mxu0 0
    %1032 = vmatprep.subr.bf16.mxu0 0
    %1033 = vmatpush1.bf16.msra.mxu0 0
    %1034 = vmatprep.subr.bf16.mxu0 0
    %1035 = vmatpush1.bf16.msra.mxu0 0
    %1036 = vmatprep.mubr.bf16.mxu0 0
    %1037 = vmatmul.mubr.bf16.gmra.mrb[0].mxu0 %v998
    %v1038 = vpop.f32.mrb[0].mxu0
    %v1039 = vadd.f32 0.0, %v1038
    %v1040 = vpop.f32.mrb[0].mxu0
    %v1041 = vpop.f32.mrb[0].mxu0
    %v1042 = vpop.f32.mrb[0].mxu0
    %1043 = vdwg.mxu0
    %v1045 = vsel %vm970, %v994, 0
    %v1048 = vsel %vm1000, %v996, 0
    %1050 = vmatprep.subr.bf16.mxu0 0
    %1051 = vmatpush1.bf16.msra.mxu0 %v1048
    %1052 = vmatprep.subr.bf16.mxu0 0
    %1053 = vmatpush1.bf16.msra.mxu0 0
    %1054 = vmatprep.subr.bf16.mxu0 0
    %1055 = vmatpush1.bf16.msra.mxu0 0
    %1056 = vmatprep.subr.bf16.mxu0 0
    %1057 = vmatpush1.bf16.msra.mxu0 0
    %1058 = vmatprep.subr.bf16.mxu0 0
    %1059 = vmatpush1.bf16.msra.mxu0 0
    %1060 = vmatprep.subr.bf16.mxu0 0
    %1061 = vmatpush1.bf16.msra.mxu0 0
    %1062 = vmatprep.subr.bf16.mxu0 0
    %1063 = vmatpush1.bf16.msra.mxu0 0
    %1064 = vmatprep.subr.bf16.mxu0 0
    %1065 = vmatpush1.bf16.msra.mxu0 0
    %1066 = vmatprep.subr.bf16.mxu0 0
    %1067 = vmatpush1.bf16.msra.mxu0 0
    %1068 = vmatprep.subr.bf16.mxu0 0
    %1069 = vmatpush1.bf16.msra.mxu0 0
    %1070 = vmatprep.subr.bf16.mxu0 0
    %1071 = vmatpush1.bf16.msra.mxu0 0
    %1072 = vmatprep.subr.bf16.mxu0 0
    %1073 = vmatpush1.bf16.msra.mxu0 0
    %1074 = vmatprep.subr.bf16.mxu0 0
    %1075 = vmatpush1.bf16.msra.mxu0 0
    %1076 = vmatprep.subr.bf16.mxu0 0
    %1077 = vmatpush1.bf16.msra.mxu0 0
    %1078 = vmatprep.subr.bf16.mxu0 0
    %1079 = vmatpush1.bf16.msra.mxu0 0
    %1080 = vmatprep.subr.bf16.mxu0 0
    %1081 = vmatpush1.bf16.msra.mxu0 0
    %1082 = vmatprep.mubr.bf16.mxu0 0
    %1083 = vmatmul.mubr.bf16.gmra.mrb[0].mxu0 %v1045
    %v1084 = vpop.f32.mrb[0].mxu0
    %v1085 = vadd.f32 0.0, %v1084
    %v1086 = vpop.f32.mrb[0].mxu0
    %v1087 = vpop.f32.mrb[0].mxu0
    %v1088 = vpop.f32.mrb[0].mxu0
    %1089 = vdwg.mxu0
    %v1090 = vpack.c.bf16 %v1085, %v1039
    %v1091 = vld [vmem:[#allocation16] sm:$0xf]
    %v1092 = vld [vmem:[#allocation16 + $0x4] sm:$0xf]
    %v1093 = vld [vmem:[#allocation16 + $0x8] sm:$0xf]
    %v1094 = vld [vmem:[#allocation16 + $0xc] sm:$0xf]
    %v1095 = vld [vmem:[#allocation16 + $0x10] sm:$0xf]
    %v1096 = vld [vmem:[#allocation16 + $0x14] sm:$0xf]
    %v1097 = vld [vmem:[#allocation16 + $0x18] sm:$0xf]
    %v1098 = vld [vmem:[#allocation16 + $0x1c] sm:$0xf]
    %v1099 = vld [vmem:[#allocation16 + $0x20] sm:$0xf]
    %v1100 = vld [vmem:[#allocation16 + $0x24] sm:$0xf]
    %v1101 = vld [vmem:[#allocation16 + $0x28] sm:$0xf]
    %v1102 = vld [vmem:[#allocation16 + $0x2c] sm:$0xf]
    %v1103 = vld [vmem:[#allocation16 + $0x30] sm:$0xf]
    %v1104 = vld [vmem:[#allocation16 + $0x34] sm:$0xf]
    %v1105 = vld [vmem:[#allocation16 + $0x38] sm:$0xf]
    %v1106 = vld [vmem:[#allocation16 + $0x3c] sm:$0xf]
    %v1107 = vld [vmem:[#allocation22] sm:$0x1]
    %v1109 = vlaneseq
    %v1110 = vshrl.u32 %v1109, 7
    %v1111 = vsub.s32 0, %v1110
    %v1112 = vrot.slane %v1107, %v1111
    %v1130 = vunpack.c.l.b16 %v1091
    %v1131 = vunpack.c.l.b16 %v1092
    %v1132 = vunpack.c.l.b16 %v1093
    %v1133 = vunpack.c.l.b16 %v1094
    %v1134 = vunpack.c.l.b16 %v1095
    %v1135 = vunpack.c.l.b16 %v1096
    %v1136 = vunpack.c.l.b16 %v1097
    %v1137 = vunpack.c.l.b16 %v1098
    %v1138 = vunpack.c.l.b16 %v1099
    %v1139 = vunpack.c.l.b16 %v1100
    %v1140 = vunpack.c.l.b16 %v1101
    %v1141 = vunpack.c.l.b16 %v1102
    %v1142 = vunpack.c.l.b16 %v1103
    %v1143 = vunpack.c.l.b16 %v1104
    %v1144 = vunpack.c.l.b16 %v1105
    %v1145 = vunpack.c.l.b16 %v1106
    %v1146 = vpack.c.b16 %v1131, %v1130
    %v1147 = vpack.c.b16 %v1133, %v1132
    %v1148 = vpack.c.b16 %v1135, %v1134
    %v1149 = vpack.c.b16 %v1137, %v1136
    %v1150 = vpack.c.b16 %v1139, %v1138
    %v1151 = vpack.c.b16 %v1141, %v1140
    %v1152 = vpack.c.b16 %v1143, %v1142
    %v1153 = vpack.c.b16 %v1145, %v1144
    %1162 = vmatprep.subr.bf16.mxu0 0
    %1163 = vmatpush1.bf16.msra.mxu0 %v1146
    %1164 = vmatprep.subr.bf16.mxu0 0
    %1165 = vmatpush1.bf16.msra.mxu0 %v1147
    %1166 = vmatprep.subr.bf16.mxu0 0
    %1167 = vmatpush1.bf16.msra.mxu0 %v1148
    %1168 = vmatprep.subr.bf16.mxu0 0
    %1169 = vmatpush1.bf16.msra.mxu0 %v1149
    %1170 = vmatprep.subr.bf16.mxu0 0
    %1171 = vmatpush1.bf16.msra.mxu0 %v1150
    %1172 = vmatprep.subr.bf16.mxu0 0
    %1173 = vmatpush1.bf16.msra.mxu0 %v1151
    %1174 = vmatprep.subr.bf16.mxu0 0
    %1175 = vmatpush1.bf16.msra.mxu0 %v1152
    %1176 = vmatprep.subr.bf16.mxu0 0
    %1177 = vmatpush1.bf16.msra.mxu0 %v1153
    %1178 = vmatprep.subr.bf16.mxu0 0
    %1179 = vmatpush1.bf16.msra.mxu0 0
    %1180 = vmatprep.subr.bf16.mxu0 0
    %1181 = vmatpush1.bf16.msra.mxu0 0
    %1182 = vmatprep.subr.bf16.mxu0 0
    %1183 = vmatpush1.bf16.msra.mxu0 0
    %1184 = vmatprep.subr.bf16.mxu0 0
    %1185 = vmatpush1.bf16.msra.mxu0 0
    %1186 = vmatprep.subr.bf16.mxu0 0
    %1187 = vmatpush1.bf16.msra.mxu0 0
    %1188 = vmatprep.subr.bf16.mxu0 0
    %1189 = vmatpush1.bf16.msra.mxu0 0
    %1190 = vmatprep.subr.bf16.mxu0 0
    %1191 = vmatpush1.bf16.msra.mxu0 0
    %1192 = vmatprep.subr.bf16.mxu0 0
    %1193 = vmatpush1.bf16.msra.mxu0 0
    %1194 = vmatprep.mubr.bf16.mxu0 0
    %1195 = vmatmul.mubr.bf16.gmra.mrb[0].mxu0 %v1090
    %v1196 = vpop.f32.mrb[0].mxu0
    %v1197 = vadd.f32 %v1112, %v1196
    %v1198 = vpop.f32.mrb[0].mxu0
    %v1199 = vpop.f32.mrb[0].mxu0
    %v1200 = vadd.f32 %v1112, %v1199
    %v1201 = vpop.f32.mrb[0].mxu0
    %1202 = vdwg.mxu0
    %v1203 = vld [vmem:[#allocation23] sm:$0x1]
    %v1204 = vld [vmem:[#allocation25] sm:$0x1]
    %v1205 = vadd.f32 %v517, %v1197
    %v1206 = vadd.f32 %v518, %v1200
    %1207 = vadd.xlane.f32.xlu0 %v1205
    %v1208 = vpop.xlane.xlu0 %1207
    %1209 = vadd.xlane.f32.xlu0 %v1206
    %v1210 = vpop.xlane.xlu0 %1209
    %v1211 = vmul.f32 %v1208, 0.03125
    %v1212 = vmul.f32 %v1210, 0.03125
    %v1213 = vmul.f32 %v1205, %v1205
    %v1214 = vmul.f32 %v1206, %v1206
    %1215 = vadd.xlane.f32.xlu0 %v1213
    %v1216 = vpop.xlane.xlu0 %1215
    %1217 = vadd.xlane.f32.xlu0 %v1214
    %v1218 = vpop.xlane.xlu0 %1217
    %v1219 = vmul.f32 %v1216, 0.03125
    %v1220 = vmul.f32 %v1218, 0.03125
    %v1221 = vmul.f32 %v1211, %v1211
    %v1222 = vmul.f32 %v1212, %v1212
    %v1223 = vsub.f32 %v1219, %v1221
    %v1224 = vsub.f32 %v1220, %v1222
    %v1225 = vsub.f32 %v1205, %v1211
    %v1226 = vsub.f32 %v1206, %v1212
    %v1227 = vadd.f32 %v1223, 1e-05
    %v1228 = vadd.f32 %v1224, 1e-05
    %v1229 = vrsqrt.pop %v1227
    %v1230 = vrsqrt.pop %v1228
    %v1231 = vmul.f32 %v1225, %v1229
    %v1232 = vmul.f32 %v1226, %v1230
    %v1234 = vlaneseq
    %v1235 = vshrl.u32 %v1234, 7
    %v1236 = vsub.s32 0, %v1235
    %v1237 = vrot.slane %v1203, %v1236
    %v1239 = vmul.f32 %v1231, %v1237
    %v1240 = vmul.f32 %v1232, %v1237
    %v1242 = vlaneseq
    %v1243 = vshrl.u32 %v1242, 7
    %v1244 = vsub.s32 0, %v1243
    %v1245 = vrot.slane %v1204, %v1244
    %v1247 = vadd.f32 %v1239, %v1245
    %v1248 = vadd.f32 %v1240, %v1245
    %v1249 = vpack.c.bf16 %v1248, %v1247
    %v1250 = vld [vmem:[#allocation26] sm:$0xf]
    %v1251 = vld [vmem:[#allocation26 + $0x4] sm:$0xf]
    %v1252 = vld [vmem:[#allocation26 + $0x8] sm:$0xf]
    %v1253 = vld [vmem:[#allocation26 + $0xc] sm:$0xf]
    %v1254 = vld [vmem:[#allocation26 + $0x10] sm:$0xf]
    %v1255 = vld [vmem:[#allocation26 + $0x14] sm:$0xf]
    %v1256 = vld [vmem:[#allocation26 + $0x18] sm:$0xf]
    %v1257 = vld [vmem:[#allocation26 + $0x1c] sm:$0xf]
    %v1258 = vld [vmem:[#allocation26 + $0x20] sm:$0xf]
    %v1259 = vld [vmem:[#allocation26 + $0x24] sm:$0xf]
    %v1260 = vld [vmem:[#allocation26 + $0x28] sm:$0xf]
    %v1261 = vld [vmem:[#allocation26 + $0x2c] sm:$0xf]
    %v1262 = vld [vmem:[#allocation26 + $0x30] sm:$0xf]
    %v1263 = vld [vmem:[#allocation26 + $0x34] sm:$0xf]
    %v1264 = vld [vmem:[#allocation26 + $0x38] sm:$0xf]
    %v1265 = vld [vmem:[#allocation26 + $0x3c] sm:$0xf]
    %v1266 = vld [vmem:[#allocation32] sm:$0x1]
    %v1268 = vlaneseq
    %v1269 = vshrl.u32 %v1268, 7
    %v1270 = vsub.s32 0, %v1269
    %v1271 = vrot.slane %v1266, %v1270
    %v1289 = vunpack.c.l.b16 %v1250
    %v1290 = vunpack.c.l.b16 %v1251
    %v1291 = vunpack.c.l.b16 %v1252
    %v1292 = vunpack.c.l.b16 %v1253
    %v1293 = vunpack.c.l.b16 %v1254
    %v1294 = vunpack.c.l.b16 %v1255
    %v1295 = vunpack.c.l.b16 %v1256
    %v1296 = vunpack.c.l.b16 %v1257
    %v1297 = vunpack.c.l.b16 %v1258
    %v1298 = vunpack.c.l.b16 %v1259
    %v1299 = vunpack.c.l.b16 %v1260
    %v1300 = vunpack.c.l.b16 %v1261
    %v1301 = vunpack.c.l.b16 %v1262
    %v1302 = vunpack.c.l.b16 %v1263
    %v1303 = vunpack.c.l.b16 %v1264
    %v1304 = vunpack.c.l.b16 %v1265
    %v1305 = vpack.c.b16 %v1290, %v1289
    %v1306 = vpack.c.b16 %v1292, %v1291
    %v1307 = vpack.c.b16 %v1294, %v1293
    %v1308 = vpack.c.b16 %v1296, %v1295
    %v1309 = vpack.c.b16 %v1298, %v1297
    %v1310 = vpack.c.b16 %v1300, %v1299
    %v1311 = vpack.c.b16 %v1302, %v1301
    %v1312 = vpack.c.b16 %v1304, %v1303
    %1321 = vmatprep.subr.bf16.mxu0 0
    %1322 = vmatpush1.bf16.msra.mxu0 %v1305
    %1323 = vmatprep.subr.bf16.mxu0 0
    %1324 = vmatpush1.bf16.msra.mxu0 %v1306
    %1325 = vmatprep.subr.bf16.mxu0 0
    %1326 = vmatpush1.bf16.msra.mxu0 %v1307
    %1327 = vmatprep.subr.bf16.mxu0 0
    %1328 = vmatpush1.bf16.msra.mxu0 %v1308
    %1329 = vmatprep.subr.bf16.mxu0 0
    %1330 = vmatpush1.bf16.msra.mxu0 %v1309
    %1331 = vmatprep.subr.bf16.mxu0 0
    %1332 = vmatpush1.bf16.msra.mxu0 %v1310
    %1333 = vmatprep.subr.bf16.mxu0 0
    %1334 = vmatpush1.bf16.msra.mxu0 %v1311
    %1335 = vmatprep.subr.bf16.mxu0 0
    %1336 = vmatpush1.bf16.msra.mxu0 %v1312
    %1337 = vmatprep.subr.bf16.mxu0 0
    %1338 = vmatpush1.bf16.msra.mxu0 0
    %1339 = vmatprep.subr.bf16.mxu0 0
    %1340 = vmatpush1.bf16.msra.mxu0 0
    %1341 = vmatprep.subr.bf16.mxu0 0
    %1342 = vmatpush1.bf16.msra.mxu0 0
    %1343 = vmatprep.subr.bf16.mxu0 0
    %1344 = vmatpush1.bf16.msra.mxu0 0
    %1345 = vmatprep.subr.bf16.mxu0 0
    %1346 = vmatpush1.bf16.msra.mxu0 0
    %1347 = vmatprep.subr.bf16.mxu0 0
    %1348 = vmatpush1.bf16.msra.mxu0 0
    %1349 = vmatprep.subr.bf16.mxu0 0
    %1350 = vmatpush1.bf16.msra.mxu0 0
    %1351 = vmatprep.subr.bf16.mxu0 0
    %1352 = vmatpush1.bf16.msra.mxu0 0
    %1353 = vmatprep.mubr.bf16.mxu0 0
    %1354 = vmatmul.mubr.bf16.gmra.mrb[0].mxu0 %v1249
    %v1355 = vpop.f32.mrb[0].mxu0
    %v1356 = vadd.f32 %v1271, %v1355
    %v1357 = vpop.f32.mrb[0].mxu0
    %v1358 = vpop.f32.mrb[0].mxu0
    %v1359 = vadd.f32 %v1271, %v1358
    %v1360 = vpop.f32.mrb[0].mxu0
    %1361 = vdwg.mxu0
    %v1362 = vmul.f32 %v1356, 0.17677669
    %v1363 = vmul.f32 %v1359, 0.17677669
    %v1364 = vpack.c.bf16 %v520, %v519
    %v1365 = vld [vmem:[#allocation28] sm:$0xf]
    %v1366 = vld [vmem:[#allocation28 + $0x4] sm:$0xf]
    %v1367 = vld [vmem:[#allocation28 + $0x8] sm:$0xf]
    %v1368 = vld [vmem:[#allocation28 + $0xc] sm:$0xf]
    %v1369 = vld [vmem:[#allocation28 + $0x10] sm:$0xf]
    %v1370 = vld [vmem:[#allocation28 + $0x14] sm:$0xf]
    %v1371 = vld [vmem:[#allocation28 + $0x18] sm:$0xf]
    %v1372 = vld [vmem:[#allocation28 + $0x1c] sm:$0xf]
    %v1373 = vld [vmem:[#allocation28 + $0x20] sm:$0xf]
    %v1374 = vld [vmem:[#allocation28 + $0x24] sm:$0xf]
    %v1375 = vld [vmem:[#allocation28 + $0x28] sm:$0xf]
    %v1376 = vld [vmem:[#allocation28 + $0x2c] sm:$0xf]
    %v1377 = vld [vmem:[#allocation28 + $0x30] sm:$0xf]
    %v1378 = vld [vmem:[#allocation28 + $0x34] sm:$0xf]
    %v1379 = vld [vmem:[#allocation28 + $0x38] sm:$0xf]
    %v1380 = vld [vmem:[#allocation28 + $0x3c] sm:$0xf]
    %v1381 = vld [vmem:[#allocation34] sm:$0x1]
    %v1383 = vlaneseq
    %v1384 = vshrl.u32 %v1383, 7
    %v1385 = vsub.s32 0, %v1384
    %v1386 = vrot.slane %v1381, %v1385
    %v1404 = vunpack.c.l.b16 %v1365
    %v1405 = vunpack.c.l.b16 %v1366
    %v1406 = vunpack.c.l.b16 %v1367
    %v1407 = vunpack.c.l.b16 %v1368
    %v1408 = vunpack.c.l.b16 %v1369
    %v1409 = vunpack.c.l.b16 %v1370
    %v1410 = vunpack.c.l.b16 %v1371
    %v1411 = vunpack.c.l.b16 %v1372
    %v1412 = vunpack.c.l.b16 %v1373
    %v1413 = vunpack.c.l.b16 %v1374
    %v1414 = vunpack.c.l.b16 %v1375
    %v1415 = vunpack.c.l.b16 %v1376
    %v1416 = vunpack.c.l.b16 %v1377
    %v1417 = vunpack.c.l.b16 %v1378
    %v1418 = vunpack.c.l.b16 %v1379
    %v1419 = vunpack.c.l.b16 %v1380
    %v1420 = vpack.c.b16 %v1405, %v1404
    %v1421 = vpack.c.b16 %v1407, %v1406
    %v1422 = vpack.c.b16 %v1409, %v1408
    %v1423 = vpack.c.b16 %v1411, %v1410
    %v1424 = vpack.c.b16 %v1413, %v1412
    %v1425 = vpack.c.b16 %v1415, %v1414
    %v1426 = vpack.c.b16 %v1417, %v1416
    %v1427 = vpack.c.b16 %v1419, %v1418
    %1436 = vmatprep.subr.bf16.mxu0 0
    %1437 = vmatpush1.bf16.msra.mxu0 %v1420
    %1438 = vmatprep.subr.bf16.mxu0 0
    %1439 = vmatpush1.bf16.msra.mxu0 %v1421
    %1440 = vmatprep.subr.bf16.mxu0 0
    %1441 = vmatpush1.bf16.msra.mxu0 %v1422
    %1442 = vmatprep.subr.bf16.mxu0 0
    %1443 = vmatpush1.bf16.msra.mxu0 %v1423
    %1444 = vmatprep.subr.bf16.mxu0 0
    %1445 = vmatpush1.bf16.msra.mxu0 %v1424
    %1446 = vmatprep.subr.bf16.mxu0 0
    %1447 = vmatpush1.bf16.msra.mxu0 %v1425
    %1448 = vmatprep.subr.bf16.mxu0 0
    %1449 = vmatpush1.bf16.msra.mxu0 %v1426
    %1450 = vmatprep.subr.bf16.mxu0 0
    %1451 = vmatpush1.bf16.msra.mxu0 %v1427
    %1452 = vmatprep.subr.bf16.mxu0 0
    %1453 = vmatpush1.bf16.msra.mxu0 0
    %1454 = vmatprep.subr.bf16.mxu0 0
    %1455 = vmatpush1.bf16.msra.mxu0 0
    %1456 = vmatprep.subr.bf16.mxu0 0
    %1457 = vmatpush1.bf16.msra.mxu0 0
    %1458 = vmatprep.subr.bf16.mxu0 0
    %1459 = vmatpush1.bf16.msra.mxu0 0
    %1460 = vmatprep.subr.bf16.mxu0 0
    %1461 = vmatpush1.bf16.msra.mxu0 0
    %1462 = vmatprep.subr.bf16.mxu0 0
    %1463 = vmatpush1.bf16.msra.mxu0 0
    %1464 = vmatprep.subr.bf16.mxu0 0
    %1465 = vmatpush1.bf16.msra.mxu0 0
    %1466 = vmatprep.subr.bf16.mxu0 0
    %1467 = vmatpush1.bf16.msra.mxu0 0
    %1468 = vmatprep.mubr.bf16.mxu0 0
    %1469 = vmatmul.mubr.bf16.gmra.mrb[0].mxu0 %v1364
    %v1470 = vpop.f32.mrb[0].mxu0
    %v1471 = vadd.f32 %v1386, %v1470
    %v1472 = vpop.f32.mrb[0].mxu0
    %v1473 = vpop.f32.mrb[0].mxu0
    %v1474 = vadd.f32 %v1386, %v1473
    %v1475 = vpop.f32.mrb[0].mxu0
    %1476 = vdwg.mxu0
    %v1477 = vld [vmem:[#allocation29] sm:$0xf]
    %v1478 = vld [vmem:[#allocation29 + $0x4] sm:$0xf]
    %v1479 = vld [vmem:[#allocation29 + $0x8] sm:$0xf]
    %v1480 = vld [vmem:[#allocation29 + $0xc] sm:$0xf]
    %v1481 = vld [vmem:[#allocation29 + $0x10] sm:$0xf]
    %v1482 = vld [vmem:[#allocation29 + $0x14] sm:$0xf]
    %v1483 = vld [vmem:[#allocation29 + $0x18] sm:$0xf]
    %v1484 = vld [vmem:[#allocation29 + $0x1c] sm:$0xf]
    %v1485 = vld [vmem:[#allocation29 + $0x20] sm:$0xf]
    %v1486 = vld [vmem:[#allocation29 + $0x24] sm:$0xf]
    %v1487 = vld [vmem:[#allocation29 + $0x28] sm:$0xf]
    %v1488 = vld [vmem:[#allocation29 + $0x2c] sm:$0xf]
    %v1489 = vld [vmem:[#allocation29 + $0x30] sm:$0xf]
    %v1490 = vld [vmem:[#allocation29 + $0x34] sm:$0xf]
    %v1491 = vld [vmem:[#allocation29 + $0x38] sm:$0xf]
    %v1492 = vld [vmem:[#allocation29 + $0x3c] sm:$0xf]
    %v1493 = vld [vmem:[#allocation35] sm:$0x1]
    %v1495 = vlaneseq
    %v1496 = vshrl.u32 %v1495, 7
    %v1497 = vsub.s32 0, %v1496
    %v1498 = vrot.slane %v1493, %v1497
    %v1516 = vunpack.c.l.b16 %v1477
    %v1517 = vunpack.c.l.b16 %v1478
    %v1518 = vunpack.c.l.b16 %v1479
    %v1519 = vunpack.c.l.b16 %v1480
    %v1520 = vunpack.c.l.b16 %v1481
    %v1521 = vunpack.c.l.b16 %v1482
    %v1522 = vunpack.c.l.b16 %v1483
    %v1523 = vunpack.c.l.b16 %v1484
    %v1524 = vunpack.c.l.b16 %v1485
    %v1525 = vunpack.c.l.b16 %v1486
    %v1526 = vunpack.c.l.b16 %v1487
    %v1527 = vunpack.c.l.b16 %v1488
    %v1528 = vunpack.c.l.b16 %v1489
    %v1529 = vunpack.c.l.b16 %v1490
    %v1530 = vunpack.c.l.b16 %v1491
    %v1531 = vunpack.c.l.b16 %v1492
    %v1532 = vpack.c.b16 %v1517, %v1516
    %v1533 = vpack.c.b16 %v1519, %v1518
    %v1534 = vpack.c.b16 %v1521, %v1520
    %v1535 = vpack.c.b16 %v1523, %v1522
    %v1536 = vpack.c.b16 %v1525, %v1524
    %v1537 = vpack.c.b16 %v1527, %v1526
    %v1538 = vpack.c.b16 %v1529, %v1528
    %v1539 = vpack.c.b16 %v1531, %v1530
    %1548 = vmatprep.subr.bf16.mxu0 0
    %1549 = vmatpush1.bf16.msra.mxu0 %v1532
    %1550 = vmatprep.subr.bf16.mxu0 0
    %1551 = vmatpush1.bf16.msra.mxu0 %v1533
    %1552 = vmatprep.subr.bf16.mxu0 0
    %1553 = vmatpush1.bf16.msra.mxu0 %v1534
    %1554 = vmatprep.subr.bf16.mxu0 0
    %1555 = vmatpush1.bf16.msra.mxu0 %v1535
    %1556 = vmatprep.subr.bf16.mxu0 0
    %1557 = vmatpush1.bf16.msra.mxu0 %v1536
    %1558 = vmatprep.subr.bf16.mxu0 0
    %1559 = vmatpush1.bf16.msra.mxu0 %v1537
    %1560 = vmatprep.subr.bf16.mxu0 0
    %1561 = vmatpush1.bf16.msra.mxu0 %v1538
    %1562 = vmatprep.subr.bf16.mxu0 0
    %1563 = vmatpush1.bf16.msra.mxu0 %v1539
    %1564 = vmatprep.subr.bf16.mxu0 0
    %1565 = vmatpush1.bf16.msra.mxu0 0
    %1566 = vmatprep.subr.bf16.mxu0 0
    %1567 = vmatpush1.bf16.msra.mxu0 0
    %1568 = vmatprep.subr.bf16.mxu0 0
    %1569 = vmatpush1.bf16.msra.mxu0 0
    %1570 = vmatprep.subr.bf16.mxu0 0
    %1571 = vmatpush1.bf16.msra.mxu0 0
    %1572 = vmatprep.subr.bf16.mxu0 0
    %1573 = vmatpush1.bf16.msra.mxu0 0
    %1574 = vmatprep.subr.bf16.mxu0 0
    %1575 = vmatpush1.bf16.msra.mxu0 0
    %1576 = vmatprep.subr.bf16.mxu0 0
    %1577 = vmatpush1.bf16.msra.mxu0 0
    %1578 = vmatprep.subr.bf16.mxu0 0
    %1579 = vmatpush1.bf16.msra.mxu0 0
    %1580 = vmatprep.mubr.bf16.mxu0 0
    %1581 = vmatmul.mubr.bf16.gmra.mrb[0].mxu0 %v1364
    %v1582 = vpop.f32.mrb[0].mxu0
    %v1583 = vadd.f32 %v1498, %v1582
    %v1584 = vpop.f32.mrb[0].mxu0
    %v1585 = vpop.f32.mrb[0].mxu0
    %v1586 = vadd.f32 %v1498, %v1585
    %v1587 = vpop.f32.mrb[0].mxu0
    %1588 = vdwg.mxu0
    %v1589 = vpack.c.bf16 %v1362, %v1362
    %v1590 = vpack.c.bf16 %v1363, %v1363
    %v1591 = vpack.c.bf16 %v1471, %v1471
    %v1592 = vpack.c.bf16 %v1474, %v1474
    %1593 = vmatprep.subr.bf16.mxu0 0
    %1594 = vmatpush1.bf16.xpose.msra.mxu0 %v1591
    %1595 = vmatprep.subr.bf16.mxu0 0
    %1596 = vmatpush1.bf16.xpose.msra.mxu0 0
    %1597 = vmatprep.subr.bf16.mxu0 0
    %1598 = vmatpush1.bf16.xpose.msra.mxu0 0
    %1599 = vmatprep.subr.bf16.mxu0 0
    %1600 = vmatpush1.bf16.xpose.msra.mxu0 0
    %1601 = vmatprep.subr.bf16.mxu0 0
    %1602 = vmatpush1.bf16.xpose.msra.mxu0 0
    %1603 = vmatprep.subr.bf16.mxu0 0
    %1604 = vmatpush1.bf16.xpose.msra.mxu0 0
    %1605 = vmatprep.subr.bf16.mxu0 0
    %1606 = vmatpush1.bf16.xpose.msra.mxu0 0
    %1607 = vmatprep.subr.bf16.mxu0 0
    %1608 = vmatpush1.bf16.xpose.msra.mxu0 0
    %1609 = vmatprep.subr.bf16.mxu0 0
    %1610 = vmatpush1.bf16.xpose.msra.mxu0 0
    %1611 = vmatprep.subr.bf16.mxu0 0
    %1612 = vmatpush1.bf16.xpose.msra.mxu0 0
    %1613 = vmatprep.subr.bf16.mxu0 0
    %1614 = vmatpush1.bf16.xpose.msra.mxu0 0
    %1615 = vmatprep.subr.bf16.mxu0 0
    %1616 = vmatpush1.bf16.xpose.msra.mxu0 0
    %1617 = vmatprep.subr.bf16.mxu0 0
    %1618 = vmatpush1.bf16.xpose.msra.mxu0 0
    %1619 = vmatprep.subr.bf16.mxu0 0
    %1620 = vmatpush1.bf16.xpose.msra.mxu0 0
    %1621 = vmatprep.subr.bf16.mxu0 0
    %1622 = vmatpush1.bf16.xpose.msra.mxu0 0
    %1623 = vmatprep.subr.bf16.mxu0 0
    %1624 = vmatpush1.bf16.xpose.msra.mxu0 0
    %1625 = vmatprep.mubr.bf16.mxu0 0
    %1626 = vmatmul.mubr.bf16.gmra.mrb[0].mxu0 %v1589
    %v1627 = vpop.f32.mrb[0].mxu0
    %v1628 = vadd.f32 0.0, %v1627
    %v1629 = vpop.f32.mrb[0].mxu0
    %v1630 = vpop.f32.mrb[0].mxu0
    %v1631 = vpop.f32.mrb[0].mxu0
    %1632 = vdwg.mxu0
    %1633 = vmatprep.subr.bf16.mxu0 0
    %1634 = vmatpush1.bf16.xpose.msra.mxu0 %v1592
    %1635 = vmatprep.subr.bf16.mxu0 0
    %1636 = vmatpush1.bf16.xpose.msra.mxu0 0
    %1637 = vmatprep.subr.bf16.mxu0 0
    %1638 = vmatpush1.bf16.xpose.msra.mxu0 0
    %1639 = vmatprep.subr.bf16.mxu0 0
    %1640 = vmatpush1.bf16.xpose.msra.mxu0 0
    %1641 = vmatprep.subr.bf16.mxu0 0
    %1642 = vmatpush1.bf16.xpose.msra.mxu0 0
    %1643 = vmatprep.subr.bf16.mxu0 0
    %1644 = vmatpush1.bf16.xpose.msra.mxu0 0
    %1645 = vmatprep.subr.bf16.mxu0 0
    %1646 = vmatpush1.bf16.xpose.msra.mxu0 0
    %1647 = vmatprep.subr.bf16.mxu0 0
    %1648 = vmatpush1.bf16.xpose.msra.mxu0 0
    %1649 = vmatprep.subr.bf16.mxu0 0
    %1650 = vmatpush1.bf16.xpose.msra.mxu0 0
    %1651 = vmatprep.subr.bf16.mxu0 0
    %1652 = vmatpush1.bf16.xpose.msra.mxu0 0
    %1653 = vmatprep.subr.bf16.mxu0 0
    %1654 = vmatpush1.bf16.xpose.msra.mxu0 0
    %1655 = vmatprep.subr.bf16.mxu0 0
    %1656 = vmatpush1.bf16.xpose.msra.mxu0 0
    %1657 = vmatprep.subr.bf16.mxu0 0
    %1658 = vmatpush1.bf16.xpose.msra.mxu0 0
    %1659 = vmatprep.subr.bf16.mxu0 0
    %1660 = vmatpush1.bf16.xpose.msra.mxu0 0
    %1661 = vmatprep.subr.bf16.mxu0 0
    %1662 = vmatpush1.bf16.xpose.msra.mxu0 0
    %1663 = vmatprep.subr.bf16.mxu0 0
    %1664 = vmatpush1.bf16.xpose.msra.mxu0 0
    %1665 = vmatprep.mubr.bf16.mxu0 0
    %1666 = vmatmul.mubr.bf16.gmra.mrb[0].mxu0 %v1590
    %v1667 = vpop.f32.mrb[0].mxu0
    %v1668 = vadd.f32 0.0, %v1667
    %v1669 = vpop.f32.mrb[0].mxu0
    %v1670 = vpop.f32.mrb[0].mxu0
    %v1671 = vpop.f32.mrb[0].mxu0
    %1672 = vdwg.mxu0
    %vm1673 = vcmp.gt.f32.partialorder %v523, 0.0
    %vm1674 = vcmp.gt.f32.partialorder %v524, 0.0
    %v1675 = vsel %vm1673, 1, 0
    %v1676 = vsel %vm1674, 1, 0
    %v1677 = vlaneseq
    %v1678 = vshrl.u32 %v1677, 7
    %v1679 = vsub.s32 0, %v1678
    %v1680 = vrot.slane %v1675, %v1679
    %v1681 = vlaneseq
    %v1682 = vshrl.u32 %v1681, 7
    %v1683 = vsub.s32 0, %v1682
    %v1684 = vrot.slane %v1676, %v1683
    %vm1685 = vcmp.eq.s32.totalorder %v1680, 1
    %vm1686 = vcmp.eq.s32.totalorder %v1684, 1
    %v1687 = vsel %vm1685, %v1628, -1e+09
    %v1688 = vsel %vm1686, %v1668, -1e+09
    %v1689 = vsel %vm970, %v1687, -inf
    %1690 = vmax.xlane.f32.xlu0 %v1689
    %v1691 = vpop.xlane.xlu0 %1690
    %v1692 = vsel %vm970, %v1688, -inf
    %1693 = vmax.xlane.f32.xlu0 %v1692
    %v1694 = vpop.xlane.xlu0 %1693
    %v1695 = vsub.f32 %v1687, %v1691
    %v1696 = vsub.f32 %v1688, %v1694
    %v1697 = vmul.f32 %v1695, 1.442695
    %v1698 = vpow.pop %v1697
    %v1699 = vmul.f32 %v1696, 1.442695
    %v1700 = vpow.pop %v1699
    %v1701 = vsel %vm970, %v1698, 0.0
    %1702 = vadd.xlane.f32.xlu0 %v1701
    %v1703 = vpop.xlane.xlu0 %1702
    %v1704 = vsel %vm970, %v1700, 0.0
    %1705 = vadd.xlane.f32.xlu0 %v1704
    %v1706 = vpop.xlane.xlu0 %1705
    %v1707 = vrcp.pop %v1703
    %v1708 = vrcp.pop %v1706
    %v1709 = vmul.f32 %v1698, %v1707
    %v1710 = vmul.f32 %v1700, %v1708
    %v1711 = vpack.c.bf16 %v1709, %v1709
    %v1712 = vpack.c.bf16 %v1710, %v1710
    %v1713 = vpack.c.bf16 %v1583, %v1583
    %v1714 = vpack.c.bf16 %v1586, %v1586
    %v1716 = vsel %vm970, %v1711, 0
    %v1719 = vsel %vm1000, %v1713, 0
    %1721 = vmatprep.subr.bf16.mxu0 0
    %1722 = vmatpush1.bf16.msra.mxu0 %v1719
    %1723 = vmatprep.subr.bf16.mxu0 0
    %1724 = vmatpush1.bf16.msra.mxu0 0
    %1725 = vmatprep.subr.bf16.mxu0 0
    %1726 = vmatpush1.bf16.msra.mxu0 0
    %1727 = vmatprep.subr.bf16.mxu0 0
    %1728 = vmatpush1.bf16.msra.mxu0 0
    %1729 = vmatprep.subr.bf16.mxu0 0
    %1730 = vmatpush1.bf16.msra.mxu0 0
    %1731 = vmatprep.subr.bf16.mxu0 0
    %1732 = vmatpush1.bf16.msra.mxu0 0
    %1733 = vmatprep.subr.bf16.mxu0 0
    %1734 = vmatpush1.bf16.msra.mxu0 0
    %1735 = vmatprep.subr.bf16.mxu0 0
    %1736 = vmatpush1.bf16.msra.mxu0 0
    %1737 = vmatprep.subr.bf16.mxu0 0
    %1738 = vmatpush1.bf16.msra.mxu0 0
    %1739 = vmatprep.subr.bf16.mxu0 0
    %1740 = vmatpush1.bf16.msra.mxu0 0
    %1741 = vmatprep.subr.bf16.mxu0 0
    %1742 = vmatpush1.bf16.msra.mxu0 0
    %1743 = vmatprep.subr.bf16.mxu0 0
    %1744 = vmatpush1.bf16.msra.mxu0 0
    %1745 = vmatprep.subr.bf16.mxu0 0
    %1746 = vmatpush1.bf16.msra.mxu0 0
    %1747 = vmatprep.subr.bf16.mxu0 0
    %1748 = vmatpush1.bf16.msra.mxu0 0
    %1749 = vmatprep.subr.bf16.mxu0 0
    %1750 = vmatpush1.bf16.msra.mxu0 0
    %1751 = vmatprep.subr.bf16.mxu0 0
    %1752 = vmatpush1.bf16.msra.mxu0 0
    %1753 = vmatprep.mubr.bf16.mxu0 0
    %1754 = vmatmul.mubr.bf16.gmra.mrb[0].mxu0 %v1716
    %v1755 = vpop.f32.mrb[0].mxu0
    %v1756 = vadd.f32 0.0, %v1755
    %v1757 = vpop.f32.mrb[0].mxu0
    %v1758 = vpop.f32.mrb[0].mxu0
    %v1759 = vpop.f32.mrb[0].mxu0
    %1760 = vdwg.mxu0
    %v1762 = vsel %vm970, %v1712, 0
    %v1765 = vsel %vm1000, %v1714, 0
    %1767 = vmatprep.subr.bf16.mxu0 0
    %1768 = vmatpush1.bf16.msra.mxu0 %v1765
    %1769 = vmatprep.subr.bf16.mxu0 0
    %1770 = vmatpush1.bf16.msra.mxu0 0
    %1771 = vmatprep.subr.bf16.mxu0 0
    %1772 = vmatpush1.bf16.msra.mxu0 0
    %1773 = vmatprep.subr.bf16.mxu0 0
    %1774 = vmatpush1.bf16.msra.mxu0 0
    %1775 = vmatprep.subr.bf16.mxu0 0
    %1776 = vmatpush1.bf16.msra.mxu0 0
    %1777 = vmatprep.subr.bf16.mxu0 0
    %1778 = vmatpush1.bf16.msra.mxu0 0
    %1779 = vmatprep.subr.bf16.mxu0 0
    %1780 = vmatpush1.bf16.msra.mxu0 0
    %1781 = vmatprep.subr.bf16.mxu0 0
    %1782 = vmatpush1.bf16.msra.mxu0 0
    %1783 = vmatprep.subr.bf16.mxu0 0
    %1784 = vmatpush1.bf16.msra.mxu0 0
    %1785 = vmatprep.subr.bf16.mxu0 0
    %1786 = vmatpush1.bf16.msra.mxu0 0
    %1787 = vmatprep.subr.bf16.mxu0 0
    %1788 = vmatpush1.bf16.msra.mxu0 0
    %1789 = vmatprep.subr.bf16.mxu0 0
    %1790 = vmatpush1.bf16.msra.mxu0 0
    %1791 = vmatprep.subr.bf16.mxu0 0
    %1792 = vmatpush1.bf16.msra.mxu0 0
    %1793 = vmatprep.subr.bf16.mxu0 0
    %1794 = vmatpush1.bf16.msra.mxu0 0
    %1795 = vmatprep.subr.bf16.mxu0 0
    %1796 = vmatpush1.bf16.msra.mxu0 0
    %1797 = vmatprep.subr.bf16.mxu0 0
    %1798 = vmatpush1.bf16.msra.mxu0 0
    %1799 = vmatprep.mubr.bf16.mxu0 0
    %1800 = vmatmul.mubr.bf16.gmra.mrb[0].mxu0 %v1762
    %v1801 = vpop.f32.mrb[0].mxu0
    %v1802 = vadd.f32 0.0, %v1801
    %v1803 = vpop.f32.mrb[0].mxu0
    %v1804 = vpop.f32.mrb[0].mxu0
    %v1805 = vpop.f32.mrb[0].mxu0
    %1806 = vdwg.mxu0
    %v1807 = vpack.c.bf16 %v1802, %v1756
    %v1808 = vld [vmem:[#allocation31] sm:$0xf]
    %v1809 = vld [vmem:[#allocation31 + $0x4] sm:$0xf]
    %v1810 = vld [vmem:[#allocation31 + $0x8] sm:$0xf]
    %v1811 = vld [vmem:[#allocation31 + $0xc] sm:$0xf]
    %v1812 = vld [vmem:[#allocation31 + $0x10] sm:$0xf]
    %v1813 = vld [vmem:[#allocation31 + $0x14] sm:$0xf]
    %v1814 = vld [vmem:[#allocation31 + $0x18] sm:$0xf]
    %v1815 = vld [vmem:[#allocation31 + $0x1c] sm:$0xf]
    %v1816 = vld [vmem:[#allocation31 + $0x20] sm:$0xf]
    %v1817 = vld [vmem:[#allocation31 + $0x24] sm:$0xf]
    %v1818 = vld [vmem:[#allocation31 + $0x28] sm:$0xf]
    %v1819 = vld [vmem:[#allocation31 + $0x2c] sm:$0xf]
    %v1820 = vld [vmem:[#allocation31 + $0x30] sm:$0xf]
    %v1821 = vld [vmem:[#allocation31 + $0x34] sm:$0xf]
    %v1822 = vld [vmem:[#allocation31 + $0x38] sm:$0xf]
    %v1823 = vld [vmem:[#allocation31 + $0x3c] sm:$0xf]
    %v1824 = vld [vmem:[#allocation37] sm:$0x1]
    %v1826 = vlaneseq
    %v1827 = vshrl.u32 %v1826, 7
    %v1828 = vsub.s32 0, %v1827
    %v1829 = vrot.slane %v1824, %v1828
    %v1847 = vunpack.c.l.b16 %v1808
    %v1848 = vunpack.c.l.b16 %v1809
    %v1849 = vunpack.c.l.b16 %v1810
    %v1850 = vunpack.c.l.b16 %v1811
    %v1851 = vunpack.c.l.b16 %v1812
    %v1852 = vunpack.c.l.b16 %v1813
    %v1853 = vunpack.c.l.b16 %v1814
    %v1854 = vunpack.c.l.b16 %v1815
    %v1855 = vunpack.c.l.b16 %v1816
    %v1856 = vunpack.c.l.b16 %v1817
    %v1857 = vunpack.c.l.b16 %v1818
    %v1858 = vunpack.c.l.b16 %v1819
    %v1859 = vunpack.c.l.b16 %v1820
    %v1860 = vunpack.c.l.b16 %v1821
    %v1861 = vunpack.c.l.b16 %v1822
    %v1862 = vunpack.c.l.b16 %v1823
    %v1863 = vpack.c.b16 %v1848, %v1847
    %v1864 = vpack.c.b16 %v1850, %v1849
    %v1865 = vpack.c.b16 %v1852, %v1851
    %v1866 = vpack.c.b16 %v1854, %v1853
    %v1867 = vpack.c.b16 %v1856, %v1855
    %v1868 = vpack.c.b16 %v1858, %v1857
    %v1869 = vpack.c.b16 %v1860, %v1859
    %v1870 = vpack.c.b16 %v1862, %v1861
    %1879 = vmatprep.subr.bf16.mxu0 0
    %1880 = vmatpush1.bf16.msra.mxu0 %v1863
    %1881 = vmatprep.subr.bf16.mxu0 0
    %1882 = vmatpush1.bf16.msra.mxu0 %v1864
    %1883 = vmatprep.subr.bf16.mxu0 0
    %1884 = vmatpush1.bf16.msra.mxu0 %v1865
    %1885 = vmatprep.subr.bf16.mxu0 0
    %1886 = vmatpush1.bf16.msra.mxu0 %v1866
    %1887 = vmatprep.subr.bf16.mxu0 0
    %1888 = vmatpush1.bf16.msra.mxu0 %v1867
    %1889 = vmatprep.subr.bf16.mxu0 0
    %1890 = vmatpush1.bf16.msra.mxu0 %v1868
    %1891 = vmatprep.subr.bf16.mxu0 0
    %1892 = vmatpush1.bf16.msra.mxu0 %v1869
    %1893 = vmatprep.subr.bf16.mxu0 0
    %1894 = vmatpush1.bf16.msra.mxu0 %v1870
    %1895 = vmatprep.subr.bf16.mxu0 0
    %1896 = vmatpush1.bf16.msra.mxu0 0
    %1897 = vmatprep.subr.bf16.mxu0 0
    %1898 = vmatpush1.bf16.msra.mxu0 0
    %1899 = vmatprep.subr.bf16.mxu0 0
    %1900 = vmatpush1.bf16.msra.mxu0 0
    %1901 = vmatprep.subr.bf16.mxu0 0
    %1902 = vmatpush1.bf16.msra.mxu0 0
    %1903 = vmatprep.subr.bf16.mxu0 0
    %1904 = vmatpush1.bf16.msra.mxu0 0
    %1905 = vmatprep.subr.bf16.mxu0 0
    %1906 = vmatpush1.bf16.msra.mxu0 0
    %1907 = vmatprep.subr.bf16.mxu0 0
    %1908 = vmatpush1.bf16.msra.mxu0 0
    %1909 = vmatprep.subr.bf16.mxu0 0
    %1910 = vmatpush1.bf16.msra.mxu0 0
    %1911 = vmatprep.mubr.bf16.mxu0 0
    %1912 = vmatmul.mubr.bf16.gmra.mrb[0].mxu0 %v1807
    %v1913 = vpop.f32.mrb[0].mxu0
    %v1914 = vadd.f32 %v1829, %v1913
    %v1915 = vpop.f32.mrb[0].mxu0
    %v1916 = vpop.f32.mrb[0].mxu0
    %v1917 = vadd.f32 %v1829, %v1916
    %v1918 = vpop.f32.mrb[0].mxu0
    %1919 = vdwg.mxu0
    %v1920 = vld [vmem:[#allocation38] sm:$0x1]
    %v1921 = vld [vmem:[#allocation40] sm:$0x1]
    %v1922 = vadd.f32 %v1247, %v1914
    %v1923 = vadd.f32 %v1248, %v1917
    %1924 = vadd.xlane.f32.xlu0 %v1922
    %v1925 = vpop.xlane.xlu0 %1924
    %1926 = vadd.xlane.f32.xlu0 %v1923
    %v1927 = vpop.xlane.xlu0 %1926
    %v1928 = vmul.f32 %v1925, 0.03125
    %v1929 = vmul.f32 %v1927, 0.03125
    %v1930 = vmul.f32 %v1922, %v1922
    %v1931 = vmul.f32 %v1923, %v1923
    %1932 = vadd.xlane.f32.xlu0 %v1930
    %v1933 = vpop.xlane.xlu0 %1932
    %1934 = vadd.xlane.f32.xlu0 %v1931
    %v1935 = vpop.xlane.xlu0 %1934
    %v1936 = vmul.f32 %v1933, 0.03125
    %v1937 = vmul.f32 %v1935, 0.03125
    %v1938 = vmul.f32 %v1928, %v1928
    %v1939 = vmul.f32 %v1929, %v1929
    %v1940 = vsub.f32 %v1936, %v1938
    %v1941 = vsub.f32 %v1937, %v1939
    %v1942 = vsub.f32 %v1922, %v1928
    %v1943 = vsub.f32 %v1923, %v1929
    %v1944 = vadd.f32 %v1940, 1e-05
    %v1945 = vadd.f32 %v1941, 1e-05
    %v1946 = vrsqrt.pop %v1944
    %v1947 = vrsqrt.pop %v1945
    %v1948 = vmul.f32 %v1942, %v1946
    %v1949 = vmul.f32 %v1943, %v1947
    %v1951 = vlaneseq
    %v1952 = vshrl.u32 %v1951, 7
    %v1953 = vsub.s32 0, %v1952
    %v1954 = vrot.slane %v1920, %v1953
    %v1956 = vmul.f32 %v1948, %v1954
    %v1957 = vmul.f32 %v1949, %v1954
    %v1959 = vlaneseq
    %v1960 = vshrl.u32 %v1959, 7
    %v1961 = vsub.s32 0, %v1960
    %v1962 = vrot.slane %v1921, %v1961
    %v1964 = vadd.f32 %v1956, %v1962
    %v1965 = vadd.f32 %v1957, %v1962
    %v1966 = vpack.c.bf16 %v1965, %v1964
    %v1967 = vld [vmem:[#allocation41] sm:$0xf]
    %v1968 = vld [vmem:[#allocation41 + $0x4] sm:$0xf]
    %v1969 = vld [vmem:[#allocation41 + $0x8] sm:$0xf]
    %v1970 = vld [vmem:[#allocation41 + $0xc] sm:$0xf]
    %v1971 = vld [vmem:[#allocation41 + $0x10] sm:$0xf]
    %v1972 = vld [vmem:[#allocation41 + $0x14] sm:$0xf]
    %v1973 = vld [vmem:[#allocation41 + $0x18] sm:$0xf]
    %v1974 = vld [vmem:[#allocation41 + $0x1c] sm:$0xf]
    %v1975 = vld [vmem:[#allocation41 + $0x20] sm:$0xf]
    %v1976 = vld [vmem:[#allocation41 + $0x24] sm:$0xf]
    %v1977 = vld [vmem:[#allocation41 + $0x28] sm:$0xf]
    %v1978 = vld [vmem:[#allocation41 + $0x2c] sm:$0xf]
    %v1979 = vld [vmem:[#allocation41 + $0x30] sm:$0xf]
    %v1980 = vld [vmem:[#allocation41 + $0x34] sm:$0xf]
    %v1981 = vld [vmem:[#allocation41 + $0x38] sm:$0xf]
    %v1982 = vld [vmem:[#allocation41 + $0x3c] sm:$0xf]
    %v1983 = vld [vmem:[#allocation43] sm:$0x1]
    %v1985 = vlaneseq
    %v1986 = vshrl.u32 %v1985, 7
    %v1987 = vsub.s32 0, %v1986
    %v1988 = vrot.slane %v1983, %v1987
    %v2006 = vunpack.c.l.b16 %v1967
    %v2007 = vunpack.c.l.b16 %v1968
    %v2008 = vunpack.c.l.b16 %v1969
    %v2009 = vunpack.c.l.b16 %v1970
    %v2010 = vunpack.c.l.b16 %v1971
    %v2011 = vunpack.c.l.b16 %v1972
    %v2012 = vunpack.c.l.b16 %v1973
    %v2013 = vunpack.c.l.b16 %v1974
    %v2014 = vunpack.c.l.b16 %v1975
    %v2015 = vunpack.c.l.b16 %v1976
    %v2016 = vunpack.c.l.b16 %v1977
    %v2017 = vunpack.c.l.b16 %v1978
    %v2018 = vunpack.c.l.b16 %v1979
    %v2019 = vunpack.c.l.b16 %v1980
    %v2020 = vunpack.c.l.b16 %v1981
    %v2021 = vunpack.c.l.b16 %v1982
    %v2022 = vpack.c.b16 %v2007, %v2006
    %v2023 = vpack.c.b16 %v2009, %v2008
    %v2024 = vpack.c.b16 %v2011, %v2010
    %v2025 = vpack.c.b16 %v2013, %v2012
    %v2026 = vpack.c.b16 %v2015, %v2014
    %v2027 = vpack.c.b16 %v2017, %v2016
    %v2028 = vpack.c.b16 %v2019, %v2018
    %v2029 = vpack.c.b16 %v2021, %v2020
    %2038 = vmatprep.subr.bf16.mxu0 0
    %2039 = vmatpush1.bf16.msra.mxu0 %v2022
    %2040 = vmatprep.subr.bf16.mxu0 0
    %2041 = vmatpush1.bf16.msra.mxu0 %v2023
    %2042 = vmatprep.subr.bf16.mxu0 0
    %2043 = vmatpush1.bf16.msra.mxu0 %v2024
    %2044 = vmatprep.subr.bf16.mxu0 0
    %2045 = vmatpush1.bf16.msra.mxu0 %v2025
    %2046 = vmatprep.subr.bf16.mxu0 0
    %2047 = vmatpush1.bf16.msra.mxu0 %v2026
    %2048 = vmatprep.subr.bf16.mxu0 0
    %2049 = vmatpush1.bf16.msra.mxu0 %v2027
    %2050 = vmatprep.subr.bf16.mxu0 0
    %2051 = vmatpush1.bf16.msra.mxu0 %v2028
    %2052 = vmatprep.subr.bf16.mxu0 0
    %2053 = vmatpush1.bf16.msra.mxu0 %v2029
    %2054 = vmatprep.subr.bf16.mxu0 0
    %2055 = vmatpush1.bf16.msra.mxu0 0
    %2056 = vmatprep.subr.bf16.mxu0 0
    %2057 = vmatpush1.bf16.msra.mxu0 0
    %2058 = vmatprep.subr.bf16.mxu0 0
    %2059 = vmatpush1.bf16.msra.mxu0 0
    %2060 = vmatprep.subr.bf16.mxu0 0
    %2061 = vmatpush1.bf16.msra.mxu0 0
    %2062 = vmatprep.subr.bf16.mxu0 0
    %2063 = vmatpush1.bf16.msra.mxu0 0
    %2064 = vmatprep.subr.bf16.mxu0 0
    %2065 = vmatpush1.bf16.msra.mxu0 0
    %2066 = vmatprep.subr.bf16.mxu0 0
    %2067 = vmatpush1.bf16.msra.mxu0 0
    %2068 = vmatprep.subr.bf16.mxu0 0
    %2069 = vmatpush1.bf16.msra.mxu0 0
    %2070 = vmatprep.mubr.bf16.mxu0 0
    %2071 = vmatmul.mubr.bf16.gmra.mrb[0].mxu0 %v1966
    %v2072 = vpop.f32.mrb[0].mxu0
    %v2073 = vadd.f32 %v1988, %v2072
    %v2074 = vpop.f32.mrb[0].mxu0
    %v2075 = vpop.f32.mrb[0].mxu0
    %v2076 = vadd.f32 %v1988, %v2075
    %v2077 = vpop.f32.mrb[0].mxu0
    %2078 = vdwg.mxu0
    %v2079 = vmax.f32 %v2073, 0.0
    %v2080 = vmax.f32 %v2076, 0.0
    %v2081 = vpack.c.bf16 %v2080, %v2079
    %v2082 = vld [vmem:[#allocation44] sm:$0xf]
    %v2083 = vld [vmem:[#allocation44 + $0x4] sm:$0xf]
    %v2084 = vld [vmem:[#allocation44 + $0x8] sm:$0xf]
    %v2085 = vld [vmem:[#allocation44 + $0xc] sm:$0xf]
    %v2086 = vld [vmem:[#allocation44 + $0x10] sm:$0xf]
    %v2087 = vld [vmem:[#allocation44 + $0x14] sm:$0xf]
    %v2088 = vld [vmem:[#allocation44 + $0x18] sm:$0xf]
    %v2089 = vld [vmem:[#allocation44 + $0x1c] sm:$0xf]
    %v2090 = vld [vmem:[#allocation44 + $0x20] sm:$0xf]
    %v2091 = vld [vmem:[#allocation44 + $0x24] sm:$0xf]
    %v2092 = vld [vmem:[#allocation44 + $0x28] sm:$0xf]
    %v2093 = vld [vmem:[#allocation44 + $0x2c] sm:$0xf]
    %v2094 = vld [vmem:[#allocation44 + $0x30] sm:$0xf]
    %v2095 = vld [vmem:[#allocation44 + $0x34] sm:$0xf]
    %v2096 = vld [vmem:[#allocation44 + $0x38] sm:$0xf]
    %v2097 = vld [vmem:[#allocation44 + $0x3c] sm:$0xf]
    %v2098 = vld [vmem:[#allocation46] sm:$0x1]
    %v2100 = vlaneseq
    %v2101 = vshrl.u32 %v2100, 7
    %v2102 = vsub.s32 0, %v2101
    %v2103 = vrot.slane %v2098, %v2102
    %v2121 = vunpack.c.l.b16 %v2082
    %v2122 = vunpack.c.l.b16 %v2083
    %v2123 = vunpack.c.l.b16 %v2084
    %v2124 = vunpack.c.l.b16 %v2085
    %v2125 = vunpack.c.l.b16 %v2086
    %v2126 = vunpack.c.l.b16 %v2087
    %v2127 = vunpack.c.l.b16 %v2088
    %v2128 = vunpack.c.l.b16 %v2089
    %v2129 = vunpack.c.l.b16 %v2090
    %v2130 = vunpack.c.l.b16 %v2091
    %v2131 = vunpack.c.l.b16 %v2092
    %v2132 = vunpack.c.l.b16 %v2093
    %v2133 = vunpack.c.l.b16 %v2094
    %v2134 = vunpack.c.l.b16 %v2095
    %v2135 = vunpack.c.l.b16 %v2096
    %v2136 = vunpack.c.l.b16 %v2097
    %v2137 = vpack.c.b16 %v2122, %v2121
    %v2138 = vpack.c.b16 %v2124, %v2123
    %v2139 = vpack.c.b16 %v2126, %v2125
    %v2140 = vpack.c.b16 %v2128, %v2127
    %v2141 = vpack.c.b16 %v2130, %v2129
    %v2142 = vpack.c.b16 %v2132, %v2131
    %v2143 = vpack.c.b16 %v2134, %v2133
    %v2144 = vpack.c.b16 %v2136, %v2135
    %2153 = vmatprep.subr.bf16.mxu0 0
    %2154 = vmatpush1.bf16.msra.mxu0 %v2137
    %2155 = vmatprep.subr.bf16.mxu0 0
    %2156 = vmatpush1.bf16.msra.mxu0 %v2138
    %2157 = vmatprep.subr.bf16.mxu0 0
    %2158 = vmatpush1.bf16.msra.mxu0 %v2139
    %2159 = vmatprep.subr.bf16.mxu0 0
    %2160 = vmatpush1.bf16.msra.mxu0 %v2140
    %2161 = vmatprep.subr.bf16.mxu0 0
    %2162 = vmatpush1.bf16.msra.mxu0 %v2141
    %2163 = vmatprep.subr.bf16.mxu0 0
    %2164 = vmatpush1.bf16.msra.mxu0 %v2142
    %2165 = vmatprep.subr.bf16.mxu0 0
    %2166 = vmatpush1.bf16.msra.mxu0 %v2143
    %2167 = vmatprep.subr.bf16.mxu0 0
    %2168 = vmatpush1.bf16.msra.mxu0 %v2144
    %2169 = vmatprep.subr.bf16.mxu0 0
    %2170 = vmatpush1.bf16.msra.mxu0 0
    %2171 = vmatprep.subr.bf16.mxu0 0
    %2172 = vmatpush1.bf16.msra.mxu0 0
    %2173 = vmatprep.subr.bf16.mxu0 0
    %2174 = vmatpush1.bf16.msra.mxu0 0
    %2175 = vmatprep.subr.bf16.mxu0 0
    %2176 = vmatpush1.bf16.msra.mxu0 0
    %2177 = vmatprep.subr.bf16.mxu0 0
    %2178 = vmatpush1.bf16.msra.mxu0 0
    %2179 = vmatprep.subr.bf16.mxu0 0
    %2180 = vmatpush1.bf16.msra.mxu0 0
    %2181 = vmatprep.subr.bf16.mxu0 0
    %2182 = vmatpush1.bf16.msra.mxu0 0
    %2183 = vmatprep.subr.bf16.mxu0 0
    %2184 = vmatpush1.bf16.msra.mxu0 0
    %2185 = vmatprep.mubr.bf16.mxu0 0
    %2186 = vmatmul.mubr.bf16.gmra.mrb[0].mxu0 %v2081
    %v2187 = vpop.f32.mrb[0].mxu0
    %v2188 = vadd.f32 %v2103, %v2187
    %v2189 = vpop.f32.mrb[0].mxu0
    %v2190 = vpop.f32.mrb[0].mxu0
    %v2191 = vadd.f32 %v2103, %v2190
    %v2192 = vpop.f32.mrb[0].mxu0
    %2193 = vdwg.mxu0
    %v2194 = vld [vmem:[#allocation47] sm:$0x1]
    %v2195 = vld [vmem:[#allocation49] sm:$0x1]
    %v2196 = vadd.f32 %v1964, %v2188
    %v2197 = vadd.f32 %v1965, %v2191
    %2198 = vadd.xlane.f32.xlu0 %v2196
    %v2199 = vpop.xlane.xlu0 %2198
    %2200 = vadd.xlane.f32.xlu0 %v2197
    %v2201 = vpop.xlane.xlu0 %2200
    %v2202 = vmul.f32 %v2199, 0.03125
    %v2203 = vmul.f32 %v2201, 0.03125
    %v2204 = vmul.f32 %v2196, %v2196
    %v2205 = vmul.f32 %v2197, %v2197
    %2206 = vadd.xlane.f32.xlu0 %v2204
    %v2207 = vpop.xlane.xlu0 %2206
    %2208 = vadd.xlane.f32.xlu0 %v2205
    %v2209 = vpop.xlane.xlu0 %2208
    %v2210 = vmul.f32 %v2207, 0.03125
    %v2211 = vmul.f32 %v2209, 0.03125
    %v2212 = vmul.f32 %v2202, %v2202
    %v2213 = vmul.f32 %v2203, %v2203
    %v2214 = vsub.f32 %v2210, %v2212
    %v2215 = vsub.f32 %v2211, %v2213
    %v2216 = vsub.f32 %v2196, %v2202
    %v2217 = vsub.f32 %v2197, %v2203
    %v2218 = vadd.f32 %v2214, 1e-05
    %v2219 = vadd.f32 %v2215, 1e-05
    %v2220 = vrsqrt.pop %v2218
    %v2221 = vrsqrt.pop %v2219
    %v2222 = vmul.f32 %v2216, %v2220
    %v2223 = vmul.f32 %v2217, %v2221
    %v2225 = vlaneseq
    %v2226 = vshrl.u32 %v2225, 7
    %v2227 = vsub.s32 0, %v2226
    %v2228 = vrot.slane %v2194, %v2227
    %v2230 = vmul.f32 %v2222, %v2228
    %v2231 = vmul.f32 %v2223, %v2228
    %v2233 = vlaneseq
    %v2234 = vshrl.u32 %v2233, 7
    %v2235 = vsub.s32 0, %v2234
    %v2236 = vrot.slane %v2195, %v2235
    %v2238 = vadd.f32 %v2230, %v2236
    %v2239 = vadd.f32 %v2231, %v2236
    %2240 = vst [vmem:[#allocation50] sm:$0xff] %v2238
    %2241 = vst [vmem:[#allocation50 + $0x8] sm:$0xff] %v2239
    // Predicated region
    $region250: #{tpu_custom_call.1} parent=1 // pred_check
      _
    $region251: #{tpu_custom_call.1} parent=1 // pred_check_branch
      %2243 = sbr.rel (0) target = $region253
    $region252: #{tpu_custom_call.1} parent=1 // pred_region
      %s2245 = ssub.s32 256, 256
      %2246 = vsyncadd [#allocation4], %s2245
      %s2247 = sshll.u32 [#allocation50], 4
      %s2248 = int_to_ptr.vmem [resolvable:$true] %s2247
      %2253 = dma.vmem_to_hbm [thread:$0]  %s2248, 256, %s63, [#allocation4], 128, 128, 8
    $region253: #{tpu_custom_call.1} parent=1 // pred_fallthru
      _
    // Predicated region
    $region254: #{tpu_custom_call.1} parent=1 // pred_check
      _
    $region255: #{tpu_custom_call.1} parent=1 // pred_check_branch
      %2255 = sbr.rel (0) target = $region257
    $region256: #{tpu_custom_call.1} parent=1 // pred_region
      %2256 = dma.done [#allocation4], 256
    $region257: #{tpu_custom_call.1} parent=1 // pred_fallthru
      _
    %2257 = vsyncpa [#allocation3], 1
    %2258 = vsyncpa [#allocation6], 1
    %2259 = vsyncpa [#allocation9], 1
    %2260 = vsyncpa [#allocation12], 1
    %2261 = vsyncpa [#allocation15], 1
    %2262 = vsyncpa [#allocation18], 1
    %2263 = vsyncpa [#allocation21], 1
    %2264 = vsyncpa [#allocation24], 1
    %2265 = vsyncpa [#allocation27], 1
    %2266 = vsyncpa [#allocation30], 1
    %2267 = vsyncpa [#allocation33], 1
    %2268 = vsyncpa [#allocation36], 1
    %2269 = vsyncpa [#allocation39], 1
    %2270 = vsyncpa [#allocation42], 1
    %2271 = vsyncpa [#allocation45], 1
    %2272 = vsyncpa [#allocation48], 1
    %2273 = vsyncpa [#allocation4], 1

// kernel: tpu_custom_call.1
$region0: #{tpu_custom_call.1}
  #allocation0 [shape = 'u32[]', space=smem, size = 0x4, offset = 0x4, fixed_abs, tag = 'smem constant byte address 0x4 - core index']
  #allocation1 [shape = 'u32[144,128]{1,0:T(1,128)}', space=vmem, size = 0x12000, scoped, tag = 'internal scratch']
  %s0 = inlined_call_operand.smem [shape: u32[32], index: -1, kind: input, shape index: {}]
  %s1 = sld [smem:[%s0]]
  %s2 = scalar_lea.smem %s0, 1
  %s3 = sld [smem:[%s2]]
  %s4 = scalar_lea.smem %s0, 2
  %s5 = sld [smem:[%s4]]
  %s6 = scalar_lea.smem %s0, 3
  %s7 = sld [smem:[%s6]]
  %s8 = scalar_lea.smem %s0, 4
  %s9 = sld [smem:[%s8]]
  %s10 = scalar_lea.smem %s0, 5
  %s11 = sld [smem:[%s10]]
  %s12 = scalar_lea.smem %s0, 6
  %s13 = sld [smem:[%s12]]
  %s14 = scalar_lea.smem %s0, 7
  %s15 = sld [smem:[%s14]]
  %s16 = scalar_lea.smem %s0, 8
  %s17 = sld [smem:[%s16]]
  %s18 = scalar_lea.smem %s0, 9
  %s19 = sld [smem:[%s18]]
  %s20 = scalar_lea.smem %s0, 10
  %s21 = sld [smem:[%s20]]
  %s22 = scalar_lea.smem %s0, 11
  %s23 = sld [smem:[%s22]]
  %s24 = scalar_lea.smem %s0, 12
  %s25 = sld [smem:[%s24]]
  %s26 = scalar_lea.smem %s0, 13
  %s27 = sld [smem:[%s26]]
  %s28 = scalar_lea.smem %s0, 14
  %s29 = sld [smem:[%s28]]
  %s30 = scalar_lea.smem %s0, 15
  %s31 = sld [smem:[%s30]]
  %s32 = scalar_lea.smem %s0, 16
  %s33 = sld [smem:[%s32]]
  %s34 = scalar_lea.smem %s0, 17
  %s35 = sld [smem:[%s34]]
  %s36 = scalar_lea.smem %s0, 18
  %s37 = sld [smem:[%s36]]
  %s38 = scalar_lea.smem %s0, 19
  %s39 = sld [smem:[%s38]]
  %s40 = scalar_lea.smem %s0, 20
  %s41 = sld [smem:[%s40]]
  %s42 = scalar_lea.smem %s0, 21
  %s43 = sld [smem:[%s42]]
  %s44 = scalar_lea.smem %s0, 22
  %s45 = sld [smem:[%s44]]
  %s46 = scalar_lea.smem %s0, 23
  %s47 = sld [smem:[%s46]]
  %s48 = scalar_lea.smem %s0, 24
  %s49 = sld [smem:[%s48]]
  %s50 = scalar_lea.smem %s0, 25
  %s51 = sld [smem:[%s50]]
  %s52 = scalar_lea.smem %s0, 26
  %s53 = sld [smem:[%s52]]
  %s54 = scalar_lea.smem %s0, 27
  %s55 = sld [smem:[%s54]]
  %s56 = scalar_lea.smem %s0, 28
  %s57 = sld [smem:[%s56]]
  %s58 = scalar_lea.smem %s0, 29
  %s59 = sld [smem:[%s58]]
  %s60 = scalar_lea.smem %s0, 30
  %s61 = sld [smem:[%s60]]
  %s62 = scalar_lea.smem %s0, 31
  %s63 = sld [smem:[%s62]]
  %s64 = sld [smem:[#allocation0]]
  $region258: #{tpu_custom_call.1} parent=0
    _
  %s66 = ssub.s32 1, %s64
  %s67 = scalar_select 0, %s66, %s64
  $region1: #{tpu_custom_call.1} parent=0
    #allocation2 [shape = 'u8[8192]{0}', space=vmem, size = 0x2000, scoped, tag = 'input window, operand 0, single buffered']
    #allocation3 [shape = 's32[1]{0}', space=sflag, size = 0x4, scoped, tag = 'scoped memory for tpu_custom_call.1']
    #allocation4 [shape = 's32[1]{0}', space=sflag, size = 0x4, scoped, tag = 'scoped memory for tpu_custom_call.1']
    #allocation5 [shape = 'u8[1024]{0}', space=vmem, size = 0x400, scoped, tag = 'input window, operand 1, single buffered']
    #allocation6 [shape = 's32[1]{0}', space=sflag, size = 0x4, scoped, tag = 'scoped memory for tpu_custom_call.1']
    #allocation7 [shape = 'u8[8192]{0}', space=vmem, size = 0x2000, scoped, tag = 'input window, operand 2, single buffered']
    #allocation8 [shape = 'u8[1024]{0}', space=vmem, size = 0x400, scoped, tag = 'input window, operand 3, single buffered']
    #allocation9 [shape = 's32[1]{0}', space=sflag, size = 0x4, scoped, tag = 'scoped memory for tpu_custom_call.1']
    #allocation10 [shape = 'u8[4096]{0}', space=vmem, size = 0x1000, scoped, tag = 'input window, operand 4, single buffered']
    #allocation11 [shape = 'u8[32768]{0}', space=vmem, size = 0x8000, scoped, tag = 'input window, operand 5, single buffered']
    #allocation12 [shape = 's32[1]{0}', space=sflag, size = 0x4, scoped, tag = 'scoped memory for tpu_custom_call.1']
    #allocation13 [shape = 'u8[32768]{0}', space=vmem, size = 0x8000, scoped, tag = 'input window, operand 6, single buffered']
    #allocation14 [shape = 'u8[32768]{0}', space=vmem, size = 0x8000, scoped, tag = 'input window, operand 7, single buffered']
    #allocation15 [shape = 's32[1]{0}', space=sflag, size = 0x4, scoped, tag = 'scoped memory for tpu_custom_call.1']
    #allocation16 [shape = 'u8[32768]{0}', space=vmem, size = 0x8000, scoped, tag = 'input window, operand 8, single buffered']
    #allocation17 [shape = 'u8[512]{0}', space=vmem, size = 0x400, scoped, tag = 'input window, operand 9, single buffered']
    #allocation18 [shape = 's32[1]{0}', space=sflag, size = 0x4, scoped, tag = 'scoped memory for tpu_custom_call.1']
    #allocation19 [shape = 'u8[512]{0}', space=vmem, size = 0x400, scoped, tag = 'input window, operand 10, single buffered']
    #allocation20 [shape = 'u8[512]{0}', space=vmem, size = 0x400, scoped, tag = 'input window, operand 11, single buffered']
    #allocation21 [shape = 's32[1]{0}', space=sflag, size = 0x4, scoped, tag = 'scoped memory for tpu_custom_call.1']
    #allocation22 [shape = 'u8[512]{0}', space=vmem, size = 0x400, scoped, tag = 'input window, operand 12, single buffered']
    #allocation23 [shape = 'u8[512]{0}', space=vmem, size = 0x400, scoped, tag = 'input window, operand 13, single buffered']
    #allocation24 [shape = 's32[1]{0}', space=sflag, size = 0x4, scoped, tag = 'scoped memory for tpu_custom_call.1']
    #allocation25 [shape = 'u8[512]{0}', space=vmem, size = 0x400, scoped, tag = 'input window, operand 14, single buffered']
    #allocation26 [shape = 'u8[32768]{0}', space=vmem, size = 0x8000, scoped, tag = 'input window, operand 15, single buffered']
    #allocation27 [shape = 's32[1]{0}', space=sflag, size = 0x4, scoped, tag = 'scoped memory for tpu_custom_call.1']
    #allocation28 [shape = 'u8[32768]{0}', space=vmem, size = 0x8000, scoped, tag = 'input window, operand 16, single buffered']
    #allocation29 [shape = 'u8[32768]{0}', space=vmem, size = 0x8000, scoped, tag = 'input window, operand 17, single buffered']
    #allocation30 [shape = 's32[1]{0}', space=sflag, size = 0x4, scoped, tag = 'scoped memory for tpu_custom_call.1']
    #allocation31 [shape = 'u8[32768]{0}', space=vmem, size = 0x8000, scoped, tag = 'input window, operand 18, single buffered']
    #allocation32 [shape = 'u8[512]{0}', space=vmem, size = 0x400, scoped, tag = 'input window, operand 19, single buffered']
    #allocation33 [shape = 's32[1]{0}', space=sflag, size = 0x4, scoped, tag = 'scoped memory for tpu_custom_call.1']
    #allocation34 [shape = 'u8[512]{0}', space=vmem, size = 0x400, scoped, tag = 'input window, operand 20, single buffered']
    #allocation35 [shape = 'u8[512]{0}', space=vmem, size = 0x400, scoped, tag = 'input window, operand 21, single buffered']
    #allocation36 [shape = 's32[1]{0}', space=sflag, size = 0x4, scoped, tag = 'scoped memory for tpu_custom_call.1']
    #allocation37 [shape = 'u8[512]{0}', space=vmem, size = 0x400, scoped, tag = 'input window, operand 22, single buffered']
    #allocation38 [shape = 'u8[512]{0}', space=vmem, size = 0x400, scoped, tag = 'input window, operand 23, single buffered']
    #allocation39 [shape = 's32[1]{0}', space=sflag, size = 0x4, scoped, tag = 'scoped memory for tpu_custom_call.1']
    #allocation40 [shape = 'u8[512]{0}', space=vmem, size = 0x400, scoped, tag = 'input window, operand 24, single buffered']
    #allocation41 [shape = 'u8[32768]{0}', space=vmem, size = 0x8000, scoped, tag = 'input window, operand 25, single buffered']
    #allocation42 [shape = 's32[1]{0}', space=sflag, size = 0x4, scoped, tag = 'scoped memory for tpu_custom_call.1']
    #allocation43 [shape = 'u8[512]{0}', space=vmem, size = 0x400, scoped, tag = 'input window, operand 26, single buffered']
    #allocation44 [shape = 'u8[32768]{0}', space=vmem, size = 0x8000, scoped, tag = 'input window, operand 27, single buffered']
    #allocation45 [shape = 's32[1]{0}', space=sflag, size = 0x4, scoped, tag = 'scoped memory for tpu_custom_call.1']
    #allocation46 [shape = 'u8[512]{0}', space=vmem, size = 0x400, scoped, tag = 'input window, operand 28, single buffered']
    #allocation47 [shape = 'u8[512]{0}', space=vmem, size = 0x400, scoped, tag = 'input window, operand 29, single buffered']
    #allocation48 [shape = 's32[1]{0}', space=sflag, size = 0x4, scoped, tag = 'scoped memory for tpu_custom_call.1']
    #allocation49 [shape = 'u8[512]{0}', space=vmem, size = 0x400, scoped, tag = 'input window, operand 30, single buffered']
    #allocation50 [shape = 'u8[8192]{0}', space=vmem, size = 0x2000, scoped, tag = 'output window, operand 0, single buffered']
    %68 = vsyncpa [#allocation3], 0
    %69 = vsyncpa [#allocation6], 0
    %70 = vsyncpa [#allocation9], 0
    %71 = vsyncpa [#allocation12], 0
    %72 = vsyncpa [#allocation15], 0
    %73 = vsyncpa [#allocation18], 0
    %74 = vsyncpa [#allocation21], 0
    %75 = vsyncpa [#allocation24], 0
    %76 = vsyncpa [#allocation27], 0
    %77 = vsyncpa [#allocation30], 0
    %78 = vsyncpa [#allocation33], 0
    %79 = vsyncpa [#allocation36], 0
    %80 = vsyncpa [#allocation39], 0
    %81 = vsyncpa [#allocation42], 0
    %82 = vsyncpa [#allocation45], 0
    %83 = vsyncpa [#allocation48], 0
    %84 = vsyncpa [#allocation4], 0
    // Predicated region
    $region2: #{tpu_custom_call.1} parent=1 // pred_check
      _
    $region3: #{tpu_custom_call.1} parent=1 // pred_check_branch
      %86 = sbr.rel (0) target = $region5
    $region4: #{tpu_custom_call.1} parent=1 // pred_region
      %s88 = ssub.s32 256, 256
      %89 = vsyncadd [#allocation3], %s88
      %s90 = sshll.u32 [#allocation2], 4
      %s91 = int_to_ptr.vmem [resolvable:$true] %s90
      %96 = dma.hbm_to_vmem [thread:$0]  %s1, 256, %s91, [#allocation3], 128, 128, 8
    $region5: #{tpu_custom_call.1} parent=1 // pred_fallthru
      _
    // Predicated region
    $region6: #{tpu_custom_call.1} parent=1 // pred_check
      _
    $region7: #{tpu_custom_call.1} parent=1 // pred_check_branch
      %98 = sbr.rel (0) target = $region9
    $region8: #{tpu_custom_call.1} parent=1 // pred_region
      %s100 = ssub.s32 32, 32
      %101 = vsyncadd [#allocation6], %s100
      %s102 = sshll.u32 [#allocation5], 4
      %s103 = int_to_ptr.vmem [resolvable:$true] %s102
      %108 = dma.hbm_to_vmem [thread:$0]  %s3, 32, %s103, [#allocation6], 16, 16, 1
    $region9: #{tpu_custom_call.1} parent=1 // pred_fallthru
      _
    // Predicated region
    $region10: #{tpu_custom_call.1} parent=1 // pred_check
      _
    $region11: #{tpu_custom_call.1} parent=1 // pred_check_branch
      %110 = sbr.rel (0) target = $region13
    $region12: #{tpu_custom_call.1} parent=1 // pred_region
      %s112 = ssub.s32 256, 256
      %113 = vsyncadd [#allocation6], %s112
      %s114 = sshll.u32 [#allocation7], 4
      %s115 = int_to_ptr.vmem [resolvable:$true] %s114
      %120 = dma.hbm_to_vmem [thread:$0]  %s5, 256, %s115, [#allocation6], 128, 128, 8
    $region13: #{tpu_custom_call.1} parent=1 // pred_fallthru
      _
    // Predicated region
    $region14: #{tpu_custom_call.1} parent=1 // pred_check
      _
    $region15: #{tpu_custom_call.1} parent=1 // pred_check_branch
      %122 = sbr.rel (0) target = $region17
    $region16: #{tpu_custom_call.1} parent=1 // pred_region
      %s124 = ssub.s32 32, 32
      %125 = vsyncadd [#allocation9], %s124
      %s126 = sshll.u32 [#allocation8], 4
      %s127 = int_to_ptr.vmem [resolvable:$true] %s126
      %132 = dma.hbm_to_vmem [thread:$0]  %s7, 32, %s127, [#allocation9], 16, 16, 1
    $region17: #{tpu_custom_call.1} parent=1 // pred_fallthru
      _
    // Predicated region
    $region18: #{tpu_custom_call.1} parent=1 // pred_check
      _
    $region19: #{tpu_custom_call.1} parent=1 // pred_check_branch
      %134 = sbr.rel (0) target = $region21
    $region20: #{tpu_custom_call.1} parent=1 // pred_region
      %s136 = ssub.s32 128, 128
      %137 = vsyncadd [#allocation9], %s136
      %s139 = sshll.u32 [#allocation10], 4
      %s140 = int_to_ptr.vmem [resolvable:$true] %s139
      %142 = dma.hbm_to_vmem [thread:$0]  %s9, 128, %s140, [#allocation9]
    $region21: #{tpu_custom_call.1} parent=1 // pred_fallthru
      _
    // Predicated region
    $region22: #{tpu_custom_call.1} parent=1 // pred_check
      _
    $region23: #{tpu_custom_call.1} parent=1 // pred_check_branch
      %144 = sbr.rel (0) target = $region25
    $region24: #{tpu_custom_call.1} parent=1 // pred_region
      %s146 = ssub.s32 1024, 1024
      %147 = vsyncadd [#allocation12], %s146
      %s148 = sshll.u32 [#allocation11], 4
      %s149 = int_to_ptr.vmem [resolvable:$true] %s148
      %154 = dma.hbm_to_vmem [thread:$0]  %s11, 1024, %s149, [#allocation12], 64, 64, 4
    $region25: #{tpu_custom_call.1} parent=1 // pred_fallthru
      _
    // Predicated region
    $region26: #{tpu_custom_call.1} parent=1 // pred_check
      _
    $region27: #{tpu_custom_call.1} parent=1 // pred_check_branch
      %156 = sbr.rel (0) target = $region29
    $region28: #{tpu_custom_call.1} parent=1 // pred_region
      %s158 = ssub.s32 1024, 1024
      %159 = vsyncadd [#allocation12], %s158
      %s160 = sshll.u32 [#allocation13], 4
      %s161 = int_to_ptr.vmem [resolvable:$true] %s160
      %166 = dma.hbm_to_vmem [thread:$0]  %s13, 1024, %s161, [#allocation12], 64, 64, 4
    $region29: #{tpu_custom_call.1} parent=1 // pred_fallthru
      _
    // Predicated region
    $region30: #{tpu_custom_call.1} parent=1 // pred_check
      _
    $region31: #{tpu_custom_call.1} parent=1 // pred_check_branch
      %168 = sbr.rel (0) target = $region33
    $region32: #{tpu_custom_call.1} parent=1 // pred_region
      %s170 = ssub.s32 1024, 1024
      %171 = vsyncadd [#allocation15], %s170
      %s172 = sshll.u32 [#allocation14], 4
      %s173 = int_to_ptr.vmem [resolvable:$true] %s172
      %178 = dma.hbm_to_vmem [thread:$0]  %s15, 1024, %s173, [#allocation15], 64, 64, 4
    $region33: #{tpu_custom_call.1} parent=1 // pred_fallthru
      _
    // Predicated region
    $region34: #{tpu_custom_call.1} parent=1 // pred_check
      _
    $region35: #{tpu_custom_call.1} parent=1 // pred_check_branch
      %180 = sbr.rel (0) target = $region37
    $region36: #{tpu_custom_call.1} parent=1 // pred_region
      %s182 = ssub.s32 1024, 1024
      %183 = vsyncadd [#allocation15], %s182
      %s184 = sshll.u32 [#allocation16], 4
      %s185 = int_to_ptr.vmem [resolvable:$true] %s184
      %190 = dma.hbm_to_vmem [thread:$0]  %s17, 1024, %s185, [#allocation15], 64, 64, 4
    $region37: #{tpu_custom_call.1} parent=1 // pred_fallthru
      _
    // Predicated region
    $region38: #{tpu_custom_call.1} parent=1 // pred_check
      _
    $region39: #{tpu_custom_call.1} parent=1 // pred_check_branch
      %192 = sbr.rel (0) target = $region41
    $region40: #{tpu_custom_call.1} parent=1 // pred_region
      %s194 = ssub.s32 16, 16
      %195 = vsyncadd [#allocation18], %s194
      %s197 = sshll.u32 [#allocation17], 4
      %s198 = int_to_ptr.vmem [resolvable:$true] %s197
      %200 = dma.hbm_to_vmem [thread:$0]  %s19, 16, %s198, [#allocation18]
    $region41: #{tpu_custom_call.1} parent=1 // pred_fallthru
      _
    // Predicated region
    $region42: #{tpu_custom_call.1} parent=1 // pred_check
      _
    $region43: #{tpu_custom_call.1} parent=1 // pred_check_branch
      %202 = sbr.rel (0) target = $region45
    $region44: #{tpu_custom_call.1} parent=1 // pred_region
      %s204 = ssub.s32 16, 16
      %205 = vsyncadd [#allocation18], %s204
      %s207 = sshll.u32 [#allocation19], 4
      %s208 = int_to_ptr.vmem [resolvable:$true] %s207
      %210 = dma.hbm_to_vmem [thread:$0]  %s21, 16, %s208, [#allocation18]
    $region45: #{tpu_custom_call.1} parent=1 // pred_fallthru
      _
    // Predicated region
    $region46: #{tpu_custom_call.1} parent=1 // pred_check
      _
    $region47: #{tpu_custom_call.1} parent=1 // pred_check_branch
      %212 = sbr.rel (0) target = $region49
    $region48: #{tpu_custom_call.1} parent=1 // pred_region
      %s214 = ssub.s32 16, 16
      %215 = vsyncadd [#allocation21], %s214
      %s217 = sshll.u32 [#allocation20], 4
      %s218 = int_to_ptr.vmem [resolvable:$true] %s217
      %220 = dma.hbm_to_vmem [thread:$0]  %s23, 16, %s218, [#allocation21]
    $region49: #{tpu_custom_call.1} parent=1 // pred_fallthru
      _
    // Predicated region
    $region50: #{tpu_custom_call.1} parent=1 // pred_check
      _
    $region51: #{tpu_custom_call.1} parent=1 // pred_check_branch
      %222 = sbr.rel (0) target = $region53
    $region52: #{tpu_custom_call.1} parent=1 // pred_region
      %s224 = ssub.s32 16, 16
      %225 = vsyncadd [#allocation21], %s224
      %s227 = sshll.u32 [#allocation22], 4
      %s228 = int_to_ptr.vmem [resolvable:$true] %s227
      %230 = dma.hbm_to_vmem [thread:$0]  %s25, 16, %s228, [#allocation21]
    $region53: #{tpu_custom_call.1} parent=1 // pred_fallthru
      _
    // Predicated region
    $region54: #{tpu_custom_call.1} parent=1 // pred_check
      _
    $region55: #{tpu_custom_call.1} parent=1 // pred_check_branch
      %232 = sbr.rel (0) target = $region57
    $region56: #{tpu_custom_call.1} parent=1 // pred_region
      %s234 = ssub.s32 16, 16
      %235 = vsyncadd [#allocation24], %s234
      %s237 = sshll.u32 [#allocation23], 4
      %s238 = int_to_ptr.vmem [resolvable:$true] %s237
      %240 = dma.hbm_to_vmem [thread:$0]  %s27, 16, %s238, [#allocation24]
    $region57: #{tpu_custom_call.1} parent=1 // pred_fallthru
      _
    // Predicated region
    $region58: #{tpu_custom_call.1} parent=1 // pred_check
      _
    $region59: #{tpu_custom_call.1} parent=1 // pred_check_branch
      %242 = sbr.rel (0) target = $region61
    $region60: #{tpu_custom_call.1} parent=1 // pred_region
      %s244 = ssub.s32 16, 16
      %245 = vsyncadd [#allocation24], %s244
      %s247 = sshll.u32 [#allocation25], 4
      %s248 = int_to_ptr.vmem [resolvable:$true] %s247
      %250 = dma.hbm_to_vmem [thread:$0]  %s29, 16, %s248, [#allocation24]
    $region61: #{tpu_custom_call.1} parent=1 // pred_fallthru
      _
    // Predicated region
    $region62: #{tpu_custom_call.1} parent=1 // pred_check
      _
    $region63: #{tpu_custom_call.1} parent=1 // pred_check_branch
      %252 = sbr.rel (0) target = $region65
    $region64: #{tpu_custom_call.1} parent=1 // pred_region
      %s254 = ssub.s32 1024, 1024
      %255 = vsyncadd [#allocation27], %s254
      %s256 = sshll.u32 [#allocation26], 4
      %s257 = int_to_ptr.vmem [resolvable:$true] %s256
      %262 = dma.hbm_to_vmem [thread:$0]  %s31, 1024, %s257, [#allocation27], 64, 64, 4
    $region65: #{tpu_custom_call.1} parent=1 // pred_fallthru
      _
    // Predicated region
    $region66: #{tpu_custom_call.1} parent=1 // pred_check
      _
    $region67: #{tpu_custom_call.1} parent=1 // pred_check_branch
      %264 = sbr.rel (0) target = $region69
    $region68: #{tpu_custom_call.1} parent=1 // pred_region
      %s266 = ssub.s32 1024, 1024
      %267 = vsyncadd [#allocation27], %s266
      %s268 = sshll.u32 [#allocation28], 4
      %s269 = int_to_ptr.vmem [resolvable:$true] %s268
      %274 = dma.hbm_to_vmem [thread:$0]  %s33, 1024, %s269, [#allocation27], 64, 64, 4
    $region69: #{tpu_custom_call.1} parent=1 // pred_fallthru
      _
    // Predicated region
    $region70: #{tpu_custom_call.1} parent=1 // pred_check
      _
    $region71: #{tpu_custom_call.1} parent=1 // pred_check_branch
      %276 = sbr.rel (0) target = $region73
    $region72: #{tpu_custom_call.1} parent=1 // pred_region
      %s278 = ssub.s32 1024, 1024
      %279 = vsyncadd [#allocation30], %s278
      %s280 = sshll.u32 [#allocation29], 4
      %s281 = int_to_ptr.vmem [resolvable:$true] %s280
      %286 = dma.hbm_to_vmem [thread:$0]  %s35, 1024, %s281, [#allocation30], 64, 64, 4
    $region73: #{tpu_custom_call.1} parent=1 // pred_fallthru
      _
    // Predicated region
    $region74: #{tpu_custom_call.1} parent=1 // pred_check
      _
    $region75: #{tpu_custom_call.1} parent=1 // pred_check_branch
      %288 = sbr.rel (0) target = $region77
    $region76: #{tpu_custom_call.1} parent=1 // pred_region
      %s290 = ssub.s32 1024, 1024
      %291 = vsyncadd [#allocation30], %s290
      %s292 = sshll.u32 [#allocation31], 4
      %s293 = int_to_ptr.vmem [resolvable:$true] %s292
      %298 = dma.hbm_to_vmem [thread:$0]  %s37, 1024, %s293, [#allocation30], 64, 64, 4
    $region77: #{tpu_custom_call.1} parent=1 // pred_fallthru
      _
    // Predicated region
    $region78: #{tpu_custom_call.1} parent=1 // pred_check
      _
    $region79: #{tpu_custom_call.1} parent=1 // pred_check_branch
      %300 = sbr.rel (0) target = $region81
    $region80: #{tpu_custom_call.1} parent=1 // pred_region
      %s302 = ssub.s32 16, 16
      %303 = vsyncadd [#allocation33], %s302
      %s305 = sshll.u32 [#allocation32], 4
      %s306 = int_to_ptr.vmem [resolvable:$true] %s305
      %308 = dma.hbm_to_vmem [thread:$0]  %s39, 16, %s306, [#allocation33]
    $region81: #{tpu_custom_call.1} parent=1 // pred_fallthru
      _
    // Predicated region
    $region82: #{tpu_custom_call.1} parent=1 // pred_check
      _
    $region83: #{tpu_custom_call.1} parent=1 // pred_check_branch
      %310 = sbr.rel (0) target = $region85
    $region84: #{tpu_custom_call.1} parent=1 // pred_region
      %s312 = ssub.s32 16, 16
      %313 = vsyncadd [#allocation33], %s312
      %s315 = sshll.u32 [#allocation34], 4
      %s316 = int_to_ptr.vmem [resolvable:$true] %s315
      %318 = dma.hbm_to_vmem [thread:$0]  %s41, 16, %s316, [#allocation33]
    $region85: #{tpu_custom_call.1} parent=1 // pred_fallthru
      _
    // Predicated region
    $region86: #{tpu_custom_call.1} parent=1 // pred_check
      _
    $region87: #{tpu_custom_call.1} parent=1 // pred_check_branch
      %320 = sbr.rel (0) target = $region89
    $region88: #{tpu_custom_call.1} parent=1 // pred_region
      %s322 = ssub.s32 16, 16
      %323 = vsyncadd [#allocation36], %s322
      %s325 = sshll.u32 [#allocation35], 4
      %s326 = int_to_ptr.vmem [resolvable:$true] %s325
      %328 = dma.hbm_to_vmem [thread:$0]  %s43, 16, %s326, [#allocation36]
    $region89: #{tpu_custom_call.1} parent=1 // pred_fallthru
      _
    // Predicated region
    $region90: #{tpu_custom_call.1} parent=1 // pred_check
      _
    $region91: #{tpu_custom_call.1} parent=1 // pred_check_branch
      %330 = sbr.rel (0) target = $region93
    $region92: #{tpu_custom_call.1} parent=1 // pred_region
      %s332 = ssub.s32 16, 16
      %333 = vsyncadd [#allocation36], %s332
      %s335 = sshll.u32 [#allocation37], 4
      %s336 = int_to_ptr.vmem [resolvable:$true] %s335
      %338 = dma.hbm_to_vmem [thread:$0]  %s45, 16, %s336, [#allocation36]
    $region93: #{tpu_custom_call.1} parent=1 // pred_fallthru
      _
    // Predicated region
    $region94: #{tpu_custom_call.1} parent=1 // pred_check
      _
    $region95: #{tpu_custom_call.1} parent=1 // pred_check_branch
      %340 = sbr.rel (0) target = $region97
    $region96: #{tpu_custom_call.1} parent=1 // pred_region
      %s342 = ssub.s32 16, 16
      %343 = vsyncadd [#allocation39], %s342
      %s345 = sshll.u32 [#allocation38], 4
      %s346 = int_to_ptr.vmem [resolvable:$true] %s345
      %348 = dma.hbm_to_vmem [thread:$0]  %s47, 16, %s346, [#allocation39]
    $region97: #{tpu_custom_call.1} parent=1 // pred_fallthru
      _
    // Predicated region
    $region98: #{tpu_custom_call.1} parent=1 // pred_check
      _
    $region99: #{tpu_custom_call.1} parent=1 // pred_check_branch
      %350 = sbr.rel (0) target = $region101
    $region100: #{tpu_custom_call.1} parent=1 // pred_region
      %s352 = ssub.s32 16, 16
      %353 = vsyncadd [#allocation39], %s352
      %s355 = sshll.u32 [#allocation40], 4
      %s356 = int_to_ptr.vmem [resolvable:$true] %s355
      %358 = dma.hbm_to_vmem [thread:$0]  %s49, 16, %s356, [#allocation39]
    $region101: #{tpu_custom_call.1} parent=1 // pred_fallthru
      _
    // Predicated region
    $region102: #{tpu_custom_call.1} parent=1 // pred_check
      _
    $region103: #{tpu_custom_call.1} parent=1 // pred_check_branch
      %360 = sbr.rel (0) target = $region105
    $region104: #{tpu_custom_call.1} parent=1 // pred_region
      %s362 = ssub.s32 1024, 1024
      %363 = vsyncadd [#allocation42], %s362
      %s364 = sshll.u32 [#allocation41], 4
      %s365 = int_to_ptr.vmem [resolvable:$true] %s364
      %370 = dma.hbm_to_vmem [thread:$0]  %s51, 1024, %s365, [#allocation42], 64, 64, 4
    $region105: #{tpu_custom_call.1} parent=1 // pred_fallthru
      _
    // Predicated region
    $region106: #{tpu_custom_call.1} parent=1 // pred_check
      _
    $region107: #{tpu_custom_call.1} parent=1 // pred_check_branch
      %372 = sbr.rel (0) target = $region109
    $region108: #{tpu_custom_call.1} parent=1 // pred_region
      %s374 = ssub.s32 16, 16
      %375 = vsyncadd [#allocation42], %s374
      %s377 = sshll.u32 [#allocation43], 4
      %s378 = int_to_ptr.vmem [resolvable:$true] %s377
      %380 = dma.hbm_to_vmem [thread:$0]  %s53, 16, %s378, [#allocation42]
    $region109: #{tpu_custom_call.1} parent=1 // pred_fallthru
      _
    // Predicated region
    $region110: #{tpu_custom_call.1} parent=1 // pred_check
      _
    $region111: #{tpu_custom_call.1} parent=1 // pred_check_branch
      %382 = sbr.rel (0) target = $region113
    $region112: #{tpu_custom_call.1} parent=1 // pred_region
      %s384 = ssub.s32 1024, 1024
      %385 = vsyncadd [#allocation45], %s384
      %s386 = sshll.u32 [#allocation44], 4
      %s387 = int_to_ptr.vmem [resolvable:$true] %s386
      %392 = dma.hbm_to_vmem [thread:$0]  %s55, 1024, %s387, [#allocation45], 64, 64, 4
    $region113: #{tpu_custom_call.1} parent=1 // pred_fallthru
      _
    // Predicated region
    $region114: #{tpu_custom_call.1} parent=1 // pred_check
      _
    $region115: #{tpu_custom_call.1} parent=1 // pred_check_branch
      %394 = sbr.rel (0) target = $region117
    $region116: #{tpu_custom_call.1} parent=1 // pred_region
      %s396 = ssub.s32 16, 16
      %397 = vsyncadd [#allocation45], %s396
      %s399 = sshll.u32 [#allocation46], 4
      %s400 = int_to_ptr.vmem [resolvable:$true] %s399
      %402 = dma.hbm_to_vmem [thread:$0]  %s57, 16, %s400, [#allocation45]
    $region117: #{tpu_custom_call.1} parent=1 // pred_fallthru
      _
    // Predicated region
    $region118: #{tpu_custom_call.1} parent=1 // pred_check
      _
    $region119: #{tpu_custom_call.1} parent=1 // pred_check_branch
      %404 = sbr.rel (0) target = $region121
    $region120: #{tpu_custom_call.1} parent=1 // pred_region
      %s406 = ssub.s32 16, 16
      %407 = vsyncadd [#allocation48], %s406
      %s409 = sshll.u32 [#allocation47], 4
      %s410 = int_to_ptr.vmem [resolvable:$true] %s409
      %412 = dma.hbm_to_vmem [thread:$0]  %s59, 16, %s410, [#allocation48]
    $region121: #{tpu_custom_call.1} parent=1 // pred_fallthru
      _
    // Predicated region
    $region122: #{tpu_custom_call.1} parent=1 // pred_check
      _
    $region123: #{tpu_custom_call.1} parent=1 // pred_check_branch
      %414 = sbr.rel (0) target = $region125
    $region124: #{tpu_custom_call.1} parent=1 // pred_region
      %s416 = ssub.s32 16, 16
      %417 = vsyncadd [#allocation48], %s416
      %s419 = sshll.u32 [#allocation49], 4
      %s420 = int_to_ptr.vmem [resolvable:$true] %s419
      %422 = dma.hbm_to_vmem [thread:$0]  %s61, 16, %s420, [#allocation48]
    $region125: #{tpu_custom_call.1} parent=1 // pred_fallthru
      _
    // Predicated region
    $region126: #{tpu_custom_call.1} parent=1 // pred_check
      _
    $region127: #{tpu_custom_call.1} parent=1 // pred_check_branch
      %424 = sbr.rel (0) target = $region129
    $region128: #{tpu_custom_call.1} parent=1 // pred_region
      %425 = dma.done [#allocation3], 256
    $region129: #{tpu_custom_call.1} parent=1 // pred_fallthru
      _
    // Predicated region
    $region130: #{tpu_custom_call.1} parent=1 // pred_check
      _
    $region131: #{tpu_custom_call.1} parent=1 // pred_check_branch
      %427 = sbr.rel (0) target = $region133
    $region132: #{tpu_custom_call.1} parent=1 // pred_region
      %428 = dma.done [#allocation6], 32
    $region133: #{tpu_custom_call.1} parent=1 // pred_fallthru
      _
    // Predicated region
    $region134: #{tpu_custom_call.1} parent=1 // pred_check
      _
    $region135: #{tpu_custom_call.1} parent=1 // pred_check_branch
      %430 = sbr.rel (0) target = $region137
    $region136: #{tpu_custom_call.1} parent=1 // pred_region
      %431 = dma.done [#allocation6], 256
    $region137: #{tpu_custom_call.1} parent=1 // pred_fallthru
      _
    // Predicated region
    $region138: #{tpu_custom_call.1} parent=1 // pred_check
      _
    $region139: #{tpu_custom_call.1} parent=1 // pred_check_branch
      %433 = sbr.rel (0) target = $region141
    $region140: #{tpu_custom_call.1} parent=1 // pred_region
      %434 = dma.done [#allocation9], 32
    $region141: #{tpu_custom_call.1} parent=1 // pred_fallthru
      _
    // Predicated region
    $region142: #{tpu_custom_call.1} parent=1 // pred_check
      _
    $region143: #{tpu_custom_call.1} parent=1 // pred_check_branch
      %436 = sbr.rel (0) target = $region145
    $region144: #{tpu_custom_call.1} parent=1 // pred_region
      %437 = dma.done [#allocation9], 128
    $region145: #{tpu_custom_call.1} parent=1 // pred_fallthru
      _
    // Predicated region
    $region146: #{tpu_custom_call.1} parent=1 // pred_check
      _
    $region147: #{tpu_custom_call.1} parent=1 // pred_check_branch
      %439 = sbr.rel (0) target = $region149
    $region148: #{tpu_custom_call.1} parent=1 // pred_region
      %440 = dma.done [#allocation12], 1024
    $region149: #{tpu_custom_call.1} parent=1 // pred_fallthru
      _
    // Predicated region
    $region150: #{tpu_custom_call.1} parent=1 // pred_check
      _
    $region151: #{tpu_custom_call.1} parent=1 // pred_check_branch
      %442 = sbr.rel (0) target = $region153
    $region152: #{tpu_custom_call.1} parent=1 // pred_region
      %443 = dma.done [#allocation12], 1024
    $region153: #{tpu_custom_call.1} parent=1 // pred_fallthru
      _
    // Predicated region
    $region154: #{tpu_custom_call.1} parent=1 // pred_check
      _
    $region155: #{tpu_custom_call.1} parent=1 // pred_check_branch
      %445 = sbr.rel (0) target = $region157
    $region156: #{tpu_custom_call.1} parent=1 // pred_region
      %446 = dma.done [#allocation15], 1024
    $region157: #{tpu_custom_call.1} parent=1 // pred_fallthru
      _
    // Predicated region
    $region158: #{tpu_custom_call.1} parent=1 // pred_check
      _
    $region159: #{tpu_custom_call.1} parent=1 // pred_check_branch
      %448 = sbr.rel (0) target = $region161
    $region160: #{tpu_custom_call.1} parent=1 // pred_region
      %449 = dma.done [#allocation15], 1024
    $region161: #{tpu_custom_call.1} parent=1 // pred_fallthru
      _
    // Predicated region
    $region162: #{tpu_custom_call.1} parent=1 // pred_check
      _
    $region163: #{tpu_custom_call.1} parent=1 // pred_check_branch
      %451 = sbr.rel (0) target = $region165
    $region164: #{tpu_custom_call.1} parent=1 // pred_region
      %452 = dma.done [#allocation18], 16
    $region165: #{tpu_custom_call.1} parent=1 // pred_fallthru
      _
    // Predicated region
    $region166: #{tpu_custom_call.1} parent=1 // pred_check
      _
    $region167: #{tpu_custom_call.1} parent=1 // pred_check_branch
      %454 = sbr.rel (0) target = $region169
    $region168: #{tpu_custom_call.1} parent=1 // pred_region
      %455 = dma.done [#allocation18], 16
    $region169: #{tpu_custom_call.1} parent=1 // pred_fallthru
      _
    // Predicated region
    $region170: #{tpu_custom_call.1} parent=1 // pred_check
      _
    $region171: #{tpu_custom_call.1} parent=1 // pred_check_branch
      %457 = sbr.rel (0) target = $region173
    $region172: #{tpu_custom_call.1} parent=1 // pred_region
      %458 = dma.done [#allocation21], 16
    $region173: #{tpu_custom_call.1} parent=1 // pred_fallthru
      _
    // Predicated region
    $region174: #{tpu_custom_call.1} parent=1 // pred_check
      _
    $region175: #{tpu_custom_call.1} parent=1 // pred_check_branch
      %460 = sbr.rel (0) target = $region177
    $region176: #{tpu_custom_call.1} parent=1 // pred_region
      %461 = dma.done [#allocation21], 16
    $region177: #{tpu_custom_call.1} parent=1 // pred_fallthru
      _
    // Predicated region
    $region178: #{tpu_custom_call.1} parent=1 // pred_check
      _
    $region179: #{tpu_custom_call.1} parent=1 // pred_check_branch
      %463 = sbr.rel (0) target = $region181
    $region180: #{tpu_custom_call.1} parent=1 // pred_region
      %464 = dma.done [#allocation24], 16
    $region181: #{tpu_custom_call.1} parent=1 // pred_fallthru
      _
    // Predicated region
    $region182: #{tpu_custom_call.1} parent=1 // pred_check
      _
    $region183: #{tpu_custom_call.1} parent=1 // pred_check_branch
      %466 = sbr.rel (0) target = $region185
    $region184: #{tpu_custom_call.1} parent=1 // pred_region
      %467 = dma.done [#allocation24], 16
    $region185: #{tpu_custom_call.1} parent=1 // pred_fallthru
      _
    // Predicated region
    $region186: #{tpu_custom_call.1} parent=1 // pred_check
      _
    $region187: #{tpu_custom_call.1} parent=1 // pred_check_branch
      %469 = sbr.rel (0) target = $region189
    $region188: #{tpu_custom_call.1} parent=1 // pred_region
      %470 = dma.done [#allocation27], 1024
    $region189: #{tpu_custom_call.1} parent=1 // pred_fallthru
      _
    // Predicated region
    $region190: #{tpu_custom_call.1} parent=1 // pred_check
      _
    $region191: #{tpu_custom_call.1} parent=1 // pred_check_branch
      %472 = sbr.rel (0) target = $region193
    $region192: #{tpu_custom_call.1} parent=1 // pred_region
      %473 = dma.done [#allocation27], 1024
    $region193: #{tpu_custom_call.1} parent=1 // pred_fallthru
      _
    // Predicated region
    $region194: #{tpu_custom_call.1} parent=1 // pred_check
      _
    $region195: #{tpu_custom_call.1} parent=1 // pred_check_branch
      %475 = sbr.rel (0) target = $region197
    $region196: #{tpu_custom_call.1} parent=1 // pred_region
      %476 = dma.done [#allocation30], 1024
    $region197: #{tpu_custom_call.1} parent=1 // pred_fallthru
      _
    // Predicated region
    $region198: #{tpu_custom_call.1} parent=1 // pred_check
      _
    $region199: #{tpu_custom_call.1} parent=1 // pred_check_branch
      %478 = sbr.rel (0) target = $region201
    $region200: #{tpu_custom_call.1} parent=1 // pred_region
      %479 = dma.done [#allocation30], 1024
    $region201: #{tpu_custom_call.1} parent=1 // pred_fallthru
      _
    // Predicated region
    $region202: #{tpu_custom_call.1} parent=1 // pred_check
      _
    $region203: #{tpu_custom_call.1} parent=1 // pred_check_branch
      %481 = sbr.rel (0) target = $region205
    $region204: #{tpu_custom_call.1} parent=1 // pred_region
      %482 = dma.done [#allocation33], 16
    $region205: #{tpu_custom_call.1} parent=1 // pred_fallthru
      _
    // Predicated region
    $region206: #{tpu_custom_call.1} parent=1 // pred_check
      _
    $region207: #{tpu_custom_call.1} parent=1 // pred_check_branch
      %484 = sbr.rel (0) target = $region209
    $region208: #{tpu_custom_call.1} parent=1 // pred_region
      %485 = dma.done [#allocation33], 16
    $region209: #{tpu_custom_call.1} parent=1 // pred_fallthru
      _
    // Predicated region
    $region210: #{tpu_custom_call.1} parent=1 // pred_check
      _
    $region211: #{tpu_custom_call.1} parent=1 // pred_check_branch
      %487 = sbr.rel (0) target = $region213
    $region212: #{tpu_custom_call.1} parent=1 // pred_region
      %488 = dma.done [#allocation36], 16
    $region213: #{tpu_custom_call.1} parent=1 // pred_fallthru
      _
    // Predicated region
    $region214: #{tpu_custom_call.1} parent=1 // pred_check
      _
    $region215: #{tpu_custom_call.1} parent=1 // pred_check_branch
      %490 = sbr.rel (0) target = $region217
    $region216: #{tpu_custom_call.1} parent=1 // pred_region
      %491 = dma.done [#allocation36], 16
    $region217: #{tpu_custom_call.1} parent=1 // pred_fallthru
      _
    // Predicated region
    $region218: #{tpu_custom_call.1} parent=1 // pred_check
      _
    $region219: #{tpu_custom_call.1} parent=1 // pred_check_branch
      %493 = sbr.rel (0) target = $region221
    $region220: #{tpu_custom_call.1} parent=1 // pred_region
      %494 = dma.done [#allocation39], 16
    $region221: #{tpu_custom_call.1} parent=1 // pred_fallthru
      _
    // Predicated region
    $region222: #{tpu_custom_call.1} parent=1 // pred_check
      _
    $region223: #{tpu_custom_call.1} parent=1 // pred_check_branch
      %496 = sbr.rel (0) target = $region225
    $region224: #{tpu_custom_call.1} parent=1 // pred_region
      %497 = dma.done [#allocation39], 16
    $region225: #{tpu_custom_call.1} parent=1 // pred_fallthru
      _
    // Predicated region
    $region226: #{tpu_custom_call.1} parent=1 // pred_check
      _
    $region227: #{tpu_custom_call.1} parent=1 // pred_check_branch
      %499 = sbr.rel (0) target = $region229
    $region228: #{tpu_custom_call.1} parent=1 // pred_region
      %500 = dma.done [#allocation42], 1024
    $region229: #{tpu_custom_call.1} parent=1 // pred_fallthru
      _
    // Predicated region
    $region230: #{tpu_custom_call.1} parent=1 // pred_check
      _
    $region231: #{tpu_custom_call.1} parent=1 // pred_check_branch
      %502 = sbr.rel (0) target = $region233
    $region232: #{tpu_custom_call.1} parent=1 // pred_region
      %503 = dma.done [#allocation42], 16
    $region233: #{tpu_custom_call.1} parent=1 // pred_fallthru
      _
    // Predicated region
    $region234: #{tpu_custom_call.1} parent=1 // pred_check
      _
    $region235: #{tpu_custom_call.1} parent=1 // pred_check_branch
      %505 = sbr.rel (0) target = $region237
    $region236: #{tpu_custom_call.1} parent=1 // pred_region
      %506 = dma.done [#allocation45], 1024
    $region237: #{tpu_custom_call.1} parent=1 // pred_fallthru
      _
    // Predicated region
    $region238: #{tpu_custom_call.1} parent=1 // pred_check
      _
    $region239: #{tpu_custom_call.1} parent=1 // pred_check_branch
      %508 = sbr.rel (0) target = $region241
    $region240: #{tpu_custom_call.1} parent=1 // pred_region
      %509 = dma.done [#allocation45], 16
    $region241: #{tpu_custom_call.1} parent=1 // pred_fallthru
      _
    // Predicated region
    $region242: #{tpu_custom_call.1} parent=1 // pred_check
      _
    $region243: #{tpu_custom_call.1} parent=1 // pred_check_branch
      %511 = sbr.rel (0) target = $region245
    $region244: #{tpu_custom_call.1} parent=1 // pred_region
      %512 = dma.done [#allocation48], 16
    $region245: #{tpu_custom_call.1} parent=1 // pred_fallthru
      _
    // Predicated region
    $region246: #{tpu_custom_call.1} parent=1 // pred_check
      _
    $region247: #{tpu_custom_call.1} parent=1 // pred_check_branch
      %514 = sbr.rel (0) target = $region249
    $region248: #{tpu_custom_call.1} parent=1 // pred_region
      %515 = dma.done [#allocation48], 16
    $region249: #{tpu_custom_call.1} parent=1 // pred_fallthru
      _
    %v517 = vld [vmem:[#allocation2] sm:$0xff]
    %v518 = vld [vmem:[#allocation2 + $0x8] sm:$0xff]
    %v519 = vld [vmem:[#allocation7] sm:$0xff]
    %v520 = vld [vmem:[#allocation7 + $0x8] sm:$0xff]
    %v521 = vld [vmem:[#allocation5] sm:$0x1]
    %v522 = vld [vmem:[#allocation5 + $0x1] sm:$0x1]
    %v523 = vld [vmem:[#allocation8] sm:$0x1]
    %v524 = vld [vmem:[#allocation8 + $0x1] sm:$0x1]
    %v525 = vld [vmem:[#allocation10] sm:$0xff]
    %v526 = vpack.c.bf16 %v518, %v517
    %v527 = vld [vmem:[#allocation11] sm:$0xf]
    %v528 = vld [vmem:[#allocation11 + $0x4] sm:$0xf]
    %v529 = vld [vmem:[#allocation11 + $0x8] sm:$0xf]
    %v530 = vld [vmem:[#allocation11 + $0xc] sm:$0xf]
    %v531 = vld [vmem:[#allocation11 + $0x10] sm:$0xf]
    %v532 = vld [vmem:[#allocation11 + $0x14] sm:$0xf]
    %v533 = vld [vmem:[#allocation11 + $0x18] sm:$0xf]
    %v534 = vld [vmem:[#allocation11 + $0x1c] sm:$0xf]
    %v535 = vld [vmem:[#allocation11 + $0x20] sm:$0xf]
    %v536 = vld [vmem:[#allocation11 + $0x24] sm:$0xf]
    %v537 = vld [vmem:[#allocation11 + $0x28] sm:$0xf]
    %v538 = vld [vmem:[#allocation11 + $0x2c] sm:$0xf]
    %v539 = vld [vmem:[#allocation11 + $0x30] sm:$0xf]
    %v540 = vld [vmem:[#allocation11 + $0x34] sm:$0xf]
    %v541 = vld [vmem:[#allocation11 + $0x38] sm:$0xf]
    %v542 = vld [vmem:[#allocation11 + $0x3c] sm:$0xf]
    %v543 = vld [vmem:[#allocation17] sm:$0x1]
    %v545 = vlaneseq
    %v546 = vshrl.u32 %v545, 7
    %v547 = vsub.s32 0, %v546
    %v548 = vrot.slane %v543, %v547
    %v566 = vunpack.c.l.b16 %v527
    %v567 = vunpack.c.l.b16 %v528
    %v568 = vunpack.c.l.b16 %v529
    %v569 = vunpack.c.l.b16 %v530
    %v570 = vunpack.c.l.b16 %v531
    %v571 = vunpack.c.l.b16 %v532
    %v572 = vunpack.c.l.b16 %v533
    %v573 = vunpack.c.l.b16 %v534
    %v574 = vunpack.c.l.b16 %v535
    %v575 = vunpack.c.l.b16 %v536
    %v576 = vunpack.c.l.b16 %v537
    %v577 = vunpack.c.l.b16 %v538
    %v578 = vunpack.c.l.b16 %v539
    %v579 = vunpack.c.l.b16 %v540
    %v580 = vunpack.c.l.b16 %v541
    %v581 = vunpack.c.l.b16 %v542
    %v582 = vpack.c.b16 %v567, %v566
    %v583 = vpack.c.b16 %v569, %v568
    %v584 = vpack.c.b16 %v571, %v570
    %v585 = vpack.c.b16 %v573, %v572
    %v586 = vpack.c.b16 %v575, %v574
    %v587 = vpack.c.b16 %v577, %v576
    %v588 = vpack.c.b16 %v579, %v578
    %v589 = vpack.c.b16 %v581, %v580
    %598 = vmatprep.subr.bf16.mxu0 0
    %599 = vmatpush1.bf16.msra.mxu0 %v582
    %600 = vmatprep.subr.bf16.mxu0 0
    %601 = vmatpush1.bf16.msra.mxu0 %v583
    %602 = vmatprep.subr.bf16.mxu0 0
    %603 = vmatpush1.bf16.msra.mxu0 %v584
    %604 = vmatprep.subr.bf16.mxu0 0
    %605 = vmatpush1.bf16.msra.mxu0 %v585
    %606 = vmatprep.subr.bf16.mxu0 0
    %607 = vmatpush1.bf16.msra.mxu0 %v586
    %608 = vmatprep.subr.bf16.mxu0 0
    %609 = vmatpush1.bf16.msra.mxu0 %v587
    %610 = vmatprep.subr.bf16.mxu0 0
    %611 = vmatpush1.bf16.msra.mxu0 %v588
    %612 = vmatprep.subr.bf16.mxu0 0
    %613 = vmatpush1.bf16.msra.mxu0 %v589
    %614 = vmatprep.subr.bf16.mxu0 0
    %615 = vmatpush1.bf16.msra.mxu0 0
    %616 = vmatprep.subr.bf16.mxu0 0
    %617 = vmatpush1.bf16.msra.mxu0 0
    %618 = vmatprep.subr.bf16.mxu0 0
    %619 = vmatpush1.bf16.msra.mxu0 0
    %620 = vmatprep.subr.bf16.mxu0 0
    %621 = vmatpush1.bf16.msra.mxu0 0
    %622 = vmatprep.subr.bf16.mxu0 0
    %623 = vmatpush1.bf16.msra.mxu0 0
    %624 = vmatprep.subr.bf16.mxu0 0
    %625 = vmatpush1.bf16.msra.mxu0 0
    %626 = vmatprep.subr.bf16.mxu0 0
    %627 = vmatpush1.bf16.msra.mxu0 0
    %628 = vmatprep.subr.bf16.mxu0 0
    %629 = vmatpush1.bf16.msra.mxu0 0
    %630 = vmatprep.mubr.bf16.mxu0 0
    %631 = vmatmul.mubr.bf16.gmra.mrb[0].mxu0 %v526
    %v632 = vpop.f32.mrb[0].mxu0
    %v633 = vadd.f32 %v548, %v632
    %v634 = vpop.f32.mrb[0].mxu0
    %v635 = vpop.f32.mrb[0].mxu0
    %v636 = vadd.f32 %v548, %v635
    %v637 = vpop.f32.mrb[0].mxu0
    %638 = vdwg.mxu0
    %v639 = vmul.f32 %v633, 0.17677669
    %v640 = vmul.f32 %v636, 0.17677669
    %v641 = vld [vmem:[#allocation13] sm:$0xf]
    %v642 = vld [vmem:[#allocation13 + $0x4] sm:$0xf]
    %v643 = vld [vmem:[#allocation13 + $0x8] sm:$0xf]
    %v644 = vld [vmem:[#allocation13 + $0xc] sm:$0xf]
    %v645 = vld [vmem:[#allocation13 + $0x10] sm:$0xf]
    %v646 = vld [vmem:[#allocation13 + $0x14] sm:$0xf]
    %v647 = vld [vmem:[#allocation13 + $0x18] sm:$0xf]
    %v648 = vld [vmem:[#allocation13 + $0x1c] sm:$0xf]
    %v649 = vld [vmem:[#allocation13 + $0x20] sm:$0xf]
    %v650 = vld [vmem:[#allocation13 + $0x24] sm:$0xf]
    %v651 = vld [vmem:[#allocation13 + $0x28] sm:$0xf]
    %v652 = vld [vmem:[#allocation13 + $0x2c] sm:$0xf]
    %v653 = vld [vmem:[#allocation13 + $0x30] sm:$0xf]
    %v654 = vld [vmem:[#allocation13 + $0x34] sm:$0xf]
    %v655 = vld [vmem:[#allocation13 + $0x38] sm:$0xf]
    %v656 = vld [vmem:[#allocation13 + $0x3c] sm:$0xf]
    %v657 = vld [vmem:[#allocation19] sm:$0x1]
    %v659 = vlaneseq
    %v660 = vshrl.u32 %v659, 7
    %v661 = vsub.s32 0, %v660
    %v662 = vrot.slane %v657, %v661
    %v680 = vunpack.c.l.b16 %v641
    %v681 = vunpack.c.l.b16 %v642
    %v682 = vunpack.c.l.b16 %v643
    %v683 = vunpack.c.l.b16 %v644
    %v684 = vunpack.c.l.b16 %v645
    %v685 = vunpack.c.l.b16 %v646
    %v686 = vunpack.c.l.b16 %v647
    %v687 = vunpack.c.l.b16 %v648
    %v688 = vunpack.c.l.b16 %v649
    %v689 = vunpack.c.l.b16 %v650
    %v690 = vunpack.c.l.b16 %v651
    %v691 = vunpack.c.l.b16 %v652
    %v692 = vunpack.c.l.b16 %v653
    %v693 = vunpack.c.l.b16 %v654
    %v694 = vunpack.c.l.b16 %v655
    %v695 = vunpack.c.l.b16 %v656
    %v696 = vpack.c.b16 %v681, %v680
    %v697 = vpack.c.b16 %v683, %v682
    %v698 = vpack.c.b16 %v685, %v684
    %v699 = vpack.c.b16 %v687, %v686
    %v700 = vpack.c.b16 %v689, %v688
    %v701 = vpack.c.b16 %v691, %v690
    %v702 = vpack.c.b16 %v693, %v692
    %v703 = vpack.c.b16 %v695, %v694
    %712 = vmatprep.subr.bf16.mxu0 0
    %713 = vmatpush1.bf16.msra.mxu0 %v696
    %714 = vmatprep.subr.bf16.mxu0 0
    %715 = vmatpush1.bf16.msra.mxu0 %v697
    %716 = vmatprep.subr.bf16.mxu0 0
    %717 = vmatpush1.bf16.msra.mxu0 %v698
    %718 = vmatprep.subr.bf16.mxu0 0
    %719 = vmatpush1.bf16.msra.mxu0 %v699
    %720 = vmatprep.subr.bf16.mxu0 0
    %721 = vmatpush1.bf16.msra.mxu0 %v700
    %722 = vmatprep.subr.bf16.mxu0 0
    %723 = vmatpush1.bf16.msra.mxu0 %v701
    %724 = vmatprep.subr.bf16.mxu0 0
    %725 = vmatpush1.bf16.msra.mxu0 %v702
    %726 = vmatprep.subr.bf16.mxu0 0
    %727 = vmatpush1.bf16.msra.mxu0 %v703
    %728 = vmatprep.subr.bf16.mxu0 0
    %729 = vmatpush1.bf16.msra.mxu0 0
    %730 = vmatprep.subr.bf16.mxu0 0
    %731 = vmatpush1.bf16.msra.mxu0 0
    %732 = vmatprep.subr.bf16.mxu0 0
    %733 = vmatpush1.bf16.msra.mxu0 0
    %734 = vmatprep.subr.bf16.mxu0 0
    %735 = vmatpush1.bf16.msra.mxu0 0
    %736 = vmatprep.subr.bf16.mxu0 0
    %737 = vmatpush1.bf16.msra.mxu0 0
    %738 = vmatprep.subr.bf16.mxu0 0
    %739 = vmatpush1.bf16.msra.mxu0 0
    %740 = vmatprep.subr.bf16.mxu0 0
    %741 = vmatpush1.bf16.msra.mxu0 0
    %742 = vmatprep.subr.bf16.mxu0 0
    %743 = vmatpush1.bf16.msra.mxu0 0
    %744 = vmatprep.mubr.bf16.mxu0 0
    %745 = vmatmul.mubr.bf16.gmra.mrb[0].mxu0 %v526
    %v746 = vpop.f32.mrb[0].mxu0
    %v747 = vadd.f32 %v662, %v746
    %v748 = vpop.f32.mrb[0].mxu0
    %v749 = vpop.f32.mrb[0].mxu0
    %v750 = vadd.f32 %v662, %v749
    %v751 = vpop.f32.mrb[0].mxu0
    %752 = vdwg.mxu0
    %v753 = vld [vmem:[#allocation14] sm:$0xf]
    %v754 = vld [vmem:[#allocation14 + $0x4] sm:$0xf]
    %v755 = vld [vmem:[#allocation14 + $0x8] sm:$0xf]
    %v756 = vld [vmem:[#allocation14 + $0xc] sm:$0xf]
    %v757 = vld [vmem:[#allocation14 + $0x10] sm:$0xf]
    %v758 = vld [vmem:[#allocation14 + $0x14] sm:$0xf]
    %v759 = vld [vmem:[#allocation14 + $0x18] sm:$0xf]
    %v760 = vld [vmem:[#allocation14 + $0x1c] sm:$0xf]
    %v761 = vld [vmem:[#allocation14 + $0x20] sm:$0xf]
    %v762 = vld [vmem:[#allocation14 + $0x24] sm:$0xf]
    %v763 = vld [vmem:[#allocation14 + $0x28] sm:$0xf]
    %v764 = vld [vmem:[#allocation14 + $0x2c] sm:$0xf]
    %v765 = vld [vmem:[#allocation14 + $0x30] sm:$0xf]
    %v766 = vld [vmem:[#allocation14 + $0x34] sm:$0xf]
    %v767 = vld [vmem:[#allocation14 + $0x38] sm:$0xf]
    %v768 = vld [vmem:[#allocation14 + $0x3c] sm:$0xf]
    %v769 = vld [vmem:[#allocation20] sm:$0x1]
    %v771 = vlaneseq
    %v772 = vshrl.u32 %v771, 7
    %v773 = vsub.s32 0, %v772
    %v774 = vrot.slane %v769, %v773
    %v792 = vunpack.c.l.b16 %v753
    %v793 = vunpack.c.l.b16 %v754
    %v794 = vunpack.c.l.b16 %v755
    %v795 = vunpack.c.l.b16 %v756
    %v796 = vunpack.c.l.b16 %v757
    %v797 = vunpack.c.l.b16 %v758
    %v798 = vunpack.c.l.b16 %v759
    %v799 = vunpack.c.l.b16 %v760
    %v800 = vunpack.c.l.b16 %v761
    %v801 = vunpack.c.l.b16 %v762
    %v802 = vunpack.c.l.b16 %v763
    %v803 = vunpack.c.l.b16 %v764
    %v804 = vunpack.c.l.b16 %v765
    %v805 = vunpack.c.l.b16 %v766
    %v806 = vunpack.c.l.b16 %v767
    %v807 = vunpack.c.l.b16 %v768
    %v808 = vpack.c.b16 %v793, %v792
    %v809 = vpack.c.b16 %v795, %v794
    %v810 = vpack.c.b16 %v797, %v796
    %v811 = vpack.c.b16 %v799, %v798
    %v812 = vpack.c.b16 %v801, %v800
    %v813 = vpack.c.b16 %v803, %v802
    %v814 = vpack.c.b16 %v805, %v804
    %v815 = vpack.c.b16 %v807, %v806
    %824 = vmatprep.subr.bf16.mxu0 0
    %825 = vmatpush1.bf16.msra.mxu0 %v808
    %826 = vmatprep.subr.bf16.mxu0 0
    %827 = vmatpush1.bf16.msra.mxu0 %v809
    %828 = vmatprep.subr.bf16.mxu0 0
    %829 = vmatpush1.bf16.msra.mxu0 %v810
    %830 = vmatprep.subr.bf16.mxu0 0
    %831 = vmatpush1.bf16.msra.mxu0 %v811
    %832 = vmatprep.subr.bf16.mxu0 0
    %833 = vmatpush1.bf16.msra.mxu0 %v812
    %834 = vmatprep.subr.bf16.mxu0 0
    %835 = vmatpush1.bf16.msra.mxu0 %v813
    %836 = vmatprep.subr.bf16.mxu0 0
    %837 = vmatpush1.bf16.msra.mxu0 %v814
    %838 = vmatprep.subr.bf16.mxu0 0
    %839 = vmatpush1.bf16.msra.mxu0 %v815
    %840 = vmatprep.subr.bf16.mxu0 0
    %841 = vmatpush1.bf16.msra.mxu0 0
    %842 = vmatprep.subr.bf16.mxu0 0
    %843 = vmatpush1.bf16.msra.mxu0 0
    %844 = vmatprep.subr.bf16.mxu0 0
    %845 = vmatpush1.bf16.msra.mxu0 0
    %846 = vmatprep.subr.bf16.mxu0 0
    %847 = vmatpush1.bf16.msra.mxu0 0
    %848 = vmatprep.subr.bf16.mxu0 0
    %849 = vmatpush1.bf16.msra.mxu0 0
    %850 = vmatprep.subr.bf16.mxu0 0
    %851 = vmatpush1.bf16.msra.mxu0 0
    %852 = vmatprep.subr.bf16.mxu0 0
    %853 = vmatpush1.bf16.msra.mxu0 0
    %854 = vmatprep.subr.bf16.mxu0 0
    %855 = vmatpush1.bf16.msra.mxu0 0
    %856 = vmatprep.mubr.bf16.mxu0 0
    %857 = vmatmul.mubr.bf16.gmra.mrb[0].mxu0 %v526
    %v858 = vpop.f32.mrb[0].mxu0
    %v859 = vadd.f32 %v774, %v858
    %v860 = vpop.f32.mrb[0].mxu0
    %v861 = vpop.f32.mrb[0].mxu0
    %v862 = vadd.f32 %v774, %v861
    %v863 = vpop.f32.mrb[0].mxu0
    %864 = vdwg.mxu0
    %v865 = vpack.c.bf16 %v639, %v639
    %v866 = vpack.c.bf16 %v640, %v640
    %v867 = vpack.c.bf16 %v747, %v747
    %v868 = vpack.c.bf16 %v750, %v750
    %869 = vmatprep.subr.bf16.mxu0 0
    %870 = vmatpush1.bf16.xpose.msra.mxu0 %v867
    %871 = vmatprep.subr.bf16.mxu0 0
    %872 = vmatpush1.bf16.xpose.msra.mxu0 0
    %873 = vmatprep.subr.bf16.mxu0 0
    %874 = vmatpush1.bf16.xpose.msra.mxu0 0
    %875 = vmatprep.subr.bf16.mxu0 0
    %876 = vmatpush1.bf16.xpose.msra.mxu0 0
    %877 = vmatprep.subr.bf16.mxu0 0
    %878 = vmatpush1.bf16.xpose.msra.mxu0 0
    %879 = vmatprep.subr.bf16.mxu0 0
    %880 = vmatpush1.bf16.xpose.msra.mxu0 0
    %881 = vmatprep.subr.bf16.mxu0 0
    %882 = vmatpush1.bf16.xpose.msra.mxu0 0
    %883 = vmatprep.subr.bf16.mxu0 0
    %884 = vmatpush1.bf16.xpose.msra.mxu0 0
    %885 = vmatprep.subr.bf16.mxu0 0
    %886 = vmatpush1.bf16.xpose.msra.mxu0 0
    %887 = vmatprep.subr.bf16.mxu0 0
    %888 = vmatpush1.bf16.xpose.msra.mxu0 0
    %889 = vmatprep.subr.bf16.mxu0 0
    %890 = vmatpush1.bf16.xpose.msra.mxu0 0
    %891 = vmatprep.subr.bf16.mxu0 0
    %892 = vmatpush1.bf16.xpose.msra.mxu0 0
    %893 = vmatprep.subr.bf16.mxu0 0
    %894 = vmatpush1.bf16.xpose.msra.mxu0 0
    %895 = vmatprep.subr.bf16.mxu0 0
    %896 = vmatpush1.bf16.xpose.msra.mxu0 0
    %897 = vmatprep.subr.bf16.mxu0 0
    %898 = vmatpush1.bf16.xpose.msra.mxu0 0
    %899 = vmatprep.subr.bf16.mxu0 0
    %900 = vmatpush1.bf16.xpose.msra.mxu0 0
    %901 = vmatprep.mubr.bf16.mxu0 0
    %902 = vmatmul.mubr.bf16.gmra.mrb[0].mxu0 %v865
    %v903 = vpop.f32.mrb[0].mxu0
    %v904 = vadd.f32 0.0, %v903
    %v905 = vpop.f32.mrb[0].mxu0
    %v906 = vpop.f32.mrb[0].mxu0
    %v907 = vpop.f32.mrb[0].mxu0
    %908 = vdwg.mxu0
    %909 = vmatprep.subr.bf16.mxu0 0
    %910 = vmatpush1.bf16.xpose.msra.mxu0 %v868
    %911 = vmatprep.subr.bf16.mxu0 0
    %912 = vmatpush1.bf16.xpose.msra.mxu0 0
    %913 = vmatprep.subr.bf16.mxu0 0
    %914 = vmatpush1.bf16.xpose.msra.mxu0 0
    %915 = vmatprep.subr.bf16.mxu0 0
    %916 = vmatpush1.bf16.xpose.msra.mxu0 0
    %917 = vmatprep.subr.bf16.mxu0 0
    %918 = vmatpush1.bf16.xpose.msra.mxu0 0
    %919 = vmatprep.subr.bf16.mxu0 0
    %920 = vmatpush1.bf16.xpose.msra.mxu0 0
    %921 = vmatprep.subr.bf16.mxu0 0
    %922 = vmatpush1.bf16.xpose.msra.mxu0 0
    %923 = vmatprep.subr.bf16.mxu0 0
    %924 = vmatpush1.bf16.xpose.msra.mxu0 0
    %925 = vmatprep.subr.bf16.mxu0 0
    %926 = vmatpush1.bf16.xpose.msra.mxu0 0
    %927 = vmatprep.subr.bf16.mxu0 0
    %928 = vmatpush1.bf16.xpose.msra.mxu0 0
    %929 = vmatprep.subr.bf16.mxu0 0
    %930 = vmatpush1.bf16.xpose.msra.mxu0 0
    %931 = vmatprep.subr.bf16.mxu0 0
    %932 = vmatpush1.bf16.xpose.msra.mxu0 0
    %933 = vmatprep.subr.bf16.mxu0 0
    %934 = vmatpush1.bf16.xpose.msra.mxu0 0
    %935 = vmatprep.subr.bf16.mxu0 0
    %936 = vmatpush1.bf16.xpose.msra.mxu0 0
    %937 = vmatprep.subr.bf16.mxu0 0
    %938 = vmatpush1.bf16.xpose.msra.mxu0 0
    %939 = vmatprep.subr.bf16.mxu0 0
    %940 = vmatpush1.bf16.xpose.msra.mxu0 0
    %941 = vmatprep.mubr.bf16.mxu0 0
    %942 = vmatmul.mubr.bf16.gmra.mrb[0].mxu0 %v866
    %v943 = vpop.f32.mrb[0].mxu0
    %v944 = vadd.f32 0.0, %v943
    %v945 = vpop.f32.mrb[0].mxu0
    %v946 = vpop.f32.mrb[0].mxu0
    %v947 = vpop.f32.mrb[0].mxu0
    %948 = vdwg.mxu0
    %vm949 = vcmp.gt.f32.partialorder %v521, 0.0
    %vm950 = vcmp.gt.f32.partialorder %v522, 0.0
    %vm951 = vcmp.gt.f32.partialorder %v525, 0.0
    %v952 = vsel %vm949, 1, 0
    %v953 = vsel %vm950, 1, 0
    %v954 = vlaneseq
    %v955 = vshrl.u32 %v954, 7
    %v956 = vsub.s32 0, %v955
    %v957 = vrot.slane %v952, %v956
    %v958 = vlaneseq
    %v959 = vshrl.u32 %v958, 7
    %v960 = vsub.s32 0, %v959
    %v961 = vrot.slane %v953, %v960
    %vm962 = vcmp.eq.s32.totalorder %v957, 1
    %vm963 = vcmp.eq.s32.totalorder %v961, 1
    %v964 = vsel %vm951, 1, 0
    %vm965 = vcmp.eq.s32.totalorder %v964, 1
    %vm966 = vmand %vm962, %vm965
    %vm967 = vmand %vm963, %vm965
    %v968 = vsel %vm966, %v904, -1e+09
    %v969 = vsel %vm967, %v944, -1e+09
    %vm970 = vcmask 64512
    %v971 = vsel %vm970, %v968, -inf
    %972 = vmax.xlane.f32.xlu0 %v971
    %v973 = vpop.xlane.xlu0 %972
    %v974 = vsel %vm970, %v969, -inf
    %975 = vmax.xlane.f32.xlu0 %v974
    %v976 = vpop.xlane.xlu0 %975
    %v977 = vsub.f32 %v968, %v973
    %v978 = vsub.f32 %v969, %v976
    %v979 = vmul.f32 %v977, 1.442695
    %v980 = vpow.pop %v979
    %v981 = vmul.f32 %v978, 1.442695
    %v982 = vpow.pop %v981
    %v983 = vsel %vm970, %v980, 0.0
    %984 = vadd.xlane.f32.xlu0 %v983
    %v985 = vpop.xlane.xlu0 %984
    %v986 = vsel %vm970, %v982, 0.0
    %987 = vadd.xlane.f32.xlu0 %v986
    %v988 = vpop.xlane.xlu0 %987
    %v989 = vrcp.pop %v985
    %v990 = vrcp.pop %v988
    %v991 = vmul.f32 %v980, %v989
    %v992 = vmul.f32 %v982, %v990
    %v993 = vpack.c.bf16 %v991, %v991
    %v994 = vpack.c.bf16 %v992, %v992
    %v995 = vpack.c.bf16 %v859, %v859
    %v996 = vpack.c.bf16 %v862, %v862
    %v998 = vsel %vm970, %v993, 0
    %vm1000 = vcmask 1043456
    %v1002 = vsel %vm1000, %v995, 0
    %1004 = vmatprep.subr.bf16.mxu0 0
    %1005 = vmatpush1.bf16.msra.mxu0 %v1002
    %1006 = vmatprep.subr.bf16.mxu0 0
    %1007 = vmatpush1.bf16.msra.mxu0 0
    %1008 = vmatprep.subr.bf16.mxu0 0
    %1009 = vmatpush1.bf16.msra.mxu0 0
    %1010 = vmatprep.subr.bf16.mxu0 0
    %1011 = vmatpush1.bf16.msra.mxu0 0
    %1012 = vmatprep.subr.bf16.mxu0 0
    %1013 = vmatpush1.bf16.msra.mxu0 0
    %1014 = vmatprep.subr.bf16.mxu0 0
    %1015 = vmatpush1.bf16.msra.mxu0 0
    %1016 = vmatprep.subr.bf16.mxu0 0
    %1017 = vmatpush1.bf16.msra.mxu0 0
    %1018 = vmatprep.subr.bf16.mxu0 0
    %1019 = vmatpush1.bf16.msra.mxu0 0
    %1020 = vmatprep.subr.bf16.mxu0 0
    %1021 = vmatpush1.bf16.msra.mxu0 0
    %1022 = vmatprep.subr.bf16.mxu0 0
    %1023 = vmatpush1.bf16.msra.mxu0 0
    %1024 = vmatprep.subr.bf16.mxu0 0
    %1025 = vmatpush1.bf16.msra.mxu0 0
    %1026 = vmatprep.subr.bf16.mxu0 0
    %1027 = vmatpush1.bf16.msra.mxu0 0
    %1028 = vmatprep.subr.bf16.mxu0 0
    %1029 = vmatpush1.bf16.msra.mxu0 0
    %1030 = vmatprep.subr.bf16.mxu0 0
    %1031 = vmatpush1.bf16.msra.mxu0 0
    %1032 = vmatprep.subr.bf16.mxu0 0
    %1033 = vmatpush1.bf16.msra.mxu0 0
    %1034 = vmatprep.subr.bf16.mxu0 0
    %1035 = vmatpush1.bf16.msra.mxu0 0
    %1036 = vmatprep.mubr.bf16.mxu0 0
    %1037 = vmatmul.mubr.bf16.gmra.mrb[0].mxu0 %v998
    %v1038 = vpop.f32.mrb[0].mxu0
    %v1039 = vadd.f32 0.0, %v1038
    %v1040 = vpop.f32.mrb[0].mxu0
    %v1041 = vpop.f32.mrb[0].mxu0
    %v1042 = vpop.f32.mrb[0].mxu0
    %1043 = vdwg.mxu0
    %v1045 = vsel %vm970, %v994, 0
    %v1048 = vsel %vm1000, %v996, 0
    %1050 = vmatprep.subr.bf16.mxu0 0
    %1051 = vmatpush1.bf16.msra.mxu0 %v1048
    %1052 = vmatprep.subr.bf16.mxu0 0
    %1053 = vmatpush1.bf16.msra.mxu0 0
    %1054 = vmatprep.subr.bf16.mxu0 0
    %1055 = vmatpush1.bf16.msra.mxu0 0
    %1056 = vmatprep.subr.bf16.mxu0 0
    %1057 = vmatpush1.bf16.msra.mxu0 0
    %1058 = vmatprep.subr.bf16.mxu0 0
    %1059 = vmatpush1.bf16.msra.mxu0 0
    %1060 = vmatprep.subr.bf16.mxu0 0
    %1061 = vmatpush1.bf16.msra.mxu0 0
    %1062 = vmatprep.subr.bf16.mxu0 0
    %1063 = vmatpush1.bf16.msra.mxu0 0
    %1064 = vmatprep.subr.bf16.mxu0 0
    %1065 = vmatpush1.bf16.msra.mxu0 0
    %1066 = vmatprep.subr.bf16.mxu0 0
    %1067 = vmatpush1.bf16.msra.mxu0 0
    %1068 = vmatprep.subr.bf16.mxu0 0
    %1069 = vmatpush1.bf16.msra.mxu0 0
    %1070 = vmatprep.subr.bf16.mxu0 0
    %1071 = vmatpush1.bf16.msra.mxu0 0
    %1072 = vmatprep.subr.bf16.mxu0 0
    %1073 = vmatpush1.bf16.msra.mxu0 0
    %1074 = vmatprep.subr.bf16.mxu0 0
    %1075 = vmatpush1.bf16.msra.mxu0 0
    %1076 = vmatprep.subr.bf16.mxu0 0
    %1077 = vmatpush1.bf16.msra.mxu0 0
    %1078 = vmatprep.subr.bf16.mxu0 0
    %1079 = vmatpush1.bf16.msra.mxu0 0
    %1080 = vmatprep.subr.bf16.mxu0 0
    %1081 = vmatpush1.bf16.msra.mxu0 0
    %1082 = vmatprep.mubr.bf16.mxu0 0
    %1083 = vmatmul.mubr.bf16.gmra.mrb[0].mxu0 %v1045
    %v1084 = vpop.f32.mrb[0].mxu0
    %v1085 = vadd.f32 0.0, %v1084
    %v1086 = vpop.f32.mrb[0].mxu0
    %v1087 = vpop.f32.mrb[0].mxu0
    %v1088 = vpop.f32.mrb[0].mxu0
    %1089 = vdwg.mxu0
    %v1090 = vpack.c.bf16 %v1085, %v1039
    %v1091 = vld [vmem:[#allocation16] sm:$0xf]
    %v1092 = vld [vmem:[#allocation16 + $0x4] sm:$0xf]
    %v1093 = vld [vmem:[#allocation16 + $0x8] sm:$0xf]
    %v1094 = vld [vmem:[#allocation16 + $0xc] sm:$0xf]
    %v1095 = vld [vmem:[#allocation16 + $0x10] sm:$0xf]
    %v1096 = vld [vmem:[#allocation16 + $0x14] sm:$0xf]
    %v1097 = vld [vmem:[#allocation16 + $0x18] sm:$0xf]
    %v1098 = vld [vmem:[#allocation16 + $0x1c] sm:$0xf]
    %v1099 = vld [vmem:[#allocation16 + $0x20] sm:$0xf]
    %v1100 = vld [vmem:[#allocation16 + $0x24] sm:$0xf]
    %v1101 = vld [vmem:[#allocation16 + $0x28] sm:$0xf]
    %v1102 = vld [vmem:[#allocation16 + $0x2c] sm:$0xf]
    %v1103 = vld [vmem:[#allocation16 + $0x30] sm:$0xf]
    %v1104 = vld [vmem:[#allocation16 + $0x34] sm:$0xf]
    %v1105 = vld [vmem:[#allocation16 + $0x38] sm:$0xf]
    %v1106 = vld [vmem:[#allocation16 + $0x3c] sm:$0xf]
    %v1107 = vld [vmem:[#allocation22] sm:$0x1]
    %v1109 = vlaneseq
    %v1110 = vshrl.u32 %v1109, 7
    %v1111 = vsub.s32 0, %v1110
    %v1112 = vrot.slane %v1107, %v1111
    %v1130 = vunpack.c.l.b16 %v1091
    %v1131 = vunpack.c.l.b16 %v1092
    %v1132 = vunpack.c.l.b16 %v1093
    %v1133 = vunpack.c.l.b16 %v1094
    %v1134 = vunpack.c.l.b16 %v1095
    %v1135 = vunpack.c.l.b16 %v1096
    %v1136 = vunpack.c.l.b16 %v1097
    %v1137 = vunpack.c.l.b16 %v1098
    %v1138 = vunpack.c.l.b16 %v1099
    %v1139 = vunpack.c.l.b16 %v1100
    %v1140 = vunpack.c.l.b16 %v1101
    %v1141 = vunpack.c.l.b16 %v1102
    %v1142 = vunpack.c.l.b16 %v1103
    %v1143 = vunpack.c.l.b16 %v1104
    %v1144 = vunpack.c.l.b16 %v1105
    %v1145 = vunpack.c.l.b16 %v1106
    %v1146 = vpack.c.b16 %v1131, %v1130
    %v1147 = vpack.c.b16 %v1133, %v1132
    %v1148 = vpack.c.b16 %v1135, %v1134
    %v1149 = vpack.c.b16 %v1137, %v1136
    %v1150 = vpack.c.b16 %v1139, %v1138
    %v1151 = vpack.c.b16 %v1141, %v1140
    %v1152 = vpack.c.b16 %v1143, %v1142
    %v1153 = vpack.c.b16 %v1145, %v1144
    %1162 = vmatprep.subr.bf16.mxu0 0
    %1163 = vmatpush1.bf16.msra.mxu0 %v1146
    %1164 = vmatprep.subr.bf16.mxu0 0
    %1165 = vmatpush1.bf16.msra.mxu0 %v1147
    %1166 = vmatprep.subr.bf16.mxu0 0
    %1167 = vmatpush1.bf16.msra.mxu0 %v1148
    %1168 = vmatprep.subr.bf16.mxu0 0
    %1169 = vmatpush1.bf16.msra.mxu0 %v1149
    %1170 = vmatprep.subr.bf16.mxu0 0
    %1171 = vmatpush1.bf16.msra.mxu0 %v1150
    %1172 = vmatprep.subr.bf16.mxu0 0
    %1173 = vmatpush1.bf16.msra.mxu0 %v1151
    %1174 = vmatprep.subr.bf16.mxu0 0
    %1175 = vmatpush1.bf16.msra.mxu0 %v1152
    %1176 = vmatprep.subr.bf16.mxu0 0
    %1177 = vmatpush1.bf16.msra.mxu0 %v1153
    %1178 = vmatprep.subr.bf16.mxu0 0
    %1179 = vmatpush1.bf16.msra.mxu0 0
    %1180 = vmatprep.subr.bf16.mxu0 0
    %1181 = vmatpush1.bf16.msra.mxu0 0
    %1182 = vmatprep.subr.bf16.mxu0 0
    %1183 = vmatpush1.bf16.msra.mxu0 0
    %1184 = vmatprep.subr.bf16.mxu0 0
    %1185 = vmatpush1.bf16.msra.mxu0 0
    %1186 = vmatprep.subr.bf16.mxu0 0
    %1187 = vmatpush1.bf16.msra.mxu0 0
    %1188 = vmatprep.subr.bf16.mxu0 0
    %1189 = vmatpush1.bf16.msra.mxu0 0
    %1190 = vmatprep.subr.bf16.mxu0 0
    %1191 = vmatpush1.bf16.msra.mxu0 0
    %1192 = vmatprep.subr.bf16.mxu0 0
    %1193 = vmatpush1.bf16.msra.mxu0 0
    %1194 = vmatprep.mubr.bf16.mxu0 0
    %1195 = vmatmul.mubr.bf16.gmra.mrb[0].mxu0 %v1090
    %v1196 = vpop.f32.mrb[0].mxu0
    %v1197 = vadd.f32 %v1112, %v1196
    %v1198 = vpop.f32.mrb[0].mxu0
    %v1199 = vpop.f32.mrb[0].mxu0
    %v1200 = vadd.f32 %v1112, %v1199
    %v1201 = vpop.f32.mrb[0].mxu0
    %1202 = vdwg.mxu0
    %v1203 = vld [vmem:[#allocation23] sm:$0x1]
    %v1204 = vld [vmem:[#allocation25] sm:$0x1]
    %v1205 = vadd.f32 %v517, %v1197
    %v1206 = vadd.f32 %v518, %v1200
    %1207 = vadd.xlane.f32.xlu0 %v1205
    %v1208 = vpop.xlane.xlu0 %1207
    %1209 = vadd.xlane.f32.xlu0 %v1206
    %v1210 = vpop.xlane.xlu0 %1209
    %v1211 = vmul.f32 %v1208, 0.03125
    %v1212 = vmul.f32 %v1210, 0.03125
    %v1213 = vmul.f32 %v1205, %v1205
    %v1214 = vmul.f32 %v1206, %v1206
    %1215 = vadd.xlane.f32.xlu0 %v1213
    %v1216 = vpop.xlane.xlu0 %1215
    %1217 = vadd.xlane.f32.xlu0 %v1214
    %v1218 = vpop.xlane.xlu0 %1217
    %v1219 = vmul.f32 %v1216, 0.03125
    %v1220 = vmul.f32 %v1218, 0.03125
    %v1221 = vmul.f32 %v1211, %v1211
    %v1222 = vmul.f32 %v1212, %v1212
    %v1223 = vsub.f32 %v1219, %v1221
    %v1224 = vsub.f32 %v1220, %v1222
    %v1225 = vsub.f32 %v1205, %v1211
    %v1226 = vsub.f32 %v1206, %v1212
    %v1227 = vadd.f32 %v1223, 1e-05
    %v1228 = vadd.f32 %v1224, 1e-05
    %v1229 = vrsqrt.pop %v1227
    %v1230 = vrsqrt.pop %v1228
    %v1231 = vmul.f32 %v1225, %v1229
    %v1232 = vmul.f32 %v1226, %v1230
    %v1234 = vlaneseq
    %v1235 = vshrl.u32 %v1234, 7
    %v1236 = vsub.s32 0, %v1235
    %v1237 = vrot.slane %v1203, %v1236
    %v1239 = vmul.f32 %v1231, %v1237
    %v1240 = vmul.f32 %v1232, %v1237
    %v1242 = vlaneseq
    %v1243 = vshrl.u32 %v1242, 7
    %v1244 = vsub.s32 0, %v1243
    %v1245 = vrot.slane %v1204, %v1244
    %v1247 = vadd.f32 %v1239, %v1245
    %v1248 = vadd.f32 %v1240, %v1245
    %v1249 = vpack.c.bf16 %v1248, %v1247
    %v1250 = vld [vmem:[#allocation26] sm:$0xf]
    %v1251 = vld [vmem:[#allocation26 + $0x4] sm:$0xf]
    %v1252 = vld [vmem:[#allocation26 + $0x8] sm:$0xf]
    %v1253 = vld [vmem:[#allocation26 + $0xc] sm:$0xf]
    %v1254 = vld [vmem:[#allocation26 + $0x10] sm:$0xf]
    %v1255 = vld [vmem:[#allocation26 + $0x14] sm:$0xf]
    %v1256 = vld [vmem:[#allocation26 + $0x18] sm:$0xf]
    %v1257 = vld [vmem:[#allocation26 + $0x1c] sm:$0xf]
    %v1258 = vld [vmem:[#allocation26 + $0x20] sm:$0xf]
    %v1259 = vld [vmem:[#allocation26 + $0x24] sm:$0xf]
    %v1260 = vld [vmem:[#allocation26 + $0x28] sm:$0xf]
    %v1261 = vld [vmem:[#allocation26 + $0x2c] sm:$0xf]
    %v1262 = vld [vmem:[#allocation26 + $0x30] sm:$0xf]
    %v1263 = vld [vmem:[#allocation26 + $0x34] sm:$0xf]
    %v1264 = vld [vmem:[#allocation26 + $0x38] sm:$0xf]
    %v1265 = vld [vmem:[#allocation26 + $0x3c] sm:$0xf]
    %v1266 = vld [vmem:[#allocation32] sm:$0x1]
    %v1268 = vlaneseq
    %v1269 = vshrl.u32 %v1268, 7
    %v1270 = vsub.s32 0, %v1269
    %v1271 = vrot.slane %v1266, %v1270
    %v1289 = vunpack.c.l.b16 %v1250
    %v1290 = vunpack.c.l.b16 %v1251
    %v1291 = vunpack.c.l.b16 %v1252
    %v1292 = vunpack.c.l.b16 %v1253
    %v1293 = vunpack.c.l.b16 %v1254
    %v1294 = vunpack.c.l.b16 %v1255
    %v1295 = vunpack.c.l.b16 %v1256
    %v1296 = vunpack.c.l.b16 %v1257
    %v1297 = vunpack.c.l.b16 %v1258
    %v1298 = vunpack.c.l.b16 %v1259
    %v1299 = vunpack.c.l.b16 %v1260
    %v1300 = vunpack.c.l.b16 %v1261
    %v1301 = vunpack.c.l.b16 %v1262
    %v1302 = vunpack.c.l.b16 %v1263
    %v1303 = vunpack.c.l.b16 %v1264
    %v1304 = vunpack.c.l.b16 %v1265
    %v1305 = vpack.c.b16 %v1290, %v1289
    %v1306 = vpack.c.b16 %v1292, %v1291
    %v1307 = vpack.c.b16 %v1294, %v1293
    %v1308 = vpack.c.b16 %v1296, %v1295
    %v1309 = vpack.c.b16 %v1298, %v1297
    %v1310 = vpack.c.b16 %v1300, %v1299
    %v1311 = vpack.c.b16 %v1302, %v1301
    %v1312 = vpack.c.b16 %v1304, %v1303
    %1321 = vmatprep.subr.bf16.mxu0 0
    %1322 = vmatpush1.bf16.msra.mxu0 %v1305
    %1323 = vmatprep.subr.bf16.mxu0 0
    %1324 = vmatpush1.bf16.msra.mxu0 %v1306
    %1325 = vmatprep.subr.bf16.mxu0 0
    %1326 = vmatpush1.bf16.msra.mxu0 %v1307
    %1327 = vmatprep.subr.bf16.mxu0 0
    %1328 = vmatpush1.bf16.msra.mxu0 %v1308
    %1329 = vmatprep.subr.bf16.mxu0 0
    %1330 = vmatpush1.bf16.msra.mxu0 %v1309
    %1331 = vmatprep.subr.bf16.mxu0 0
    %1332 = vmatpush1.bf16.msra.mxu0 %v1310
    %1333 = vmatprep.subr.bf16.mxu0 0
    %1334 = vmatpush1.bf16.msra.mxu0 %v1311
    %1335 = vmatprep.subr.bf16.mxu0 0
    %1336 = vmatpush1.bf16.msra.mxu0 %v1312
    %1337 = vmatprep.subr.bf16.mxu0 0
    %1338 = vmatpush1.bf16.msra.mxu0 0
    %1339 = vmatprep.subr.bf16.mxu0 0
    %1340 = vmatpush1.bf16.msra.mxu0 0
    %1341 = vmatprep.subr.bf16.mxu0 0
    %1342 = vmatpush1.bf16.msra.mxu0 0
    %1343 = vmatprep.subr.bf16.mxu0 0
    %1344 = vmatpush1.bf16.msra.mxu0 0
    %1345 = vmatprep.subr.bf16.mxu0 0
    %1346 = vmatpush1.bf16.msra.mxu0 0
    %1347 = vmatprep.subr.bf16.mxu0 0
    %1348 = vmatpush1.bf16.msra.mxu0 0
    %1349 = vmatprep.subr.bf16.mxu0 0
    %1350 = vmatpush1.bf16.msra.mxu0 0
    %1351 = vmatprep.subr.bf16.mxu0 0
    %1352 = vmatpush1.bf16.msra.mxu0 0
    %1353 = vmatprep.mubr.bf16.mxu0 0
    %1354 = vmatmul.mubr.bf16.gmra.mrb[0].mxu0 %v1249
    %v1355 = vpop.f32.mrb[0].mxu0
    %v1356 = vadd.f32 %v1271, %v1355
    %v1357 = vpop.f32.mrb[0].mxu0
    %v1358 = vpop.f32.mrb[0].mxu0
    %v1359 = vadd.f32 %v1271, %v1358
    %v1360 = vpop.f32.mrb[0].mxu0
    %1361 = vdwg.mxu0
    %v1362 = vmul.f32 %v1356, 0.17677669
    %v1363 = vmul.f32 %v1359, 0.17677669
    %v1364 = vpack.c.bf16 %v520, %v519
    %v1365 = vld [vmem:[#allocation28] sm:$0xf]
    %v1366 = vld [vmem:[#allocation28 + $0x4] sm:$0xf]
    %v1367 = vld [vmem:[#allocation28 + $0x8] sm:$0xf]
    %v1368 = vld [vmem:[#allocation28 + $0xc] sm:$0xf]
    %v1369 = vld [vmem:[#allocation28 + $0x10] sm:$0xf]
    %v1370 = vld [vmem:[#allocation28 + $0x14] sm:$0xf]
    %v1371 = vld [vmem:[#allocation28 + $0x18] sm:$0xf]
    %v1372 = vld [vmem:[#allocation28 + $0x1c] sm:$0xf]
    %v1373 = vld [vmem:[#allocation28 + $0x20] sm:$0xf]
    %v1374 = vld [vmem:[#allocation28 + $0x24] sm:$0xf]
    %v1375 = vld [vmem:[#allocation28 + $0x28] sm:$0xf]
    %v1376 = vld [vmem:[#allocation28 + $0x2c] sm:$0xf]
    %v1377 = vld [vmem:[#allocation28 + $0x30] sm:$0xf]
    %v1378 = vld [vmem:[#allocation28 + $0x34] sm:$0xf]
    %v1379 = vld [vmem:[#allocation28 + $0x38] sm:$0xf]
    %v1380 = vld [vmem:[#allocation28 + $0x3c] sm:$0xf]
    %v1381 = vld [vmem:[#allocation34] sm:$0x1]
    %v1383 = vlaneseq
    %v1384 = vshrl.u32 %v1383, 7
    %v1385 = vsub.s32 0, %v1384
    %v1386 = vrot.slane %v1381, %v1385
    %v1404 = vunpack.c.l.b16 %v1365
    %v1405 = vunpack.c.l.b16 %v1366
    %v1406 = vunpack.c.l.b16 %v1367
    %v1407 = vunpack.c.l.b16 %v1368
    %v1408 = vunpack.c.l.b16 %v1369
    %v1409 = vunpack.c.l.b16 %v1370
    %v1410 = vunpack.c.l.b16 %v1371
    %v1411 = vunpack.c.l.b16 %v1372
    %v1412 = vunpack.c.l.b16 %v1373
    %v1413 = vunpack.c.l.b16 %v1374
    %v1414 = vunpack.c.l.b16 %v1375
    %v1415 = vunpack.c.l.b16 %v1376
    %v1416 = vunpack.c.l.b16 %v1377
    %v1417 = vunpack.c.l.b16 %v1378
    %v1418 = vunpack.c.l.b16 %v1379
    %v1419 = vunpack.c.l.b16 %v1380
    %v1420 = vpack.c.b16 %v1405, %v1404
    %v1421 = vpack.c.b16 %v1407, %v1406
    %v1422 = vpack.c.b16 %v1409, %v1408
    %v1423 = vpack.c.b16 %v1411, %v1410
    %v1424 = vpack.c.b16 %v1413, %v1412
    %v1425 = vpack.c.b16 %v1415, %v1414
    %v1426 = vpack.c.b16 %v1417, %v1416
    %v1427 = vpack.c.b16 %v1419, %v1418
    %1436 = vmatprep.subr.bf16.mxu0 0
    %1437 = vmatpush1.bf16.msra.mxu0 %v1420
    %1438 = vmatprep.subr.bf16.mxu0 0
    %1439 = vmatpush1.bf16.msra.mxu0 %v1421
    %1440 = vmatprep.subr.bf16.mxu0 0
    %1441 = vmatpush1.bf16.msra.mxu0 %v1422
    %1442 = vmatprep.subr.bf16.mxu0 0
    %1443 = vmatpush1.bf16.msra.mxu0 %v1423
    %1444 = vmatprep.subr.bf16.mxu0 0
    %1445 = vmatpush1.bf16.msra.mxu0 %v1424
    %1446 = vmatprep.subr.bf16.mxu0 0
    %1447 = vmatpush1.bf16.msra.mxu0 %v1425
    %1448 = vmatprep.subr.bf16.mxu0 0
    %1449 = vmatpush1.bf16.msra.mxu0 %v1426
    %1450 = vmatprep.subr.bf16.mxu0 0
    %1451 = vmatpush1.bf16.msra.mxu0 %v1427
    %1452 = vmatprep.subr.bf16.mxu0 0
    %1453 = vmatpush1.bf16.msra.mxu0 0
    %1454 = vmatprep.subr.bf16.mxu0 0
    %1455 = vmatpush1.bf16.msra.mxu0 0
    %1456 = vmatprep.subr.bf16.mxu0 0
    %1457 = vmatpush1.bf16.msra.mxu0 0
    %1458 = vmatprep.subr.bf16.mxu0 0
    %1459 = vmatpush1.bf16.msra.mxu0 0
    %1460 = vmatprep.subr.bf16.mxu0 0
    %1461 = vmatpush1.bf16.msra.mxu0 0
    %1462 = vmatprep.subr.bf16.mxu0 0
    %1463 = vmatpush1.bf16.msra.mxu0 0
    %1464 = vmatprep.subr.bf16.mxu0 0
    %1465 = vmatpush1.bf16.msra.mxu0 0
    %1466 = vmatprep.subr.bf16.mxu0 0
    %1467 = vmatpush1.bf16.msra.mxu0 0
    %1468 = vmatprep.mubr.bf16.mxu0 0
    %1469 = vmatmul.mubr.bf16.gmra.mrb[0].mxu0 %v1364
    %v1470 = vpop.f32.mrb[0].mxu0
    %v1471 = vadd.f32 %v1386, %v1470
    %v1472 = vpop.f32.mrb[0].mxu0
    %v1473 = vpop.f32.mrb[0].mxu0
    %v1474 = vadd.f32 %v1386, %v1473
    %v1475 = vpop.f32.mrb[0].mxu0
    %1476 = vdwg.mxu0
    %v1477 = vld [vmem:[#allocation29] sm:$0xf]
    %v1478 = vld [vmem:[#allocation29 + $0x4] sm:$0xf]
    %v1479 = vld [vmem:[#allocation29 + $0x8] sm:$0xf]
    %v1480 = vld [vmem:[#allocation29 + $0xc] sm:$0xf]
    %v1481 = vld [vmem:[#allocation29 + $0x10] sm:$0xf]
    %v1482 = vld [vmem:[#allocation29 + $0x14] sm:$0xf]
    %v1483 = vld [vmem:[#allocation29 + $0x18] sm:$0xf]
    %v1484 = vld [vmem:[#allocation29 + $0x1c] sm:$0xf]
    %v1485 = vld [vmem:[#allocation29 + $0x20] sm:$0xf]
    %v1486 = vld [vmem:[#allocation29 + $0x24] sm:$0xf]
    %v1487 = vld [vmem:[#allocation29 + $0x28] sm:$0xf]
    %v1488 = vld [vmem:[#allocation29 + $0x2c] sm:$0xf]
    %v1489 = vld [vmem:[#allocation29 + $0x30] sm:$0xf]
    %v1490 = vld [vmem:[#allocation29 + $0x34] sm:$0xf]
    %v1491 = vld [vmem:[#allocation29 + $0x38] sm:$0xf]
    %v1492 = vld [vmem:[#allocation29 + $0x3c] sm:$0xf]
    %v1493 = vld [vmem:[#allocation35] sm:$0x1]
    %v1495 = vlaneseq
    %v1496 = vshrl.u32 %v1495, 7
    %v1497 = vsub.s32 0, %v1496
    %v1498 = vrot.slane %v1493, %v1497
    %v1516 = vunpack.c.l.b16 %v1477
    %v1517 = vunpack.c.l.b16 %v1478
    %v1518 = vunpack.c.l.b16 %v1479
    %v1519 = vunpack.c.l.b16 %v1480
    %v1520 = vunpack.c.l.b16 %v1481
    %v1521 = vunpack.c.l.b16 %v1482
    %v1522 = vunpack.c.l.b16 %v1483
    %v1523 = vunpack.c.l.b16 %v1484
    %v1524 = vunpack.c.l.b16 %v1485
    %v1525 = vunpack.c.l.b16 %v1486
    %v1526 = vunpack.c.l.b16 %v1487
    %v1527 = vunpack.c.l.b16 %v1488
    %v1528 = vunpack.c.l.b16 %v1489
    %v1529 = vunpack.c.l.b16 %v1490
    %v1530 = vunpack.c.l.b16 %v1491
    %v1531 = vunpack.c.l.b16 %v1492
    %v1532 = vpack.c.b16 %v1517, %v1516
    %v1533 = vpack.c.b16 %v1519, %v1518
    %v1534 = vpack.c.b16 %v1521, %v1520
    %v1535 = vpack.c.b16 %v1523, %v1522
    %v1536 = vpack.c.b16 %v1525, %v1524
    %v1537 = vpack.c.b16 %v1527, %v1526
    %v1538 = vpack.c.b16 %v1529, %v1528
    %v1539 = vpack.c.b16 %v1531, %v1530
    %1548 = vmatprep.subr.bf16.mxu0 0
    %1549 = vmatpush1.bf16.msra.mxu0 %v1532
    %1550 = vmatprep.subr.bf16.mxu0 0
    %1551 = vmatpush1.bf16.msra.mxu0 %v1533
    %1552 = vmatprep.subr.bf16.mxu0 0
    %1553 = vmatpush1.bf16.msra.mxu0 %v1534
    %1554 = vmatprep.subr.bf16.mxu0 0
    %1555 = vmatpush1.bf16.msra.mxu0 %v1535
    %1556 = vmatprep.subr.bf16.mxu0 0
    %1557 = vmatpush1.bf16.msra.mxu0 %v1536
    %1558 = vmatprep.subr.bf16.mxu0 0
    %1559 = vmatpush1.bf16.msra.mxu0 %v1537
    %1560 = vmatprep.subr.bf16.mxu0 0
    %1561 = vmatpush1.bf16.msra.mxu0 %v1538
    %1562 = vmatprep.subr.bf16.mxu0 0
    %1563 = vmatpush1.bf16.msra.mxu0 %v1539
    %1564 = vmatprep.subr.bf16.mxu0 0
    %1565 = vmatpush1.bf16.msra.mxu0 0
    %1566 = vmatprep.subr.bf16.mxu0 0
    %1567 = vmatpush1.bf16.msra.mxu0 0
    %1568 = vmatprep.subr.bf16.mxu0 0
    %1569 = vmatpush1.bf16.msra.mxu0 0
    %1570 = vmatprep.subr.bf16.mxu0 0
    %1571 = vmatpush1.bf16.msra.mxu0 0
    %1572 = vmatprep.subr.bf16.mxu0 0
    %1573 = vmatpush1.bf16.msra.mxu0 0
    %1574 = vmatprep.subr.bf16.mxu0 0
    %1575 = vmatpush1.bf16.msra.mxu0 0
    %1576 = vmatprep.subr.bf16.mxu0 0
    %1577 = vmatpush1.bf16.msra.mxu0 0
    %1578 = vmatprep.subr.bf16.mxu0 0
    %1579 = vmatpush1.bf16.msra.mxu0 0
    %1580 = vmatprep.mubr.bf16.mxu0 0
    %1581 = vmatmul.mubr.bf16.gmra.mrb[0].mxu0 %v1364
    %v1582 = vpop.f32.mrb[0].mxu0
    %v1583 = vadd.f32 %v1498, %v1582
    %v1584 = vpop.f32.mrb[0].mxu0
    %v1585 = vpop.f32.mrb[0].mxu0
    %v1586 = vadd.f32 %v1498, %v1585
    %v1587 = vpop.f32.mrb[0].mxu0
    %1588 = vdwg.mxu0
    %v1589 = vpack.c.bf16 %v1362, %v1362
    %v1590 = vpack.c.bf16 %v1363, %v1363
    %v1591 = vpack.c.bf16 %v1471, %v1471
    %v1592 = vpack.c.bf16 %v1474, %v1474
    %1593 = vmatprep.subr.bf16.mxu0 0
    %1594 = vmatpush1.bf16.xpose.msra.mxu0 %v1591
    %1595 = vmatprep.subr.bf16.mxu0 0
    %1596 = vmatpush1.bf16.xpose.msra.mxu0 0
    %1597 = vmatprep.subr.bf16.mxu0 0
    %1598 = vmatpush1.bf16.xpose.msra.mxu0 0
    %1599 = vmatprep.subr.bf16.mxu0 0
    %1600 = vmatpush1.bf16.xpose.msra.mxu0 0
    %1601 = vmatprep.subr.bf16.mxu0 0
    %1602 = vmatpush1.bf16.xpose.msra.mxu0 0
    %1603 = vmatprep.subr.bf16.mxu0 0
    %1604 = vmatpush1.bf16.xpose.msra.mxu0 0
    %1605 = vmatprep.subr.bf16.mxu0 0
    %1606 = vmatpush1.bf16.xpose.msra.mxu0 0
    %1607 = vmatprep.subr.bf16.mxu0 0
    %1608 = vmatpush1.bf16.xpose.msra.mxu0 0
    %1609 = vmatprep.subr.bf16.mxu0 0
    %1610 = vmatpush1.bf16.xpose.msra.mxu0 0
    %1611 = vmatprep.subr.bf16.mxu0 0
    %1612 = vmatpush1.bf16.xpose.msra.mxu0 0
    %1613 = vmatprep.subr.bf16.mxu0 0
    %1614 = vmatpush1.bf16.xpose.msra.mxu0 0
    %1615 = vmatprep.subr.bf16.mxu0 0
    %1616 = vmatpush1.bf16.xpose.msra.mxu0 0
    %1617 = vmatprep.subr.bf16.mxu0 0
    %1618 = vmatpush1.bf16.xpose.msra.mxu0 0
    %1619 = vmatprep.subr.bf16.mxu0 0
    %1620 = vmatpush1.bf16.xpose.msra.mxu0 0
    %1621 = vmatprep.subr.bf16.mxu0 0
    %1622 = vmatpush1.bf16.xpose.msra.mxu0 0
    %1623 = vmatprep.subr.bf16.mxu0 0
    %1624 = vmatpush1.bf16.xpose.msra.mxu0 0
    %1625 = vmatprep.mubr.bf16.mxu0 0
    %1626 = vmatmul.mubr.bf16.gmra.mrb[0].mxu0 %v1589
    %v1627 = vpop.f32.mrb[0].mxu0
    %v1628 = vadd.f32 0.0, %v1627
    %v1629 = vpop.f32.mrb[0].mxu0
    %v1630 = vpop.f32.mrb[0].mxu0
    %v1631 = vpop.f32.mrb[0].mxu0
    %1632 = vdwg.mxu0
    %1633 = vmatprep.subr.bf16.mxu0 0
    %1634 = vmatpush1.bf16.xpose.msra.mxu0 %v1592
    %1635 = vmatprep.subr.bf16.mxu0 0
    %1636 = vmatpush1.bf16.xpose.msra.mxu0 0
    %1637 = vmatprep.subr.bf16.mxu0 0
    %1638 = vmatpush1.bf16.xpose.msra.mxu0 0
    %1639 = vmatprep.subr.bf16.mxu0 0
    %1640 = vmatpush1.bf16.xpose.msra.mxu0 0
    %1641 = vmatprep.subr.bf16.mxu0 0
    %1642 = vmatpush1.bf16.xpose.msra.mxu0 0
    %1643 = vmatprep.subr.bf16.mxu0 0
    %1644 = vmatpush1.bf16.xpose.msra.mxu0 0
    %1645 = vmatprep.subr.bf16.mxu0 0
    %1646 = vmatpush1.bf16.xpose.msra.mxu0 0
    %1647 = vmatprep.subr.bf16.mxu0 0
    %1648 = vmatpush1.bf16.xpose.msra.mxu0 0
    %1649 = vmatprep.subr.bf16.mxu0 0
    %1650 = vmatpush1.bf16.xpose.msra.mxu0 0
    %1651 = vmatprep.subr.bf16.mxu0 0
    %1652 = vmatpush1.bf16.xpose.msra.mxu0 0
    %1653 = vmatprep.subr.bf16.mxu0 0
    %1654 = vmatpush1.bf16.xpose.msra.mxu0 0
    %1655 = vmatprep.subr.bf16.mxu0 0
    %1656 = vmatpush1.bf16.xpose.msra.mxu0 0
    %1657 = vmatprep.subr.bf16.mxu0 0
    %1658 = vmatpush1.bf16.xpose.msra.mxu0 0
    %1659 = vmatprep.subr.bf16.mxu0 0
    %1660 = vmatpush1.bf16.xpose.msra.mxu0 0
    %1661 = vmatprep.subr.bf16.mxu0 0
    %1662 = vmatpush1.bf16.xpose.msra.mxu0 0
    %1663 = vmatprep.subr.bf16.mxu0 0
    %1664 = vmatpush1.bf16.xpose.msra.mxu0 0
    %1665 = vmatprep.mubr.bf16.mxu0 0
    %1666 = vmatmul.mubr.bf16.gmra.mrb[0].mxu0 %v1590
    %v1667 = vpop.f32.mrb[0].mxu0
    %v1668 = vadd.f32 0.0, %v1667
    %v1669 = vpop.f32.mrb[0].mxu0
    %v1670 = vpop.f32.mrb[0].mxu0
    %v1671 = vpop.f32.mrb[0].mxu0
    %1672 = vdwg.mxu0
    %vm1673 = vcmp.gt.f32.partialorder %v523, 0.0
    %vm1674 = vcmp.gt.f32.partialorder %v524, 0.0
    %v1675 = vsel %vm1673, 1, 0
    %v1676 = vsel %vm1674, 1, 0
    %v1677 = vlaneseq
    %v1678 = vshrl.u32 %v1677, 7
    %v1679 = vsub.s32 0, %v1678
    %v1680 = vrot.slane %v1675, %v1679
    %v1681 = vlaneseq
    %v1682 = vshrl.u32 %v1681, 7
    %v1683 = vsub.s32 0, %v1682
    %v1684 = vrot.slane %v1676, %v1683
    %vm1685 = vcmp.eq.s32.totalorder %v1680, 1
    %vm1686 = vcmp.eq.s32.totalorder %v1684, 1
    %v1687 = vsel %vm1685, %v1628, -1e+09
    %v1688 = vsel %vm1686, %v1668, -1e+09
    %v1689 = vsel %vm970, %v1687, -inf
    %1690 = vmax.xlane.f32.xlu0 %v1689
    %v1691 = vpop.xlane.xlu0 %1690
    %v1692 = vsel %vm970, %v1688, -inf
    %1693 = vmax.xlane.f32.xlu0 %v1692
    %v1694 = vpop.xlane.xlu0 %1693
    %v1695 = vsub.f32 %v1687, %v1691
    %v1696 = vsub.f32 %v1688, %v1694
    %v1697 = vmul.f32 %v1695, 1.442695
    %v1698 = vpow.pop %v1697
    %v1699 = vmul.f32 %v1696, 1.442695
    %v1700 = vpow.pop %v1699
    %v1701 = vsel %vm970, %v1698, 0.0
    %1702 = vadd.xlane.f32.xlu0 %v1701
    %v1703 = vpop.xlane.xlu0 %1702
    %v1704 = vsel %vm970, %v1700, 0.0
    %1705 = vadd.xlane.f32.xlu0 %v1704
    %v1706 = vpop.xlane.xlu0 %1705
    %v1707 = vrcp.pop %v1703
    %v1708 = vrcp.pop %v1706
    %v1709 = vmul.f32 %v1698, %v1707
    %v1710 = vmul.f32 %v1700, %v1708
    %v1711 = vpack.c.bf16 %v1709, %v1709
    %v1712 = vpack.c.bf16 %v1710, %v1710
    %v1713 = vpack.c.bf16 %v1583, %v1583
    %v1714 = vpack.c.bf16 %v1586, %v1586
    %v1716 = vsel %vm970, %v1711, 0
    %v1719 = vsel %vm1000, %v1713, 0
    %1721 = vmatprep.subr.bf16.mxu0 0
    %1722 = vmatpush1.bf16.msra.mxu0 %v1719
    %1723 = vmatprep.subr.bf16.mxu0 0
    %1724 = vmatpush1.bf16.msra.mxu0 0
    %1725 = vmatprep.subr.bf16.mxu0 0
    %1726 = vmatpush1.bf16.msra.mxu0 0
    %1727 = vmatprep.subr.bf16.mxu0 0
    %1728 = vmatpush1.bf16.msra.mxu0 0
    %1729 = vmatprep.subr.bf16.mxu0 0
    %1730 = vmatpush1.bf16.msra.mxu0 0
    %1731 = vmatprep.subr.bf16.mxu0 0
    %1732 = vmatpush1.bf16.msra.mxu0 0
    %1733 = vmatprep.subr.bf16.mxu0 0
    %1734 = vmatpush1.bf16.msra.mxu0 0
    %1735 = vmatprep.subr.bf16.mxu0 0
    %1736 = vmatpush1.bf16.msra.mxu0 0
    %1737 = vmatprep.subr.bf16.mxu0 0
    %1738 = vmatpush1.bf16.msra.mxu0 0
    %1739 = vmatprep.subr.bf16.mxu0 0
    %1740 = vmatpush1.bf16.msra.mxu0 0
    %1741 = vmatprep.subr.bf16.mxu0 0
    %1742 = vmatpush1.bf16.msra.mxu0 0
    %1743 = vmatprep.subr.bf16.mxu0 0
    %1744 = vmatpush1.bf16.msra.mxu0 0
    %1745 = vmatprep.subr.bf16.mxu0 0
    %1746 = vmatpush1.bf16.msra.mxu0 0
    %1747 = vmatprep.subr.bf16.mxu0 0
    %1748 = vmatpush1.bf16.msra.mxu0 0
    %1749 = vmatprep.subr.bf16.mxu0 0
    %1750 = vmatpush1.bf16.msra.mxu0 0
    %1751 = vmatprep.subr.bf16.mxu0 0
    %1752 = vmatpush1.bf16.msra.mxu0 0
    %1753 = vmatprep.mubr.bf16.mxu0 0
    %1754 = vmatmul.mubr.bf16.gmra.mrb[0].mxu0 %v1716
    %v1755 = vpop.f32.mrb[0].mxu0
    %v1756 = vadd.f32 0.0, %v1755
    %v1757 = vpop.f32.mrb[0].mxu0
    %v1758 = vpop.f32.mrb[0].mxu0
    %v1759 = vpop.f32.mrb[0].mxu0
    %1760 = vdwg.mxu0
    %v1762 = vsel %vm970, %v1712, 0
    %v1765 = vsel %vm1000, %v1714, 0
    %1767 = vmatprep.subr.bf16.mxu0 0
    %1768 = vmatpush1.bf16.msra.mxu0 %v1765
    %1769 = vmatprep.subr.bf16.mxu0 0
    %1770 = vmatpush1.bf16.msra.mxu0 0
    %1771 = vmatprep.subr.bf16.mxu0 0
    %1772 = vmatpush1.bf16.msra.mxu0 0
    %1773 = vmatprep.subr.bf16.mxu0 0
    %1774 = vmatpush1.bf16.msra.mxu0 0
    %1775 = vmatprep.subr.bf16.mxu0 0
    %1776 = vmatpush1.bf16.msra.mxu0 0
    %1777 = vmatprep.subr.bf16.mxu0 0
    %1778 = vmatpush1.bf16.msra.mxu0 0
    %1779 = vmatprep.subr.bf16.mxu0 0
    %1780 = vmatpush1.bf16.msra.mxu0 0
    %1781 = vmatprep.subr.bf16.mxu0 0
    %1782 = vmatpush1.bf16.msra.mxu0 0
    %1783 = vmatprep.subr.bf16.mxu0 0
    %1784 = vmatpush1.bf16.msra.mxu0 0
    %1785 = vmatprep.subr.bf16.mxu0 0
    %1786 = vmatpush1.bf16.msra.mxu0 0
    %1787 = vmatprep.subr.bf16.mxu0 0
    %1788 = vmatpush1.bf16.msra.mxu0 0
    %1789 = vmatprep.subr.bf16.mxu0 0
    %1790 = vmatpush1.bf16.msra.mxu0 0
    %1791 = vmatprep.subr.bf16.mxu0 0
    %1792 = vmatpush1.bf16.msra.mxu0 0
    %1793 = vmatprep.subr.bf16.mxu0 0
    %1794 = vmatpush1.bf16.msra.mxu0 0
    %1795 = vmatprep.subr.bf16.mxu0 0
    %1796 = vmatpush1.bf16.msra.mxu0 0
    %1797 = vmatprep.subr.bf16.mxu0 0
    %1798 = vmatpush1.bf16.msra.mxu0 0
    %1799 = vmatprep.mubr.bf16.mxu0 0
    %1800 = vmatmul.mubr.bf16.gmra.mrb[0].mxu0 %v1762
    %v1801 = vpop.f32.mrb[0].mxu0
    %v1802 = vadd.f32 0.0, %v1801
    %v1803 = vpop.f32.mrb[0].mxu0
    %v1804 = vpop.f32.mrb[0].mxu0
    %v1805 = vpop.f32.mrb[0].mxu0
    %1806 = vdwg.mxu0
    %v1807 = vpack.c.bf16 %v1802, %v1756
    %v1808 = vld [vmem:[#allocation31] sm:$0xf]
    %v1809 = vld [vmem:[#allocation31 + $0x4] sm:$0xf]
    %v1810 = vld [vmem:[#allocation31 + $0x8] sm:$0xf]
    %v1811 = vld [vmem:[#allocation31 + $0xc] sm:$0xf]
    %v1812 = vld [vmem:[#allocation31 + $0x10] sm:$0xf]
    %v1813 = vld [vmem:[#allocation31 + $0x14] sm:$0xf]
    %v1814 = vld [vmem:[#allocation31 + $0x18] sm:$0xf]
    %v1815 = vld [vmem:[#allocation31 + $0x1c] sm:$0xf]
    %v1816 = vld [vmem:[#allocation31 + $0x20] sm:$0xf]
    %v1817 = vld [vmem:[#allocation31 + $0x24] sm:$0xf]
    %v1818 = vld [vmem:[#allocation31 + $0x28] sm:$0xf]
    %v1819 = vld [vmem:[#allocation31 + $0x2c] sm:$0xf]
    %v1820 = vld [vmem:[#allocation31 + $0x30] sm:$0xf]
    %v1821 = vld [vmem:[#allocation31 + $0x34] sm:$0xf]
    %v1822 = vld [vmem:[#allocation31 + $0x38] sm:$0xf]
    %v1823 = vld [vmem:[#allocation31 + $0x3c] sm:$0xf]
    %v1824 = vld [vmem:[#allocation37] sm:$0x1]
    %v1826 = vlaneseq
    %v1827 = vshrl.u32 %v1826, 7
    %v1828 = vsub.s32 0, %v1827
    %v1829 = vrot.slane %v1824, %v1828
    %v1847 = vunpack.c.l.b16 %v1808
    %v1848 = vunpack.c.l.b16 %v1809
    %v1849 = vunpack.c.l.b16 %v1810
    %v1850 = vunpack.c.l.b16 %v1811
    %v1851 = vunpack.c.l.b16 %v1812
    %v1852 = vunpack.c.l.b16 %v1813
    %v1853 = vunpack.c.l.b16 %v1814
    %v1854 = vunpack.c.l.b16 %v1815
    %v1855 = vunpack.c.l.b16 %v1816
    %v1856 = vunpack.c.l.b16 %v1817
    %v1857 = vunpack.c.l.b16 %v1818
    %v1858 = vunpack.c.l.b16 %v1819
    %v1859 = vunpack.c.l.b16 %v1820
    %v1860 = vunpack.c.l.b16 %v1821
    %v1861 = vunpack.c.l.b16 %v1822
    %v1862 = vunpack.c.l.b16 %v1823
    %v1863 = vpack.c.b16 %v1848, %v1847
    %v1864 = vpack.c.b16 %v1850, %v1849
    %v1865 = vpack.c.b16 %v1852, %v1851
    %v1866 = vpack.c.b16 %v1854, %v1853
    %v1867 = vpack.c.b16 %v1856, %v1855
    %v1868 = vpack.c.b16 %v1858, %v1857
    %v1869 = vpack.c.b16 %v1860, %v1859
    %v1870 = vpack.c.b16 %v1862, %v1861
    %1879 = vmatprep.subr.bf16.mxu0 0
    %1880 = vmatpush1.bf16.msra.mxu0 %v1863
    %1881 = vmatprep.subr.bf16.mxu0 0
    %1882 = vmatpush1.bf16.msra.mxu0 %v1864
    %1883 = vmatprep.subr.bf16.mxu0 0
    %1884 = vmatpush1.bf16.msra.mxu0 %v1865
    %1885 = vmatprep.subr.bf16.mxu0 0
    %1886 = vmatpush1.bf16.msra.mxu0 %v1866
    %1887 = vmatprep.subr.bf16.mxu0 0
    %1888 = vmatpush1.bf16.msra.mxu0 %v1867
    %1889 = vmatprep.subr.bf16.mxu0 0
    %1890 = vmatpush1.bf16.msra.mxu0 %v1868
    %1891 = vmatprep.subr.bf16.mxu0 0
    %1892 = vmatpush1.bf16.msra.mxu0 %v1869
    %1893 = vmatprep.subr.bf16.mxu0 0
    %1894 = vmatpush1.bf16.msra.mxu0 %v1870
    %1895 = vmatprep.subr.bf16.mxu0 0
    %1896 = vmatpush1.bf16.msra.mxu0 0
    %1897 = vmatprep.subr.bf16.mxu0 0
    %1898 = vmatpush1.bf16.msra.mxu0 0
    %1899 = vmatprep.subr.bf16.mxu0 0
    %1900 = vmatpush1.bf16.msra.mxu0 0
    %1901 = vmatprep.subr.bf16.mxu0 0
    %1902 = vmatpush1.bf16.msra.mxu0 0
    %1903 = vmatprep.subr.bf16.mxu0 0
    %1904 = vmatpush1.bf16.msra.mxu0 0
    %1905 = vmatprep.subr.bf16.mxu0 0
    %1906 = vmatpush1.bf16.msra.mxu0 0
    %1907 = vmatprep.subr.bf16.mxu0 0
    %1908 = vmatpush1.bf16.msra.mxu0 0
    %1909 = vmatprep.subr.bf16.mxu0 0
    %1910 = vmatpush1.bf16.msra.mxu0 0
    %1911 = vmatprep.mubr.bf16.mxu0 0
    %1912 = vmatmul.mubr.bf16.gmra.mrb[0].mxu0 %v1807
    %v1913 = vpop.f32.mrb[0].mxu0
    %v1914 = vadd.f32 %v1829, %v1913
    %v1915 = vpop.f32.mrb[0].mxu0
    %v1916 = vpop.f32.mrb[0].mxu0
    %v1917 = vadd.f32 %v1829, %v1916
    %v1918 = vpop.f32.mrb[0].mxu0
    %1919 = vdwg.mxu0
    %v1920 = vld [vmem:[#allocation38] sm:$0x1]
    %v1921 = vld [vmem:[#allocation40] sm:$0x1]
    %v1922 = vadd.f32 %v1247, %v1914
    %v1923 = vadd.f32 %v1248, %v1917
    %1924 = vadd.xlane.f32.xlu0 %v1922
    %v1925 = vpop.xlane.xlu0 %1924
    %1926 = vadd.xlane.f32.xlu0 %v1923
    %v1927 = vpop.xlane.xlu0 %1926
    %v1928 = vmul.f32 %v1925, 0.03125
    %v1929 = vmul.f32 %v1927, 0.03125
    %v1930 = vmul.f32 %v1922, %v1922
    %v1931 = vmul.f32 %v1923, %v1923
    %1932 = vadd.xlane.f32.xlu0 %v1930
    %v1933 = vpop.xlane.xlu0 %1932
    %1934 = vadd.xlane.f32.xlu0 %v1931
    %v1935 = vpop.xlane.xlu0 %1934
    %v1936 = vmul.f32 %v1933, 0.03125
    %v1937 = vmul.f32 %v1935, 0.03125
    %v1938 = vmul.f32 %v1928, %v1928
    %v1939 = vmul.f32 %v1929, %v1929
    %v1940 = vsub.f32 %v1936, %v1938
    %v1941 = vsub.f32 %v1937, %v1939
    %v1942 = vsub.f32 %v1922, %v1928
    %v1943 = vsub.f32 %v1923, %v1929
    %v1944 = vadd.f32 %v1940, 1e-05
    %v1945 = vadd.f32 %v1941, 1e-05
    %v1946 = vrsqrt.pop %v1944
    %v1947 = vrsqrt.pop %v1945
    %v1948 = vmul.f32 %v1942, %v1946
    %v1949 = vmul.f32 %v1943, %v1947
    %v1951 = vlaneseq
    %v1952 = vshrl.u32 %v1951, 7
    %v1953 = vsub.s32 0, %v1952
    %v1954 = vrot.slane %v1920, %v1953
    %v1956 = vmul.f32 %v1948, %v1954
    %v1957 = vmul.f32 %v1949, %v1954
    %v1959 = vlaneseq
    %v1960 = vshrl.u32 %v1959, 7
    %v1961 = vsub.s32 0, %v1960
    %v1962 = vrot.slane %v1921, %v1961
    %v1964 = vadd.f32 %v1956, %v1962
    %v1965 = vadd.f32 %v1957, %v1962
    %v1966 = vpack.c.bf16 %v1965, %v1964
    %v1967 = vld [vmem:[#allocation41] sm:$0xf]
    %v1968 = vld [vmem:[#allocation41 + $0x4] sm:$0xf]
    %v1969 = vld [vmem:[#allocation41 + $0x8] sm:$0xf]
    %v1970 = vld [vmem:[#allocation41 + $0xc] sm:$0xf]
    %v1971 = vld [vmem:[#allocation41 + $0x10] sm:$0xf]
    %v1972 = vld [vmem:[#allocation41 + $0x14] sm:$0xf]
    %v1973 = vld [vmem:[#allocation41 + $0x18] sm:$0xf]
    %v1974 = vld [vmem:[#allocation41 + $0x1c] sm:$0xf]
    %v1975 = vld [vmem:[#allocation41 + $0x20] sm:$0xf]
    %v1976 = vld [vmem:[#allocation41 + $0x24] sm:$0xf]
    %v1977 = vld [vmem:[#allocation41 + $0x28] sm:$0xf]
    %v1978 = vld [vmem:[#allocation41 + $0x2c] sm:$0xf]
    %v1979 = vld [vmem:[#allocation41 + $0x30] sm:$0xf]
    %v1980 = vld [vmem:[#allocation41 + $0x34] sm:$0xf]
    %v1981 = vld [vmem:[#allocation41 + $0x38] sm:$0xf]
    %v1982 = vld [vmem:[#allocation41 + $0x3c] sm:$0xf]
    %v1983 = vld [vmem:[#allocation43] sm:$0x1]
    %v1985 = vlaneseq
    %v1986 = vshrl.u32 %v1985, 7
    %v1987 = vsub.s32 0, %v1986
    %v1988 = vrot.slane %v1983, %v1987
    %v2006 = vunpack.c.l.b16 %v1967
    %v2007 = vunpack.c.l.b16 %v1968
    %v2008 = vunpack.c.l.b16 %v1969
    %v2009 = vunpack.c.l.b16 %v1970
    %v2010 = vunpack.c.l.b16 %v1971
    %v2011 = vunpack.c.l.b16 %v1972
    %v2012 = vunpack.c.l.b16 %v1973
    %v2013 = vunpack.c.l.b16 %v1974
    %v2014 = vunpack.c.l.b16 %v1975
    %v2015 = vunpack.c.l.b16 %v1976
    %v2016 = vunpack.c.l.b16 %v1977
    %v2017 = vunpack.c.l.b16 %v1978
    %v2018 = vunpack.c.l.b16 %v1979
    %v2019 = vunpack.c.l.b16 %v1980
    %v2020 = vunpack.c.l.b16 %v1981
    %v2021 = vunpack.c.l.b16 %v1982
    %v2022 = vpack.c.b16 %v2007, %v2006
    %v2023 = vpack.c.b16 %v2009, %v2008
    %v2024 = vpack.c.b16 %v2011, %v2010
    %v2025 = vpack.c.b16 %v2013, %v2012
    %v2026 = vpack.c.b16 %v2015, %v2014
    %v2027 = vpack.c.b16 %v2017, %v2016
    %v2028 = vpack.c.b16 %v2019, %v2018
    %v2029 = vpack.c.b16 %v2021, %v2020
    %2038 = vmatprep.subr.bf16.mxu0 0
    %2039 = vmatpush1.bf16.msra.mxu0 %v2022
    %2040 = vmatprep.subr.bf16.mxu0 0
    %2041 = vmatpush1.bf16.msra.mxu0 %v2023
    %2042 = vmatprep.subr.bf16.mxu0 0
    %2043 = vmatpush1.bf16.msra.mxu0 %v2024
    %2044 = vmatprep.subr.bf16.mxu0 0
    %2045 = vmatpush1.bf16.msra.mxu0 %v2025
    %2046 = vmatprep.subr.bf16.mxu0 0
    %2047 = vmatpush1.bf16.msra.mxu0 %v2026
    %2048 = vmatprep.subr.bf16.mxu0 0
    %2049 = vmatpush1.bf16.msra.mxu0 %v2027
    %2050 = vmatprep.subr.bf16.mxu0 0
    %2051 = vmatpush1.bf16.msra.mxu0 %v2028
    %2052 = vmatprep.subr.bf16.mxu0 0
    %2053 = vmatpush1.bf16.msra.mxu0 %v2029
    %2054 = vmatprep.subr.bf16.mxu0 0
    %2055 = vmatpush1.bf16.msra.mxu0 0
    %2056 = vmatprep.subr.bf16.mxu0 0
    %2057 = vmatpush1.bf16.msra.mxu0 0
    %2058 = vmatprep.subr.bf16.mxu0 0
    %2059 = vmatpush1.bf16.msra.mxu0 0
    %2060 = vmatprep.subr.bf16.mxu0 0
    %2061 = vmatpush1.bf16.msra.mxu0 0
    %2062 = vmatprep.subr.bf16.mxu0 0
    %2063 = vmatpush1.bf16.msra.mxu0 0
    %2064 = vmatprep.subr.bf16.mxu0 0
    %2065 = vmatpush1.bf16.msra.mxu0 0
    %2066 = vmatprep.subr.bf16.mxu0 0
    %2067 = vmatpush1.bf16.msra.mxu0 0
    %2068 = vmatprep.subr.bf16.mxu0 0
    %2069 = vmatpush1.bf16.msra.mxu0 0
    %2070 = vmatprep.mubr.bf16.mxu0 0
    %2071 = vmatmul.mubr.bf16.gmra.mrb[0].mxu0 %v1966
    %v2072 = vpop.f32.mrb[0].mxu0
    %v2073 = vadd.f32 %v1988, %v2072
    %v2074 = vpop.f32.mrb[0].mxu0
    %v2075 = vpop.f32.mrb[0].mxu0
    %v2076 = vadd.f32 %v1988, %v2075
    %v2077 = vpop.f32.mrb[0].mxu0
    %2078 = vdwg.mxu0
    %v2079 = vmax.f32 %v2073, 0.0
    %v2080 = vmax.f32 %v2076, 0.0
    %v2081 = vpack.c.bf16 %v2080, %v2079
    %v2082 = vld [vmem:[#allocation44] sm:$0xf]
    %v2083 = vld [vmem:[#allocation44 + $0x4] sm:$0xf]
    %v2084 = vld [vmem:[#allocation44 + $0x8] sm:$0xf]
    %v2085 = vld [vmem:[#allocation44 + $0xc] sm:$0xf]
    %v2086 = vld [vmem:[#allocation44 + $0x10] sm:$0xf]
    %v2087 = vld [vmem:[#allocation44 + $0x14] sm:$0xf]
    %v2088 = vld [vmem:[#allocation44 + $0x18] sm:$0xf]
    %v2089 = vld [vmem:[#allocation44 + $0x1c] sm:$0xf]
    %v2090 = vld [vmem:[#allocation44 + $0x20] sm:$0xf]
    %v2091 = vld [vmem:[#allocation44 + $0x24] sm:$0xf]
    %v2092 = vld [vmem:[#allocation44 + $0x28] sm:$0xf]
    %v2093 = vld [vmem:[#allocation44 + $0x2c] sm:$0xf]
    %v2094 = vld [vmem:[#allocation44 + $0x30] sm:$0xf]
    %v2095 = vld [vmem:[#allocation44 + $0x34] sm:$0xf]
    %v2096 = vld [vmem:[#allocation44 + $0x38] sm:$0xf]
    %v2097 = vld [vmem:[#allocation44 + $0x3c] sm:$0xf]
    %v2098 = vld [vmem:[#allocation46] sm:$0x1]
    %v2100 = vlaneseq
    %v2101 = vshrl.u32 %v2100, 7
    %v2102 = vsub.s32 0, %v2101
    %v2103 = vrot.slane %v2098, %v2102
    %v2121 = vunpack.c.l.b16 %v2082
    %v2122 = vunpack.c.l.b16 %v2083
    %v2123 = vunpack.c.l.b16 %v2084
    %v2124 = vunpack.c.l.b16 %v2085
    %v2125 = vunpack.c.l.b16 %v2086
    %v2126 = vunpack.c.l.b16 %v2087
    %v2127 = vunpack.c.l.b16 %v2088
    %v2128 = vunpack.c.l.b16 %v2089
    %v2129 = vunpack.c.l.b16 %v2090
    %v2130 = vunpack.c.l.b16 %v2091
    %v2131 = vunpack.c.l.b16 %v2092
    %v2132 = vunpack.c.l.b16 %v2093
    %v2133 = vunpack.c.l.b16 %v2094
    %v2134 = vunpack.c.l.b16 %v2095
    %v2135 = vunpack.c.l.b16 %v2096
    %v2136 = vunpack.c.l.b16 %v2097
    %v2137 = vpack.c.b16 %v2122, %v2121
    %v2138 = vpack.c.b16 %v2124, %v2123
    %v2139 = vpack.c.b16 %v2126, %v2125
    %v2140 = vpack.c.b16 %v2128, %v2127
    %v2141 = vpack.c.b16 %v2130, %v2129
    %v2142 = vpack.c.b16 %v2132, %v2131
    %v2143 = vpack.c.b16 %v2134, %v2133
    %v2144 = vpack.c.b16 %v2136, %v2135
    %2153 = vmatprep.subr.bf16.mxu0 0
    %2154 = vmatpush1.bf16.msra.mxu0 %v2137
    %2155 = vmatprep.subr.bf16.mxu0 0
    %2156 = vmatpush1.bf16.msra.mxu0 %v2138
    %2157 = vmatprep.subr.bf16.mxu0 0
    %2158 = vmatpush1.bf16.msra.mxu0 %v2139
    %2159 = vmatprep.subr.bf16.mxu0 0
    %2160 = vmatpush1.bf16.msra.mxu0 %v2140
    %2161 = vmatprep.subr.bf16.mxu0 0
    %2162 = vmatpush1.bf16.msra.mxu0 %v2141
    %2163 = vmatprep.subr.bf16.mxu0 0
    %2164 = vmatpush1.bf16.msra.mxu0 %v2142
    %2165 = vmatprep.subr.bf16.mxu0 0
    %2166 = vmatpush1.bf16.msra.mxu0 %v2143
    %2167 = vmatprep.subr.bf16.mxu0 0
    %2168 = vmatpush1.bf16.msra.mxu0 %v2144
    %2169 = vmatprep.subr.bf16.mxu0 0
    %2170 = vmatpush1.bf16.msra.mxu0 0
    %2171 = vmatprep.subr.bf16.mxu0 0
    %2172 = vmatpush1.bf16.msra.mxu0 0
    %2173 = vmatprep.subr.bf16.mxu0 0
    %2174 = vmatpush1.bf16.msra.mxu0 0
    %2175 = vmatprep.subr.bf16.mxu0 0
    %2176 = vmatpush1.bf16.msra.mxu0 0
    %2177 = vmatprep.subr.bf16.mxu0 0
    %2178 = vmatpush1.bf16.msra.mxu0 0
    %2179 = vmatprep.subr.bf16.mxu0 0
    %2180 = vmatpush1.bf16.msra.mxu0 0
    %2181 = vmatprep.subr.bf16.mxu0 0
    %2182 = vmatpush1.bf16.msra.mxu0 0
    %2183 = vmatprep.subr.bf16.mxu0 0
    %2184 = vmatpush1.bf16.msra.mxu0 0
    %2185 = vmatprep.mubr.bf16.mxu0 0
    %2186 = vmatmul.mubr.bf16.gmra.mrb[0].mxu0 %v2081
    %v2187 = vpop.f32.mrb[0].mxu0
    %v2188 = vadd.f32 %v2103, %v2187
    %v2189 = vpop.f32.mrb[0].mxu0
    %v2190 = vpop.f32.mrb[0].mxu0
    %v2191 = vadd.f32 %v2103, %v2190
    %v2192 = vpop.f32.mrb[0].mxu0
    %2193 = vdwg.mxu0
    %v2194 = vld [vmem:[#allocation47] sm:$0x1]
    %v2195 = vld [vmem:[#allocation49] sm:$0x1]
    %v2196 = vadd.f32 %v1964, %v2188
    %v2197 = vadd.f32 %v1965, %v2191
    %2198 = vadd.xlane.f32.xlu0 %v2196
    %v2199 = vpop.xlane.xlu0 %2198
    %2200 = vadd.xlane.f32.xlu0 %v2197
    %v2201 = vpop.xlane.xlu0 %2200
    %v2202 = vmul.f32 %v2199, 0.03125
    %v2203 = vmul.f32 %v2201, 0.03125
    %v2204 = vmul.f32 %v2196, %v2196
    %v2205 = vmul.f32 %v2197, %v2197
    %2206 = vadd.xlane.f32.xlu0 %v2204
    %v2207 = vpop.xlane.xlu0 %2206
    %2208 = vadd.xlane.f32.xlu0 %v2205
    %v2209 = vpop.xlane.xlu0 %2208
    %v2210 = vmul.f32 %v2207, 0.03125
    %v2211 = vmul.f32 %v2209, 0.03125
    %v2212 = vmul.f32 %v2202, %v2202
    %v2213 = vmul.f32 %v2203, %v2203
    %v2214 = vsub.f32 %v2210, %v2212
    %v2215 = vsub.f32 %v2211, %v2213
    %v2216 = vsub.f32 %v2196, %v2202
    %v2217 = vsub.f32 %v2197, %v2203
    %v2218 = vadd.f32 %v2214, 1e-05
    %v2219 = vadd.f32 %v2215, 1e-05
    %v2220 = vrsqrt.pop %v2218
    %v2221 = vrsqrt.pop %v2219
    %v2222 = vmul.f32 %v2216, %v2220
    %v2223 = vmul.f32 %v2217, %v2221
    %v2225 = vlaneseq
    %v2226 = vshrl.u32 %v2225, 7
    %v2227 = vsub.s32 0, %v2226
    %v2228 = vrot.slane %v2194, %v2227
    %v2230 = vmul.f32 %v2222, %v2228
    %v2231 = vmul.f32 %v2223, %v2228
    %v2233 = vlaneseq
    %v2234 = vshrl.u32 %v2233, 7
    %v2235 = vsub.s32 0, %v2234
    %v2236 = vrot.slane %v2195, %v2235
    %v2238 = vadd.f32 %v2230, %v2236
    %v2239 = vadd.f32 %v2231, %v2236
    %2240 = vst [vmem:[#allocation50] sm:$0xff] %v2238
    %2241 = vst [vmem:[#allocation50 + $0x8] sm:$0xff] %v2239
    // Predicated region
    $region250: #{tpu_custom_call.1} parent=1 // pred_check
      _
    $region251: #{tpu_custom_call.1} parent=1 // pred_check_branch
      %2243 = sbr.rel (0) target = $region253
    $region252: #{tpu_custom_call.1} parent=1 // pred_region
      %s2245 = ssub.s32 256, 256
      %2246 = vsyncadd [#allocation4], %s2245
      %s2247 = sshll.u32 [#allocation50], 4
      %s2248 = int_to_ptr.vmem [resolvable:$true] %s2247
      %2253 = dma.vmem_to_hbm [thread:$0]  %s2248, 256, %s63, [#allocation4], 128, 128, 8
    $region253: #{tpu_custom_call.1} parent=1 // pred_fallthru
      _
    // Predicated region
    $region254: #{tpu_custom_call.1} parent=1 // pred_check
      _
    $region255: #{tpu_custom_call.1} parent=1 // pred_check_branch
      %2255 = sbr.rel (0) target = $region257
    $region256: #{tpu_custom_call.1} parent=1 // pred_region
      %2256 = dma.done [#allocation4], 256
    $region257: #{tpu_custom_call.1} parent=1 // pred_fallthru
      _
    %2257 = vsyncpa [#allocation3], 1
    %2258 = vsyncpa [#allocation6], 1
    %2259 = vsyncpa [#allocation9], 1
    %2260 = vsyncpa [#allocation12], 1
    %2261 = vsyncpa [#allocation15], 1
    %2262 = vsyncpa [#allocation18], 1
    %2263 = vsyncpa [#allocation21], 1
    %2264 = vsyncpa [#allocation24], 1
    %2265 = vsyncpa [#allocation27], 1
    %2266 = vsyncpa [#allocation30], 1
    %2267 = vsyncpa [#allocation33], 1
    %2268 = vsyncpa [#allocation36], 1
    %2269 = vsyncpa [#allocation39], 1
    %2270 = vsyncpa [#allocation42], 1
    %2271 = vsyncpa [#allocation45], 1
    %2272 = vsyncpa [#allocation48], 1
    %2273 = vsyncpa [#allocation4], 1

</llo_original>
